<compile_context>
chip_gen: v6e
topology: v6e:2x2x1
jax: 0.10.0
libtpu: 0.0.40
codegen_flags: <defaults>
</compile_context>

<pallas_src>
import functools

import jax
import jax.numpy as jnp
from jax.experimental import pallas as pl
from jax.experimental.pallas import tpu as pltpu


def _round_up(n, m):
    return ((n + m - 1) // m) * m


# PyTorch packs gates [i, f, g, o]; kernel uses [i, f, o, g] so the three
# sigmoids act on one contiguous slab and tanh on one slab.
_GATE_PERM = (0, 1, 3, 2)


# ------------------------------ fused kernel ---------------------------------
def _make_fused_lstm_kernel(num_layers, T, Bp, Hp):
    """num_layers stacked LSTM layers + final Linear, all in one invocation."""

    def kernel(*refs):
        nw = 3 * num_layers
        x_ref = refs[0]                       # (T*Bp, I)   bf16, time-major rows
        h0_ref = refs[1]                      # (L, Bp, Hp) f32
        c0_ref = refs[2]                      # (L, Bp, Hp) f32
        w_refs = refs[3:3 + nw]               # per layer: wih(bf16), whh(bf16), bias(f32)
        lin_w_ref = refs[3 + nw]              # (Hp, Op)    bf16
        lin_b_ref = refs[4 + nw]              # (1, Op)     f32
        out_ref = refs[5 + nw]                # (Bp, Op)    f32
        scratch = refs[6 + nw:]
        if num_layers > 1:
            seq_scr, gates_scr = scratch      # (T*Bp, Hp) bf16, (T*Bp, 4Hp) f32
        else:
            (gates_scr,) = scratch
            seq_scr = None

        h_last = None
        for l in range(num_layers):
            wih_ref = w_refs[3 * l + 0]       # (in_dim, 4Hp) bf16
            whh_ref = w_refs[3 * l + 1]       # (Hp, 4Hp)     bf16
            b_ref = w_refs[3 * l + 2]         # (1, 4Hp)      f32

            # 1) Input projection for ALL time steps: one big MXU matmul.
            layer_in = x_ref[...] if l == 0 else seq_scr[...]
            gates_scr[...] = (
                jnp.dot(layer_in, wih_ref[...],
                        preferred_element_type=jnp.float32)
                + b_ref[...])

            # 2) Serial recurrence; h/c ride as fori_loop carries (registers).
            whh = whh_ref[...]
            last_layer = (l == num_layers - 1)

            def step(t, carry, whh=whh, last_layer=last_layer):
                h, c = carry                              # f32 (Bp, Hp)
                row = pl.multiple_of(t * Bp, 8)           # aligned sublane tile
                g = gates_scr[pl.ds(row, Bp)] + jnp.dot(
                    h.astype(jnp.bfloat16), whh,
                    preferred_element_type=jnp.float32)
                # Gate layout [i | f | o | g]: one wide sigmoid, one tanh.
                sig = jax.nn.sigmoid(g[:, 0:3 * Hp])
                i_g = sig[:, 0 * Hp:1 * Hp]
                f_g = sig[:, 1 * Hp:2 * Hp]
                o_g = sig[:, 2 * Hp:3 * Hp]
                g_g = jnp.tanh(g[:, 3 * Hp:4 * Hp])
                c_new = f_g * c + i_g * g_g
                h_new = o_g * jnp.tanh(c_new)
                if not last_layer:                        # last layer: only h_T needed
                    seq_scr[pl.ds(row, Bp)] = h_new.astype(seq_scr.dtype)
                return (h_new, c_new)

            h_last, _ = jax.lax.fori_loop(
                0, T, step, (h0_ref[l], c0_ref[l]), unroll=min(T, 8))

        # 3) Final Linear on the last hidden state of the last layer.
        out_ref[...] = (
            jnp.dot(h_last.astype(jnp.bfloat16), lin_w_ref[...],
                    preferred_element_type=jnp.float32)
            + lin_b_ref[...])

    return kernel


# -------------------------------- wrapper -------------------------------------
def lstm_forward(x_btf, params, h0_all, c0_all, *, num_layers, hidden_size,
                 output_size):
    """x_btf: (B, T, I) batch-first (PyTorch). Returns (B, output_size) f32."""
    B, T, I = x_btf.shape
    H = hidden_size
    Hp = _round_up(H, 128)
    Bp = _round_up(B, 8)
    Op = _round_up(output_size, 128)
    G = 4 * Hp

    # Time-major, batch-padded, bf16 input rows: row (t, b) -> t*Bp + b.
    x_tbf = jnp.transpose(x_btf, (1, 0, 2)).astype(jnp.bfloat16)
    x_tbf = jnp.pad(x_tbf, ((0, 0), (0, Bp - B), (0, 0)))
    x_flat = x_tbf.reshape(T * Bp, I)

    pad_state = ((0, 0), (0, Bp - B), (0, Hp - H))
    h0_p = jnp.pad(h0_all.astype(jnp.float32), pad_state)
    c0_p = jnp.pad(c0_all.astype(jnp.float32), pad_state)

    inputs = [x_flat, h0_p, c0_p]
    for l in range(num_layers):
        p = params[f"layer_{l}"]
        inputs += [p["wih"], p["whh"], p["bias"]]
    inputs += [params["lin_w"], params["lin_b"]]

    scratch_shapes = []
    if num_layers > 1:
        scratch_shapes.append(pltpu.VMEM((T * Bp, Hp), jnp.bfloat16))  # layer output seq
    scratch_shapes.append(pltpu.VMEM((T * Bp, G), jnp.float32))        # precomputed gates

    # VMEM budget: inputs + output + scratch, with headroom.
    in_bytes = sum(int(a.size) * a.dtype.itemsize for a in inputs)
    scratch_bytes = T * Bp * G * 4 + (T * Bp * Hp * 2 if num_layers > 1 else 0)
    out_bytes = Bp * Op * 4
    vmem_limit = int(1.5 * (in_bytes + scratch_bytes + out_bytes)) + (4 << 20)
    vmem_limit = min(vmem_limit, 100 * 1024 * 1024)

    kernel = _make_fused_lstm_kernel(num_layers, T, Bp, Hp)
    out_padded = pl.pallas_call(
        kernel,
        out_shape=jax.ShapeDtypeStruct((Bp, Op), jnp.float32),
        in_specs=[pl.BlockSpec(memory_space=pltpu.MemorySpace.VMEM)]
        * len(inputs),
        out_specs=pl.BlockSpec(memory_space=pltpu.MemorySpace.VMEM),
        scratch_shapes=scratch_shapes,
        compiler_params=pltpu.CompilerParams(vmem_limit_bytes=vmem_limit),
    )(*inputs)
    return out_padded[:B, :output_size]


# --------------------------- params (padded layout) ----------------------------
def _prep_gate_cols(w_t, H, Hp):
    """(in, 4H) PyTorch gate order -> (in, 4*Hp) in [i,f,o,g] order, each gate
    zero-padded to Hp lanes."""
    in_dim = w_t.shape[0]
    w = w_t.reshape(in_dim, 4, H)[:, _GATE_PERM, :]
    w = jnp.pad(w, ((0, 0), (0, 0), (0, Hp - H)))
    return w.reshape(in_dim, 4 * Hp)


def init_params(key, input_size, hidden_size, output_size, num_layers):
    H = hidden_size
    Hp = _round_up(H, 128)
    Op = _round_up(output_size, 128)
    params, raw = {}, {}
    k = 1.0 / jnp.sqrt(H)
    for l in range(num_layers):
        in_sz = input_size if l == 0 else H
        key, k1, k2, k3, k4 = jax.random.split(key, 5)
        w_ih = jax.random.uniform(k1, (4 * H, in_sz), minval=-k, maxval=k,
                                  dtype=jnp.float32)
        w_hh = jax.random.uniform(k2, (4 * H, H), minval=-k, maxval=k,
                                  dtype=jnp.float32)
        b_ih = jax.random.uniform(k3, (4 * H,), minval=-k, maxval=k,
                                  dtype=jnp.float32)
        b_hh = jax.random.uniform(k4, (4 * H,), minval=-k, maxval=k,
                                  dtype=jnp.float32)
        raw[f"layer_{l}"] = (w_ih, w_hh, b_ih, b_hh)

        wih = _prep_gate_cols(w_ih.T, H, Hp)                    # (in_sz, 4Hp)
        if l > 0:
            wih = jnp.pad(wih, ((0, Hp - H), (0, 0)))           # (Hp, 4Hp)
        whh = _prep_gate_cols(w_hh.T, H, Hp)
        whh = jnp.pad(whh, ((0, Hp - H), (0, 0)))               # (Hp, 4Hp)
        bias = _prep_gate_cols((b_ih + b_hh)[None, :], H, Hp)   # (1, 4Hp)
        params[f"layer_{l}"] = {
            "wih": wih.astype(jnp.bfloat16),
            "whh": whh.astype(jnp.bfloat16),
            "bias": bias.astype(jnp.float32),
        }

    key, k5, k6 = jax.random.split(key, 3)
    lin_w = jax.random.uniform(k5, (output_size, H), minval=-k, maxval=k,
                               dtype=jnp.float32)
    lin_b = jax.random.uniform(k6, (output_size,), minval=-k, maxval=k,
                               dtype=jnp.float32)
    raw["lin_w"], raw["lin_b"] = lin_w, lin_b
    params["lin_w"] = jnp.pad(
        lin_w.T, ((0, Hp - H), (0, Op - output_size))).astype(jnp.bfloat16)
    params["lin_b"] = jnp.pad(lin_b, (0, Op - output_size))[None, :]
    return params, raw, key


# ---------------------------- pure-JAX reference -------------------------------
def lstm_reference(x_btf, raw, h0_all, c0_all, num_layers):
    hp = jax.lax.Precision.HIGHEST
    seq = x_btf
    for l in range(num_layers):
        w_ih, w_hh, b_ih, b_hh = raw[f"layer_{l}"]
        H = w_hh.shape[1]

        def step(carry, x_t, w_ih=w_ih, w_hh=w_hh, b_ih=b_ih, b_hh=b_hh, H=H):
            h, c = carry
            g = (jnp.dot(x_t, w_ih.T, precision=hp) + b_ih
                 + jnp.dot(h, w_hh.T, precision=hp) + b_hh)
            i = jax.nn.sigmoid(g[:, 0 * H:1 * H])
            f = jax.nn.sigmoid(g[:, 1 * H:2 * H])
            gg = jnp.tanh(g[:, 2 * H:3 * H])
            o = jax.nn.sigmoid(g[:, 3 * H:4 * H])
            c = f * c + i * gg
            h = o * jnp.tanh(c)
            return (h, c), h

        (_, _), ys = jax.lax.scan(step, (h0_all[l], c0_all[l]),
                                  jnp.transpose(seq, (1, 0, 2)))
        seq = jnp.transpose(ys, (1, 0, 2))
    h_last = seq[:, -1, :]
    return jnp.dot(h_last, raw["lin_w"].T, precision=hp) + raw["lin_b"]


# ------------------------------------ main -------------------------------------
if __name__ == "__main__":
    batch, seq_len = 2, 8
    input_size, hidden_size, output_size, num_layers = 4, 32, 3, 2

    key = jax.random.PRNGKey(0)
    params, raw, key = init_params(key, input_size, hidden_size,
                                   output_size, num_layers)

    key, kx, kh, kc = jax.random.split(key, 4)
    x = jax.random.normal(kx, (batch, seq_len, input_size), dtype=jnp.float32)
    # The PyTorch forward draws fresh randn initial states each call; here they
    # are deterministic explicit inputs.
    h0 = jax.random.normal(kh, (num_layers, batch, hidden_size),
                           dtype=jnp.float32)
    c0 = jax.random.normal(kc, (num_layers, batch, hidden_size),
                           dtype=jnp.float32)

    fwd = jax.jit(functools.partial(lstm_forward, num_layers=num_layers,
                                    hidden_size=hidden_size,
                                    output_size=output_size))
    y = fwd(x, params, h0, c0)
    jax.block_until_ready(y)

    assert y.shape == (batch, output_size), y.shape
    assert y.dtype == jnp.float32

    y_ref = lstm_reference(x, raw, h0, c0, num_layers)
    max_err = float(jnp.max(jnp.abs(y - y_ref)))
    assert max_err < 5e-2, f"max abs error vs reference: {max_err}"
    print("KERNEL_OK")
</pallas_src>

<mosaic_0001>
module attributes {stable_mosaic.version = 11 : i64} {
  func.func @kernel(%arg0: memref<64x4xbf16, #tpu.memory_space<vmem>>, %arg1: memref<2x8x128xf32, #tpu.memory_space<vmem>>, %arg2: memref<2x8x128xf32, #tpu.memory_space<vmem>>, %arg3: memref<4x512xbf16, #tpu.memory_space<vmem>>, %arg4: memref<128x512xbf16, #tpu.memory_space<vmem>>, %arg5: memref<1x512xf32, #tpu.memory_space<vmem>>, %arg6: memref<128x512xbf16, #tpu.memory_space<vmem>>, %arg7: memref<128x512xbf16, #tpu.memory_space<vmem>>, %arg8: memref<1x512xf32, #tpu.memory_space<vmem>>, %arg9: memref<128x128xbf16, #tpu.memory_space<vmem>>, %arg10: memref<1x128xf32, #tpu.memory_space<vmem>>, %arg11: memref<8x128xf32, #tpu.memory_space<vmem>>, %arg12: memref<64x128xbf16, #tpu.memory_space<vmem>>, %arg13: memref<64x512xf32, #tpu.memory_space<vmem>>) attributes {dimension_semantics = [], scalar_prefetch = 0 : i64, scratch_operands = 2 : i64, tpu.core_type = #tpu.core_type<tc>} {
    %c0 = arith.constant 0 : index
    %c0_0 = arith.constant 0 : index
    %0 = vector.load %arg0[%c0, %c0_0] : memref<64x4xbf16, #tpu.memory_space<vmem>>, vector<64x4xbf16>
    %c0_1 = arith.constant 0 : index
    %c0_2 = arith.constant 0 : index
    %1 = vector.load %arg3[%c0_1, %c0_2] : memref<4x512xbf16, #tpu.memory_space<vmem>>, vector<4x512xbf16>
    %cst = arith.constant dense<0.000000e+00> : vector<64x512xf32>
    %2 = tpu.matmul %0, %1, %cst {dimension_numbers = #tpu.dot_dimension_numbers<[1], [0], [0], [1], [0, 0, 1, 1], [], []>} : vector<64x4xbf16>, vector<4x512xbf16>, vector<64x512xf32> -> vector<64x512xf32>
    %c0_3 = arith.constant 0 : index
    %c0_4 = arith.constant 0 : index
    %3 = vector.load %arg5[%c0_3, %c0_4] : memref<1x512xf32, #tpu.memory_space<vmem>>, vector<1x512xf32>
    %4 = vector.broadcast %3 : vector<1x512xf32> to vector<64x512xf32>
    %5 = arith.addf %2, %4 : vector<64x512xf32>
    %c0_5 = arith.constant 0 : index
    %c0_6 = arith.constant 0 : index
    %6 = vector.load %arg13[%c0_5, %c0_6] : memref<64x512xf32, #tpu.memory_space<vmem>>, vector<64x512xf32>
    tpu.vector_store %arg13[%c0_5, %c0_6], %5 {strides = array<i32>} : memref<64x512xf32, #tpu.memory_space<vmem>>, vector<64x512xf32>,
    %c0_7 = arith.constant 0 : index
    %c0_8 = arith.constant 0 : index
    %7 = vector.load %arg4[%c0_7, %c0_8] : memref<128x512xbf16, #tpu.memory_space<vmem>>, vector<128x512xbf16>
    %c0_9 = arith.constant 0 : index
    %c0_10 = arith.constant 0 : index
    %c0_11 = arith.constant 0 : index
    %8 = vector.load %arg1[%c0_9, %c0_10, %c0_11] : memref<2x8x128xf32, #tpu.memory_space<vmem>>, vector<1x8x128xf32>
    %9 = vector.shape_cast %8 : vector<1x8x128xf32> to vector<8x128xf32>
    %c0_12 = arith.constant 0 : index
    %c0_13 = arith.constant 0 : index
    %c0_14 = arith.constant 0 : index
    %10 = vector.load %arg2[%c0_12, %c0_13, %c0_14] : memref<2x8x128xf32, #tpu.memory_space<vmem>>, vector<1x8x128xf32>
    %11 = vector.shape_cast %10 : vector<1x8x128xf32> to vector<8x128xf32>
    %c0_i32 = arith.constant 0 : i32
    %c8_i32 = arith.constant 8 : i32
    %12 = arith.muli %c0_i32, %c8_i32 : i32
    %13 = tpu.assume_multiple %12, 8 : i32
    %14 = arith.index_cast %13 : i32 to index
    %c0_15 = arith.constant 0 : index
    %15 = vector.load %arg13[%14, %c0_15] : memref<64x512xf32, #tpu.memory_space<vmem>>, vector<8x512xf32>
    %16 = arith.truncf %9 : vector<8x128xf32> to vector<8x128xbf16>
    %cst_16 = arith.constant dense<0.000000e+00> : vector<8x512xf32>
    %17 = tpu.matmul %16, %7, %cst_16 {dimension_numbers = #tpu.dot_dimension_numbers<[1], [0], [0], [1], [0, 0, 1, 1], [], []>} : vector<8x128xbf16>, vector<128x512xbf16>, vector<8x512xf32> -> vector<8x512xf32>
    %18 = arith.addf %15, %17 : vector<8x512xf32>
    %19 = vector.extract_strided_slice %18 {offsets = [0, 0], sizes = [8, 384], strides = [1, 1]} : vector<8x512xf32> to vector<8x384xf32>
    %20 = arith.negf %19 : vector<8x384xf32>
    %21 = math.exp %20 : vector<8x384xf32>
    %cst_17 = arith.constant 1.000000e+00 : f32
    %22 = vector.broadcast %cst_17 : f32 to vector<8x384xf32>
    %23 = arith.addf %22, %21 : vector<8x384xf32>
    %24 = arith.divf %22, %23 : vector<8x384xf32>
    %25 = vector.extract_strided_slice %24 {offsets = [0, 0], sizes = [8, 128], strides = [1, 1]} : vector<8x384xf32> to vector<8x128xf32>
    %26 = vector.extract_strided_slice %24 {offsets = [0, 128], sizes = [8, 128], strides = [1, 1]} : vector<8x384xf32> to vector<8x128xf32>
    %27 = vector.extract_strided_slice %24 {offsets = [0, 256], sizes = [8, 128], strides = [1, 1]} : vector<8x384xf32> to vector<8x128xf32>
    %28 = vector.extract_strided_slice %18 {offsets = [0, 384], sizes = [8, 128], strides = [1, 1]} : vector<8x512xf32> to vector<8x128xf32>
    %29 = math.tanh %28 : vector<8x128xf32>
    %30 = arith.mulf %26, %11 : vector<8x128xf32>
    %31 = arith.mulf %25, %29 : vector<8x128xf32>
    %32 = arith.addf %30, %31 : vector<8x128xf32>
    %33 = math.tanh %32 : vector<8x128xf32>
    %34 = arith.mulf %27, %33 : vector<8x128xf32>
    %35 = arith.truncf %34 : vector<8x128xf32> to vector<8x128xbf16>
    %36 = arith.index_cast %13 : i32 to index
    %c0_18 = arith.constant 0 : index
    %37 = vector.load %arg12[%36, %c0_18] : memref<64x128xbf16, #tpu.memory_space<vmem>>, vector<8x128xbf16>
    tpu.vector_store %arg12[%36, %c0_18], %35 {strides = array<i32>} : memref<64x128xbf16, #tpu.memory_space<vmem>>, vector<8x128xbf16>,
    %c1_i32 = arith.constant 1 : i32
    %c8_i32_19 = arith.constant 8 : i32
    %38 = arith.muli %c1_i32, %c8_i32_19 : i32
    %39 = tpu.assume_multiple %38, 8 : i32
    %40 = arith.index_cast %39 : i32 to index
    %c0_20 = arith.constant 0 : index
    %41 = vector.load %arg13[%40, %c0_20] : memref<64x512xf32, #tpu.memory_space<vmem>>, vector<8x512xf32>
    %42 = arith.truncf %34 : vector<8x128xf32> to vector<8x128xbf16>
    %cst_21 = arith.constant dense<0.000000e+00> : vector<8x512xf32>
    %43 = tpu.matmul %42, %7, %cst_21 {dimension_numbers = #tpu.dot_dimension_numbers<[1], [0], [0], [1], [0, 0, 1, 1], [], []>} : vector<8x128xbf16>, vector<128x512xbf16>, vector<8x512xf32> -> vector<8x512xf32>
    %44 = arith.addf %41, %43 : vector<8x512xf32>
    %45 = vector.extract_strided_slice %44 {offsets = [0, 0], sizes = [8, 384], strides = [1, 1]} : vector<8x512xf32> to vector<8x384xf32>
    %46 = arith.negf %45 : vector<8x384xf32>
    %47 = math.exp %46 : vector<8x384xf32>
    %cst_22 = arith.constant 1.000000e+00 : f32
    %48 = vector.broadcast %cst_22 : f32 to vector<8x384xf32>
    %49 = arith.addf %48, %47 : vector<8x384xf32>
    %50 = arith.divf %48, %49 : vector<8x384xf32>
    %51 = vector.extract_strided_slice %50 {offsets = [0, 0], sizes = [8, 128], strides = [1, 1]} : vector<8x384xf32> to vector<8x128xf32>
    %52 = vector.extract_strided_slice %50 {offsets = [0, 128], sizes = [8, 128], strides = [1, 1]} : vector<8x384xf32> to vector<8x128xf32>
    %53 = vector.extract_strided_slice %50 {offsets = [0, 256], sizes = [8, 128], strides = [1, 1]} : vector<8x384xf32> to vector<8x128xf32>
    %54 = vector.extract_strided_slice %44 {offsets = [0, 384], sizes = [8, 128], strides = [1, 1]} : vector<8x512xf32> to vector<8x128xf32>
    %55 = math.tanh %54 : vector<8x128xf32>
    %56 = arith.mulf %52, %32 : vector<8x128xf32>
    %57 = arith.mulf %51, %55 : vector<8x128xf32>
    %58 = arith.addf %56, %57 : vector<8x128xf32>
    %59 = math.tanh %58 : vector<8x128xf32>
    %60 = arith.mulf %53, %59 : vector<8x128xf32>
    %61 = arith.truncf %60 : vector<8x128xf32> to vector<8x128xbf16>
    %62 = arith.index_cast %39 : i32 to index
    %c0_23 = arith.constant 0 : index
    %63 = vector.load %arg12[%62, %c0_23] : memref<64x128xbf16, #tpu.memory_space<vmem>>, vector<8x128xbf16>
    tpu.vector_store %arg12[%62, %c0_23], %61 {strides = array<i32>} : memref<64x128xbf16, #tpu.memory_space<vmem>>, vector<8x128xbf16>,
    %c2_i32 = arith.constant 2 : i32
    %c8_i32_24 = arith.constant 8 : i32
    %64 = arith.muli %c2_i32, %c8_i32_24 : i32
    %65 = tpu.assume_multiple %64, 8 : i32
    %66 = arith.index_cast %65 : i32 to index
    %c0_25 = arith.constant 0 : index
    %67 = vector.load %arg13[%66, %c0_25] : memref<64x512xf32, #tpu.memory_space<vmem>>, vector<8x512xf32>
    %68 = arith.truncf %60 : vector<8x128xf32> to vector<8x128xbf16>
    %cst_26 = arith.constant dense<0.000000e+00> : vector<8x512xf32>
    %69 = tpu.matmul %68, %7, %cst_26 {dimension_numbers = #tpu.dot_dimension_numbers<[1], [0], [0], [1], [0, 0, 1, 1], [], []>} : vector<8x128xbf16>, vector<128x512xbf16>, vector<8x512xf32> -> vector<8x512xf32>
    %70 = arith.addf %67, %69 : vector<8x512xf32>
    %71 = vector.extract_strided_slice %70 {offsets = [0, 0], sizes = [8, 384], strides = [1, 1]} : vector<8x512xf32> to vector<8x384xf32>
    %72 = arith.negf %71 : vector<8x384xf32>
    %73 = math.exp %72 : vector<8x384xf32>
    %cst_27 = arith.constant 1.000000e+00 : f32
    %74 = vector.broadcast %cst_27 : f32 to vector<8x384xf32>
    %75 = arith.addf %74, %73 : vector<8x384xf32>
    %76 = arith.divf %74, %75 : vector<8x384xf32>
    %77 = vector.extract_strided_slice %76 {offsets = [0, 0], sizes = [8, 128], strides = [1, 1]} : vector<8x384xf32> to vector<8x128xf32>
    %78 = vector.extract_strided_slice %76 {offsets = [0, 128], sizes = [8, 128], strides = [1, 1]} : vector<8x384xf32> to vector<8x128xf32>
    %79 = vector.extract_strided_slice %76 {offsets = [0, 256], sizes = [8, 128], strides = [1, 1]} : vector<8x384xf32> to vector<8x128xf32>
    %80 = vector.extract_strided_slice %70 {offsets = [0, 384], sizes = [8, 128], strides = [1, 1]} : vector<8x512xf32> to vector<8x128xf32>
    %81 = math.tanh %80 : vector<8x128xf32>
    %82 = arith.mulf %78, %58 : vector<8x128xf32>
    %83 = arith.mulf %77, %81 : vector<8x128xf32>
    %84 = arith.addf %82, %83 : vector<8x128xf32>
    %85 = math.tanh %84 : vector<8x128xf32>
    %86 = arith.mulf %79, %85 : vector<8x128xf32>
    %87 = arith.truncf %86 : vector<8x128xf32> to vector<8x128xbf16>
    %88 = arith.index_cast %65 : i32 to index
    %c0_28 = arith.constant 0 : index
    %89 = vector.load %arg12[%88, %c0_28] : memref<64x128xbf16, #tpu.memory_space<vmem>>, vector<8x128xbf16>
    tpu.vector_store %arg12[%88, %c0_28], %87 {strides = array<i32>} : memref<64x128xbf16, #tpu.memory_space<vmem>>, vector<8x128xbf16>,
    %c3_i32 = arith.constant 3 : i32
    %c8_i32_29 = arith.constant 8 : i32
    %90 = arith.muli %c3_i32, %c8_i32_29 : i32
    %91 = tpu.assume_multiple %90, 8 : i32
    %92 = arith.index_cast %91 : i32 to index
    %c0_30 = arith.constant 0 : index
    %93 = vector.load %arg13[%92, %c0_30] : memref<64x512xf32, #tpu.memory_space<vmem>>, vector<8x512xf32>
    %94 = arith.truncf %86 : vector<8x128xf32> to vector<8x128xbf16>
    %cst_31 = arith.constant dense<0.000000e+00> : vector<8x512xf32>
    %95 = tpu.matmul %94, %7, %cst_31 {dimension_numbers = #tpu.dot_dimension_numbers<[1], [0], [0], [1], [0, 0, 1, 1], [], []>} : vector<8x128xbf16>, vector<128x512xbf16>, vector<8x512xf32> -> vector<8x512xf32>
    %96 = arith.addf %93, %95 : vector<8x512xf32>
    %97 = vector.extract_strided_slice %96 {offsets = [0, 0], sizes = [8, 384], strides = [1, 1]} : vector<8x512xf32> to vector<8x384xf32>
    %98 = arith.negf %97 : vector<8x384xf32>
    %99 = math.exp %98 : vector<8x384xf32>
    %cst_32 = arith.constant 1.000000e+00 : f32
    %100 = vector.broadcast %cst_32 : f32 to vector<8x384xf32>
    %101 = arith.addf %100, %99 : vector<8x384xf32>
    %102 = arith.divf %100, %101 : vector<8x384xf32>
    %103 = vector.extract_strided_slice %102 {offsets = [0, 0], sizes = [8, 128], strides = [1, 1]} : vector<8x384xf32> to vector<8x128xf32>
    %104 = vector.extract_strided_slice %102 {offsets = [0, 128], sizes = [8, 128], strides = [1, 1]} : vector<8x384xf32> to vector<8x128xf32>
    %105 = vector.extract_strided_slice %102 {offsets = [0, 256], sizes = [8, 128], strides = [1, 1]} : vector<8x384xf32> to vector<8x128xf32>
    %106 = vector.extract_strided_slice %96 {offsets = [0, 384], sizes = [8, 128], strides = [1, 1]} : vector<8x512xf32> to vector<8x128xf32>
    %107 = math.tanh %106 : vector<8x128xf32>
    %108 = arith.mulf %104, %84 : vector<8x128xf32>
    %109 = arith.mulf %103, %107 : vector<8x128xf32>
    %110 = arith.addf %108, %109 : vector<8x128xf32>
    %111 = math.tanh %110 : vector<8x128xf32>
    %112 = arith.mulf %105, %111 : vector<8x128xf32>
    %113 = arith.truncf %112 : vector<8x128xf32> to vector<8x128xbf16>
    %114 = arith.index_cast %91 : i32 to index
    %c0_33 = arith.constant 0 : index
    %115 = vector.load %arg12[%114, %c0_33] : memref<64x128xbf16, #tpu.memory_space<vmem>>, vector<8x128xbf16>
    tpu.vector_store %arg12[%114, %c0_33], %113 {strides = array<i32>} : memref<64x128xbf16, #tpu.memory_space<vmem>>, vector<8x128xbf16>,
    %c4_i32 = arith.constant 4 : i32
    %c8_i32_34 = arith.constant 8 : i32
    %116 = arith.muli %c4_i32, %c8_i32_34 : i32
    %117 = tpu.assume_multiple %116, 8 : i32
    %118 = arith.index_cast %117 : i32 to index
    %c0_35 = arith.constant 0 : index
    %119 = vector.load %arg13[%118, %c0_35] : memref<64x512xf32, #tpu.memory_space<vmem>>, vector<8x512xf32>
    %120 = arith.truncf %112 : vector<8x128xf32> to vector<8x128xbf16>
    %cst_36 = arith.constant dense<0.000000e+00> : vector<8x512xf32>
    %121 = tpu.matmul %120, %7, %cst_36 {dimension_numbers = #tpu.dot_dimension_numbers<[1], [0], [0], [1], [0, 0, 1, 1], [], []>} : vector<8x128xbf16>, vector<128x512xbf16>, vector<8x512xf32> -> vector<8x512xf32>
    %122 = arith.addf %119, %121 : vector<8x512xf32>
    %123 = vector.extract_strided_slice %122 {offsets = [0, 0], sizes = [8, 384], strides = [1, 1]} : vector<8x512xf32> to vector<8x384xf32>
    %124 = arith.negf %123 : vector<8x384xf32>
    %125 = math.exp %124 : vector<8x384xf32>
    %cst_37 = arith.constant 1.000000e+00 : f32
    %126 = vector.broadcast %cst_37 : f32 to vector<8x384xf32>
    %127 = arith.addf %126, %125 : vector<8x384xf32>
    %128 = arith.divf %126, %127 : vector<8x384xf32>
    %129 = vector.extract_strided_slice %128 {offsets = [0, 0], sizes = [8, 128], strides = [1, 1]} : vector<8x384xf32> to vector<8x128xf32>
    %130 = vector.extract_strided_slice %128 {offsets = [0, 128], sizes = [8, 128], strides = [1, 1]} : vector<8x384xf32> to vector<8x128xf32>
    %131 = vector.extract_strided_slice %128 {offsets = [0, 256], sizes = [8, 128], strides = [1, 1]} : vector<8x384xf32> to vector<8x128xf32>
    %132 = vector.extract_strided_slice %122 {offsets = [0, 384], sizes = [8, 128], strides = [1, 1]} : vector<8x512xf32> to vector<8x128xf32>
    %133 = math.tanh %132 : vector<8x128xf32>
    %134 = arith.mulf %130, %110 : vector<8x128xf32>
    %135 = arith.mulf %129, %133 : vector<8x128xf32>
    %136 = arith.addf %134, %135 : vector<8x128xf32>
    %137 = math.tanh %136 : vector<8x128xf32>
    %138 = arith.mulf %131, %137 : vector<8x128xf32>
    %139 = arith.truncf %138 : vector<8x128xf32> to vector<8x128xbf16>
    %140 = arith.index_cast %117 : i32 to index
    %c0_38 = arith.constant 0 : index
    %141 = vector.load %arg12[%140, %c0_38] : memref<64x128xbf16, #tpu.memory_space<vmem>>, vector<8x128xbf16>
    tpu.vector_store %arg12[%140, %c0_38], %139 {strides = array<i32>} : memref<64x128xbf16, #tpu.memory_space<vmem>>, vector<8x128xbf16>,
    %c5_i32 = arith.constant 5 : i32
    %c8_i32_39 = arith.constant 8 : i32
    %142 = arith.muli %c5_i32, %c8_i32_39 : i32
    %143 = tpu.assume_multiple %142, 8 : i32
    %144 = arith.index_cast %143 : i32 to index
    %c0_40 = arith.constant 0 : index
    %145 = vector.load %arg13[%144, %c0_40] : memref<64x512xf32, #tpu.memory_space<vmem>>, vector<8x512xf32>
    %146 = arith.truncf %138 : vector<8x128xf32> to vector<8x128xbf16>
    %cst_41 = arith.constant dense<0.000000e+00> : vector<8x512xf32>
    %147 = tpu.matmul %146, %7, %cst_41 {dimension_numbers = #tpu.dot_dimension_numbers<[1], [0], [0], [1], [0, 0, 1, 1], [], []>} : vector<8x128xbf16>, vector<128x512xbf16>, vector<8x512xf32> -> vector<8x512xf32>
    %148 = arith.addf %145, %147 : vector<8x512xf32>
    %149 = vector.extract_strided_slice %148 {offsets = [0, 0], sizes = [8, 384], strides = [1, 1]} : vector<8x512xf32> to vector<8x384xf32>
    %150 = arith.negf %149 : vector<8x384xf32>
    %151 = math.exp %150 : vector<8x384xf32>
    %cst_42 = arith.constant 1.000000e+00 : f32
    %152 = vector.broadcast %cst_42 : f32 to vector<8x384xf32>
    %153 = arith.addf %152, %151 : vector<8x384xf32>
    %154 = arith.divf %152, %153 : vector<8x384xf32>
    %155 = vector.extract_strided_slice %154 {offsets = [0, 0], sizes = [8, 128], strides = [1, 1]} : vector<8x384xf32> to vector<8x128xf32>
    %156 = vector.extract_strided_slice %154 {offsets = [0, 128], sizes = [8, 128], strides = [1, 1]} : vector<8x384xf32> to vector<8x128xf32>
    %157 = vector.extract_strided_slice %154 {offsets = [0, 256], sizes = [8, 128], strides = [1, 1]} : vector<8x384xf32> to vector<8x128xf32>
    %158 = vector.extract_strided_slice %148 {offsets = [0, 384], sizes = [8, 128], strides = [1, 1]} : vector<8x512xf32> to vector<8x128xf32>
    %159 = math.tanh %158 : vector<8x128xf32>
    %160 = arith.mulf %156, %136 : vector<8x128xf32>
    %161 = arith.mulf %155, %159 : vector<8x128xf32>
    %162 = arith.addf %160, %161 : vector<8x128xf32>
    %163 = math.tanh %162 : vector<8x128xf32>
    %164 = arith.mulf %157, %163 : vector<8x128xf32>
    %165 = arith.truncf %164 : vector<8x128xf32> to vector<8x128xbf16>
    %166 = arith.index_cast %143 : i32 to index
    %c0_43 = arith.constant 0 : index
    %167 = vector.load %arg12[%166, %c0_43] : memref<64x128xbf16, #tpu.memory_space<vmem>>, vector<8x128xbf16>
    tpu.vector_store %arg12[%166, %c0_43], %165 {strides = array<i32>} : memref<64x128xbf16, #tpu.memory_space<vmem>>, vector<8x128xbf16>,
    %c6_i32 = arith.constant 6 : i32
    %c8_i32_44 = arith.constant 8 : i32
    %168 = arith.muli %c6_i32, %c8_i32_44 : i32
    %169 = tpu.assume_multiple %168, 8 : i32
    %170 = arith.index_cast %169 : i32 to index
    %c0_45 = arith.constant 0 : index
    %171 = vector.load %arg13[%170, %c0_45] : memref<64x512xf32, #tpu.memory_space<vmem>>, vector<8x512xf32>
    %172 = arith.truncf %164 : vector<8x128xf32> to vector<8x128xbf16>
    %cst_46 = arith.constant dense<0.000000e+00> : vector<8x512xf32>
    %173 = tpu.matmul %172, %7, %cst_46 {dimension_numbers = #tpu.dot_dimension_numbers<[1], [0], [0], [1], [0, 0, 1, 1], [], []>} : vector<8x128xbf16>, vector<128x512xbf16>, vector<8x512xf32> -> vector<8x512xf32>
    %174 = arith.addf %171, %173 : vector<8x512xf32>
    %175 = vector.extract_strided_slice %174 {offsets = [0, 0], sizes = [8, 384], strides = [1, 1]} : vector<8x512xf32> to vector<8x384xf32>
    %176 = arith.negf %175 : vector<8x384xf32>
    %177 = math.exp %176 : vector<8x384xf32>
    %cst_47 = arith.constant 1.000000e+00 : f32
    %178 = vector.broadcast %cst_47 : f32 to vector<8x384xf32>
    %179 = arith.addf %178, %177 : vector<8x384xf32>
    %180 = arith.divf %178, %179 : vector<8x384xf32>
    %181 = vector.extract_strided_slice %180 {offsets = [0, 0], sizes = [8, 128], strides = [1, 1]} : vector<8x384xf32> to vector<8x128xf32>
    %182 = vector.extract_strided_slice %180 {offsets = [0, 128], sizes = [8, 128], strides = [1, 1]} : vector<8x384xf32> to vector<8x128xf32>
    %183 = vector.extract_strided_slice %180 {offsets = [0, 256], sizes = [8, 128], strides = [1, 1]} : vector<8x384xf32> to vector<8x128xf32>
    %184 = vector.extract_strided_slice %174 {offsets = [0, 384], sizes = [8, 128], strides = [1, 1]} : vector<8x512xf32> to vector<8x128xf32>
    %185 = math.tanh %184 : vector<8x128xf32>
    %186 = arith.mulf %182, %162 : vector<8x128xf32>
    %187 = arith.mulf %181, %185 : vector<8x128xf32>
    %188 = arith.addf %186, %187 : vector<8x128xf32>
    %189 = math.tanh %188 : vector<8x128xf32>
    %190 = arith.mulf %183, %189 : vector<8x128xf32>
    %191 = arith.truncf %190 : vector<8x128xf32> to vector<8x128xbf16>
    %192 = arith.index_cast %169 : i32 to index
    %c0_48 = arith.constant 0 : index
    %193 = vector.load %arg12[%192, %c0_48] : memref<64x128xbf16, #tpu.memory_space<vmem>>, vector<8x128xbf16>
    tpu.vector_store %arg12[%192, %c0_48], %191 {strides = array<i32>} : memref<64x128xbf16, #tpu.memory_space<vmem>>, vector<8x128xbf16>,
    %c7_i32 = arith.constant 7 : i32
    %c8_i32_49 = arith.constant 8 : i32
    %194 = arith.muli %c7_i32, %c8_i32_49 : i32
    %195 = tpu.assume_multiple %194, 8 : i32
    %196 = arith.index_cast %195 : i32 to index
    %c0_50 = arith.constant 0 : index
    %197 = vector.load %arg13[%196, %c0_50] : memref<64x512xf32, #tpu.memory_space<vmem>>, vector<8x512xf32>
    %198 = arith.truncf %190 : vector<8x128xf32> to vector<8x128xbf16>
    %cst_51 = arith.constant dense<0.000000e+00> : vector<8x512xf32>
    %199 = tpu.matmul %198, %7, %cst_51 {dimension_numbers = #tpu.dot_dimension_numbers<[1], [0], [0], [1], [0, 0, 1, 1], [], []>} : vector<8x128xbf16>, vector<128x512xbf16>, vector<8x512xf32> -> vector<8x512xf32>
    %200 = arith.addf %197, %199 : vector<8x512xf32>
    %201 = vector.extract_strided_slice %200 {offsets = [0, 0], sizes = [8, 384], strides = [1, 1]} : vector<8x512xf32> to vector<8x384xf32>
    %202 = arith.negf %201 : vector<8x384xf32>
    %203 = math.exp %202 : vector<8x384xf32>
    %cst_52 = arith.constant 1.000000e+00 : f32
    %204 = vector.broadcast %cst_52 : f32 to vector<8x384xf32>
    %205 = arith.addf %204, %203 : vector<8x384xf32>
    %206 = arith.divf %204, %205 : vector<8x384xf32>
    %207 = vector.extract_strided_slice %206 {offsets = [0, 0], sizes = [8, 128], strides = [1, 1]} : vector<8x384xf32> to vector<8x128xf32>
    %208 = vector.extract_strided_slice %206 {offsets = [0, 128], sizes = [8, 128], strides = [1, 1]} : vector<8x384xf32> to vector<8x128xf32>
    %209 = vector.extract_strided_slice %206 {offsets = [0, 256], sizes = [8, 128], strides = [1, 1]} : vector<8x384xf32> to vector<8x128xf32>
    %210 = vector.extract_strided_slice %200 {offsets = [0, 384], sizes = [8, 128], strides = [1, 1]} : vector<8x512xf32> to vector<8x128xf32>
    %211 = math.tanh %210 : vector<8x128xf32>
    %212 = arith.mulf %208, %188 : vector<8x128xf32>
    %213 = arith.mulf %207, %211 : vector<8x128xf32>
    %214 = arith.addf %212, %213 : vector<8x128xf32>
    %215 = math.tanh %214 : vector<8x128xf32>
    %216 = arith.mulf %209, %215 : vector<8x128xf32>
    %217 = arith.truncf %216 : vector<8x128xf32> to vector<8x128xbf16>
    %218 = arith.index_cast %195 : i32 to index
    %c0_53 = arith.constant 0 : index
    %219 = vector.load %arg12[%218, %c0_53] : memref<64x128xbf16, #tpu.memory_space<vmem>>, vector<8x128xbf16>
    tpu.vector_store %arg12[%218, %c0_53], %217 {strides = array<i32>} : memref<64x128xbf16, #tpu.memory_space<vmem>>, vector<8x128xbf16>,
    %c8_i32_54 = arith.constant 8 : i32
    %c0_55 = arith.constant 0 : index
    %c0_56 = arith.constant 0 : index
    %220 = vector.load %arg12[%c0_55, %c0_56] : memref<64x128xbf16, #tpu.memory_space<vmem>>, vector<64x128xbf16>
    %c0_57 = arith.constant 0 : index
    %c0_58 = arith.constant 0 : index
    %221 = vector.load %arg6[%c0_57, %c0_58] : memref<128x512xbf16, #tpu.memory_space<vmem>>, vector<128x512xbf16>
    %cst_59 = arith.constant dense<0.000000e+00> : vector<64x512xf32>
    %222 = tpu.matmul %220, %221, %cst_59 {dimension_numbers = #tpu.dot_dimension_numbers<[1], [0], [0], [1], [0, 0, 1, 1], [], []>} : vector<64x128xbf16>, vector<128x512xbf16>, vector<64x512xf32> -> vector<64x512xf32>
    %c0_60 = arith.constant 0 : index
    %c0_61 = arith.constant 0 : index
    %223 = vector.load %arg8[%c0_60, %c0_61] : memref<1x512xf32, #tpu.memory_space<vmem>>, vector<1x512xf32>
    %224 = vector.broadcast %223 : vector<1x512xf32> to vector<64x512xf32>
    %225 = arith.addf %222, %224 : vector<64x512xf32>
    %c0_62 = arith.constant 0 : index
    %c0_63 = arith.constant 0 : index
    %226 = vector.load %arg13[%c0_62, %c0_63] : memref<64x512xf32, #tpu.memory_space<vmem>>, vector<64x512xf32>
    tpu.vector_store %arg13[%c0_62, %c0_63], %225 {strides = array<i32>} : memref<64x512xf32, #tpu.memory_space<vmem>>, vector<64x512xf32>,
    %c0_64 = arith.constant 0 : index
    %c0_65 = arith.constant 0 : index
    %227 = vector.load %arg7[%c0_64, %c0_65] : memref<128x512xbf16, #tpu.memory_space<vmem>>, vector<128x512xbf16>
    %c1 = arith.constant 1 : index
    %c0_66 = arith.constant 0 : index
    %c0_67 = arith.constant 0 : index
    %228 = vector.load %arg1[%c1, %c0_66, %c0_67] : memref<2x8x128xf32, #tpu.memory_space<vmem>>, vector<1x8x128xf32>
    %229 = vector.shape_cast %228 : vector<1x8x128xf32> to vector<8x128xf32>
    %c1_68 = arith.constant 1 : index
    %c0_69 = arith.constant 0 : index
    %c0_70 = arith.constant 0 : index
    %230 = vector.load %arg2[%c1_68, %c0_69, %c0_70] : memref<2x8x128xf32, #tpu.memory_space<vmem>>, vector<1x8x128xf32>
    %231 = vector.shape_cast %230 : vector<1x8x128xf32> to vector<8x128xf32>
    %c0_i32_71 = arith.constant 0 : i32
    %c8_i32_72 = arith.constant 8 : i32
    %232 = arith.muli %c0_i32_71, %c8_i32_72 : i32
    %233 = tpu.assume_multiple %232, 8 : i32
    %234 = arith.index_cast %233 : i32 to index
    %c0_73 = arith.constant 0 : index
    %235 = vector.load %arg13[%234, %c0_73] : memref<64x512xf32, #tpu.memory_space<vmem>>, vector<8x512xf32>
    %236 = arith.truncf %229 : vector<8x128xf32> to vector<8x128xbf16>
    %cst_74 = arith.constant dense<0.000000e+00> : vector<8x512xf32>
    %237 = tpu.matmul %236, %227, %cst_74 {dimension_numbers = #tpu.dot_dimension_numbers<[1], [0], [0], [1], [0, 0, 1, 1], [], []>} : vector<8x128xbf16>, vector<128x512xbf16>, vector<8x512xf32> -> vector<8x512xf32>
    %238 = arith.addf %235, %237 : vector<8x512xf32>
    %239 = vector.extract_strided_slice %238 {offsets = [0, 0], sizes = [8, 384], strides = [1, 1]} : vector<8x512xf32> to vector<8x384xf32>
    %240 = arith.negf %239 : vector<8x384xf32>
    %241 = math.exp %240 : vector<8x384xf32>
    %cst_75 = arith.constant 1.000000e+00 : f32
    %242 = vector.broadcast %cst_75 : f32 to vector<8x384xf32>
    %243 = arith.addf %242, %241 : vector<8x384xf32>
    %244 = arith.divf %242, %243 : vector<8x384xf32>
    %245 = vector.extract_strided_slice %244 {offsets = [0, 0], sizes = [8, 128], strides = [1, 1]} : vector<8x384xf32> to vector<8x128xf32>
    %246 = vector.extract_strided_slice %244 {offsets = [0, 128], sizes = [8, 128], strides = [1, 1]} : vector<8x384xf32> to vector<8x128xf32>
    %247 = vector.extract_strided_slice %244 {offsets = [0, 256], sizes = [8, 128], strides = [1, 1]} : vector<8x384xf32> to vector<8x128xf32>
    %248 = vector.extract_strided_slice %238 {offsets = [0, 384], sizes = [8, 128], strides = [1, 1]} : vector<8x512xf32> to vector<8x128xf32>
    %249 = math.tanh %248 : vector<8x128xf32>
    %250 = arith.mulf %246, %231 : vector<8x128xf32>
    %251 = arith.mulf %245, %249 : vector<8x128xf32>
    %252 = arith.addf %250, %251 : vector<8x128xf32>
    %253 = math.tanh %252 : vector<8x128xf32>
    %254 = arith.mulf %247, %253 : vector<8x128xf32>
    %c1_i32_76 = arith.constant 1 : i32
    %c8_i32_77 = arith.constant 8 : i32
    %255 = arith.muli %c1_i32_76, %c8_i32_77 : i32
    %256 = tpu.assume_multiple %255, 8 : i32
    %257 = arith.index_cast %256 : i32 to index
    %c0_78 = arith.constant 0 : index
    %258 = vector.load %arg13[%257, %c0_78] : memref<64x512xf32, #tpu.memory_space<vmem>>, vector<8x512xf32>
    %259 = arith.truncf %254 : vector<8x128xf32> to vector<8x128xbf16>
    %cst_79 = arith.constant dense<0.000000e+00> : vector<8x512xf32>
    %260 = tpu.matmul %259, %227, %cst_79 {dimension_numbers = #tpu.dot_dimension_numbers<[1], [0], [0], [1], [0, 0, 1, 1], [], []>} : vector<8x128xbf16>, vector<128x512xbf16>, vector<8x512xf32> -> vector<8x512xf32>
    %261 = arith.addf %258, %260 : vector<8x512xf32>
    %262 = vector.extract_strided_slice %261 {offsets = [0, 0], sizes = [8, 384], strides = [1, 1]} : vector<8x512xf32> to vector<8x384xf32>
    %263 = arith.negf %262 : vector<8x384xf32>
    %264 = math.exp %263 : vector<8x384xf32>
    %cst_80 = arith.constant 1.000000e+00 : f32
    %265 = vector.broadcast %cst_80 : f32 to vector<8x384xf32>
    %266 = arith.addf %265, %264 : vector<8x384xf32>
    %267 = arith.divf %265, %266 : vector<8x384xf32>
    %268 = vector.extract_strided_slice %267 {offsets = [0, 0], sizes = [8, 128], strides = [1, 1]} : vector<8x384xf32> to vector<8x128xf32>
    %269 = vector.extract_strided_slice %267 {offsets = [0, 128], sizes = [8, 128], strides = [1, 1]} : vector<8x384xf32> to vector<8x128xf32>
    %270 = vector.extract_strided_slice %267 {offsets = [0, 256], sizes = [8, 128], strides = [1, 1]} : vector<8x384xf32> to vector<8x128xf32>
    %271 = vector.extract_strided_slice %261 {offsets = [0, 384], sizes = [8, 128], strides = [1, 1]} : vector<8x512xf32> to vector<8x128xf32>
    %272 = math.tanh %271 : vector<8x128xf32>
    %273 = arith.mulf %269, %252 : vector<8x128xf32>
    %274 = arith.mulf %268, %272 : vector<8x128xf32>
    %275 = arith.addf %273, %274 : vector<8x128xf32>
    %276 = math.tanh %275 : vector<8x128xf32>
    %277 = arith.mulf %270, %276 : vector<8x128xf32>
    %c2_i32_81 = arith.constant 2 : i32
    %c8_i32_82 = arith.constant 8 : i32
    %278 = arith.muli %c2_i32_81, %c8_i32_82 : i32
    %279 = tpu.assume_multiple %278, 8 : i32
    %280 = arith.index_cast %279 : i32 to index
    %c0_83 = arith.constant 0 : index
    %281 = vector.load %arg13[%280, %c0_83] : memref<64x512xf32, #tpu.memory_space<vmem>>, vector<8x512xf32>
    %282 = arith.truncf %277 : vector<8x128xf32> to vector<8x128xbf16>
    %cst_84 = arith.constant dense<0.000000e+00> : vector<8x512xf32>
    %283 = tpu.matmul %282, %227, %cst_84 {dimension_numbers = #tpu.dot_dimension_numbers<[1], [0], [0], [1], [0, 0, 1, 1], [], []>} : vector<8x128xbf16>, vector<128x512xbf16>, vector<8x512xf32> -> vector<8x512xf32>
    %284 = arith.addf %281, %283 : vector<8x512xf32>
    %285 = vector.extract_strided_slice %284 {offsets = [0, 0], sizes = [8, 384], strides = [1, 1]} : vector<8x512xf32> to vector<8x384xf32>
    %286 = arith.negf %285 : vector<8x384xf32>
    %287 = math.exp %286 : vector<8x384xf32>
    %cst_85 = arith.constant 1.000000e+00 : f32
    %288 = vector.broadcast %cst_85 : f32 to vector<8x384xf32>
    %289 = arith.addf %288, %287 : vector<8x384xf32>
    %290 = arith.divf %288, %289 : vector<8x384xf32>
    %291 = vector.extract_strided_slice %290 {offsets = [0, 0], sizes = [8, 128], strides = [1, 1]} : vector<8x384xf32> to vector<8x128xf32>
    %292 = vector.extract_strided_slice %290 {offsets = [0, 128], sizes = [8, 128], strides = [1, 1]} : vector<8x384xf32> to vector<8x128xf32>
    %293 = vector.extract_strided_slice %290 {offsets = [0, 256], sizes = [8, 128], strides = [1, 1]} : vector<8x384xf32> to vector<8x128xf32>
    %294 = vector.extract_strided_slice %284 {offsets = [0, 384], sizes = [8, 128], strides = [1, 1]} : vector<8x512xf32> to vector<8x128xf32>
    %295 = math.tanh %294 : vector<8x128xf32>
    %296 = arith.mulf %292, %275 : vector<8x128xf32>
    %297 = arith.mulf %291, %295 : vector<8x128xf32>
    %298 = arith.addf %296, %297 : vector<8x128xf32>
    %299 = math.tanh %298 : vector<8x128xf32>
    %300 = arith.mulf %293, %299 : vector<8x128xf32>
    %c3_i32_86 = arith.constant 3 : i32
    %c8_i32_87 = arith.constant 8 : i32
    %301 = arith.muli %c3_i32_86, %c8_i32_87 : i32
    %302 = tpu.assume_multiple %301, 8 : i32
    %303 = arith.index_cast %302 : i32 to index
    %c0_88 = arith.constant 0 : index
    %304 = vector.load %arg13[%303, %c0_88] : memref<64x512xf32, #tpu.memory_space<vmem>>, vector<8x512xf32>
    %305 = arith.truncf %300 : vector<8x128xf32> to vector<8x128xbf16>
    %cst_89 = arith.constant dense<0.000000e+00> : vector<8x512xf32>
    %306 = tpu.matmul %305, %227, %cst_89 {dimension_numbers = #tpu.dot_dimension_numbers<[1], [0], [0], [1], [0, 0, 1, 1], [], []>} : vector<8x128xbf16>, vector<128x512xbf16>, vector<8x512xf32> -> vector<8x512xf32>
    %307 = arith.addf %304, %306 : vector<8x512xf32>
    %308 = vector.extract_strided_slice %307 {offsets = [0, 0], sizes = [8, 384], strides = [1, 1]} : vector<8x512xf32> to vector<8x384xf32>
    %309 = arith.negf %308 : vector<8x384xf32>
    %310 = math.exp %309 : vector<8x384xf32>
    %cst_90 = arith.constant 1.000000e+00 : f32
    %311 = vector.broadcast %cst_90 : f32 to vector<8x384xf32>
    %312 = arith.addf %311, %310 : vector<8x384xf32>
    %313 = arith.divf %311, %312 : vector<8x384xf32>
    %314 = vector.extract_strided_slice %313 {offsets = [0, 0], sizes = [8, 128], strides = [1, 1]} : vector<8x384xf32> to vector<8x128xf32>
    %315 = vector.extract_strided_slice %313 {offsets = [0, 128], sizes = [8, 128], strides = [1, 1]} : vector<8x384xf32> to vector<8x128xf32>
    %316 = vector.extract_strided_slice %313 {offsets = [0, 256], sizes = [8, 128], strides = [1, 1]} : vector<8x384xf32> to vector<8x128xf32>
    %317 = vector.extract_strided_slice %307 {offsets = [0, 384], sizes = [8, 128], strides = [1, 1]} : vector<8x512xf32> to vector<8x128xf32>
    %318 = math.tanh %317 : vector<8x128xf32>
    %319 = arith.mulf %315, %298 : vector<8x128xf32>
    %320 = arith.mulf %314, %318 : vector<8x128xf32>
    %321 = arith.addf %319, %320 : vector<8x128xf32>
    %322 = math.tanh %321 : vector<8x128xf32>
    %323 = arith.mulf %316, %322 : vector<8x128xf32>
    %c4_i32_91 = arith.constant 4 : i32
    %c8_i32_92 = arith.constant 8 : i32
    %324 = arith.muli %c4_i32_91, %c8_i32_92 : i32
    %325 = tpu.assume_multiple %324, 8 : i32
    %326 = arith.index_cast %325 : i32 to index
    %c0_93 = arith.constant 0 : index
    %327 = vector.load %arg13[%326, %c0_93] : memref<64x512xf32, #tpu.memory_space<vmem>>, vector<8x512xf32>
    %328 = arith.truncf %323 : vector<8x128xf32> to vector<8x128xbf16>
    %cst_94 = arith.constant dense<0.000000e+00> : vector<8x512xf32>
    %329 = tpu.matmul %328, %227, %cst_94 {dimension_numbers = #tpu.dot_dimension_numbers<[1], [0], [0], [1], [0, 0, 1, 1], [], []>} : vector<8x128xbf16>, vector<128x512xbf16>, vector<8x512xf32> -> vector<8x512xf32>
    %330 = arith.addf %327, %329 : vector<8x512xf32>
    %331 = vector.extract_strided_slice %330 {offsets = [0, 0], sizes = [8, 384], strides = [1, 1]} : vector<8x512xf32> to vector<8x384xf32>
    %332 = arith.negf %331 : vector<8x384xf32>
    %333 = math.exp %332 : vector<8x384xf32>
    %cst_95 = arith.constant 1.000000e+00 : f32
    %334 = vector.broadcast %cst_95 : f32 to vector<8x384xf32>
    %335 = arith.addf %334, %333 : vector<8x384xf32>
    %336 = arith.divf %334, %335 : vector<8x384xf32>
    %337 = vector.extract_strided_slice %336 {offsets = [0, 0], sizes = [8, 128], strides = [1, 1]} : vector<8x384xf32> to vector<8x128xf32>
    %338 = vector.extract_strided_slice %336 {offsets = [0, 128], sizes = [8, 128], strides = [1, 1]} : vector<8x384xf32> to vector<8x128xf32>
    %339 = vector.extract_strided_slice %336 {offsets = [0, 256], sizes = [8, 128], strides = [1, 1]} : vector<8x384xf32> to vector<8x128xf32>
    %340 = vector.extract_strided_slice %330 {offsets = [0, 384], sizes = [8, 128], strides = [1, 1]} : vector<8x512xf32> to vector<8x128xf32>
    %341 = math.tanh %340 : vector<8x128xf32>
    %342 = arith.mulf %338, %321 : vector<8x128xf32>
    %343 = arith.mulf %337, %341 : vector<8x128xf32>
    %344 = arith.addf %342, %343 : vector<8x128xf32>
    %345 = math.tanh %344 : vector<8x128xf32>
    %346 = arith.mulf %339, %345 : vector<8x128xf32>
    %c5_i32_96 = arith.constant 5 : i32
    %c8_i32_97 = arith.constant 8 : i32
    %347 = arith.muli %c5_i32_96, %c8_i32_97 : i32
    %348 = tpu.assume_multiple %347, 8 : i32
    %349 = arith.index_cast %348 : i32 to index
    %c0_98 = arith.constant 0 : index
    %350 = vector.load %arg13[%349, %c0_98] : memref<64x512xf32, #tpu.memory_space<vmem>>, vector<8x512xf32>
    %351 = arith.truncf %346 : vector<8x128xf32> to vector<8x128xbf16>
    %cst_99 = arith.constant dense<0.000000e+00> : vector<8x512xf32>
    %352 = tpu.matmul %351, %227, %cst_99 {dimension_numbers = #tpu.dot_dimension_numbers<[1], [0], [0], [1], [0, 0, 1, 1], [], []>} : vector<8x128xbf16>, vector<128x512xbf16>, vector<8x512xf32> -> vector<8x512xf32>
    %353 = arith.addf %350, %352 : vector<8x512xf32>
    %354 = vector.extract_strided_slice %353 {offsets = [0, 0], sizes = [8, 384], strides = [1, 1]} : vector<8x512xf32> to vector<8x384xf32>
    %355 = arith.negf %354 : vector<8x384xf32>
    %356 = math.exp %355 : vector<8x384xf32>
    %cst_100 = arith.constant 1.000000e+00 : f32
    %357 = vector.broadcast %cst_100 : f32 to vector<8x384xf32>
    %358 = arith.addf %357, %356 : vector<8x384xf32>
    %359 = arith.divf %357, %358 : vector<8x384xf32>
    %360 = vector.extract_strided_slice %359 {offsets = [0, 0], sizes = [8, 128], strides = [1, 1]} : vector<8x384xf32> to vector<8x128xf32>
    %361 = vector.extract_strided_slice %359 {offsets = [0, 128], sizes = [8, 128], strides = [1, 1]} : vector<8x384xf32> to vector<8x128xf32>
    %362 = vector.extract_strided_slice %359 {offsets = [0, 256], sizes = [8, 128], strides = [1, 1]} : vector<8x384xf32> to vector<8x128xf32>
    %363 = vector.extract_strided_slice %353 {offsets = [0, 384], sizes = [8, 128], strides = [1, 1]} : vector<8x512xf32> to vector<8x128xf32>
    %364 = math.tanh %363 : vector<8x128xf32>
    %365 = arith.mulf %361, %344 : vector<8x128xf32>
    %366 = arith.mulf %360, %364 : vector<8x128xf32>
    %367 = arith.addf %365, %366 : vector<8x128xf32>
    %368 = math.tanh %367 : vector<8x128xf32>
    %369 = arith.mulf %362, %368 : vector<8x128xf32>
    %c6_i32_101 = arith.constant 6 : i32
    %c8_i32_102 = arith.constant 8 : i32
    %370 = arith.muli %c6_i32_101, %c8_i32_102 : i32
    %371 = tpu.assume_multiple %370, 8 : i32
    %372 = arith.index_cast %371 : i32 to index
    %c0_103 = arith.constant 0 : index
    %373 = vector.load %arg13[%372, %c0_103] : memref<64x512xf32, #tpu.memory_space<vmem>>, vector<8x512xf32>
    %374 = arith.truncf %369 : vector<8x128xf32> to vector<8x128xbf16>
    %cst_104 = arith.constant dense<0.000000e+00> : vector<8x512xf32>
    %375 = tpu.matmul %374, %227, %cst_104 {dimension_numbers = #tpu.dot_dimension_numbers<[1], [0], [0], [1], [0, 0, 1, 1], [], []>} : vector<8x128xbf16>, vector<128x512xbf16>, vector<8x512xf32> -> vector<8x512xf32>
    %376 = arith.addf %373, %375 : vector<8x512xf32>
    %377 = vector.extract_strided_slice %376 {offsets = [0, 0], sizes = [8, 384], strides = [1, 1]} : vector<8x512xf32> to vector<8x384xf32>
    %378 = arith.negf %377 : vector<8x384xf32>
    %379 = math.exp %378 : vector<8x384xf32>
    %cst_105 = arith.constant 1.000000e+00 : f32
    %380 = vector.broadcast %cst_105 : f32 to vector<8x384xf32>
    %381 = arith.addf %380, %379 : vector<8x384xf32>
    %382 = arith.divf %380, %381 : vector<8x384xf32>
    %383 = vector.extract_strided_slice %382 {offsets = [0, 0], sizes = [8, 128], strides = [1, 1]} : vector<8x384xf32> to vector<8x128xf32>
    %384 = vector.extract_strided_slice %382 {offsets = [0, 128], sizes = [8, 128], strides = [1, 1]} : vector<8x384xf32> to vector<8x128xf32>
    %385 = vector.extract_strided_slice %382 {offsets = [0, 256], sizes = [8, 128], strides = [1, 1]} : vector<8x384xf32> to vector<8x128xf32>
    %386 = vector.extract_strided_slice %376 {offsets = [0, 384], sizes = [8, 128], strides = [1, 1]} : vector<8x512xf32> to vector<8x128xf32>
    %387 = math.tanh %386 : vector<8x128xf32>
    %388 = arith.mulf %384, %367 : vector<8x128xf32>
    %389 = arith.mulf %383, %387 : vector<8x128xf32>
    %390 = arith.addf %388, %389 : vector<8x128xf32>
    %391 = math.tanh %390 : vector<8x128xf32>
    %392 = arith.mulf %385, %391 : vector<8x128xf32>
    %c7_i32_106 = arith.constant 7 : i32
    %c8_i32_107 = arith.constant 8 : i32
    %393 = arith.muli %c7_i32_106, %c8_i32_107 : i32
    %394 = tpu.assume_multiple %393, 8 : i32
    %395 = arith.index_cast %394 : i32 to index
    %c0_108 = arith.constant 0 : index
    %396 = vector.load %arg13[%395, %c0_108] : memref<64x512xf32, #tpu.memory_space<vmem>>, vector<8x512xf32>
    %397 = arith.truncf %392 : vector<8x128xf32> to vector<8x128xbf16>
    %cst_109 = arith.constant dense<0.000000e+00> : vector<8x512xf32>
    %398 = tpu.matmul %397, %227, %cst_109 {dimension_numbers = #tpu.dot_dimension_numbers<[1], [0], [0], [1], [0, 0, 1, 1], [], []>} : vector<8x128xbf16>, vector<128x512xbf16>, vector<8x512xf32> -> vector<8x512xf32>
    %399 = arith.addf %396, %398 : vector<8x512xf32>
    %400 = vector.extract_strided_slice %399 {offsets = [0, 0], sizes = [8, 384], strides = [1, 1]} : vector<8x512xf32> to vector<8x384xf32>
    %401 = arith.negf %400 : vector<8x384xf32>
    %402 = math.exp %401 : vector<8x384xf32>
    %cst_110 = arith.constant 1.000000e+00 : f32
    %403 = vector.broadcast %cst_110 : f32 to vector<8x384xf32>
    %404 = arith.addf %403, %402 : vector<8x384xf32>
    %405 = arith.divf %403, %404 : vector<8x384xf32>
    %406 = vector.extract_strided_slice %405 {offsets = [0, 0], sizes = [8, 128], strides = [1, 1]} : vector<8x384xf32> to vector<8x128xf32>
    %407 = vector.extract_strided_slice %405 {offsets = [0, 128], sizes = [8, 128], strides = [1, 1]} : vector<8x384xf32> to vector<8x128xf32>
    %408 = vector.extract_strided_slice %405 {offsets = [0, 256], sizes = [8, 128], strides = [1, 1]} : vector<8x384xf32> to vector<8x128xf32>
    %409 = vector.extract_strided_slice %399 {offsets = [0, 384], sizes = [8, 128], strides = [1, 1]} : vector<8x512xf32> to vector<8x128xf32>
    %410 = math.tanh %409 : vector<8x128xf32>
    %411 = arith.mulf %407, %390 : vector<8x128xf32>
    %412 = arith.mulf %406, %410 : vector<8x128xf32>
    %413 = arith.addf %411, %412 : vector<8x128xf32>
    %414 = math.tanh %413 : vector<8x128xf32>
    %415 = arith.mulf %408, %414 : vector<8x128xf32>
    %c8_i32_111 = arith.constant 8 : i32
    %416 = arith.truncf %415 : vector<8x128xf32> to vector<8x128xbf16>
    %c0_112 = arith.constant 0 : index
    %c0_113 = arith.constant 0 : index
    %417 = vector.load %arg9[%c0_112, %c0_113] : memref<128x128xbf16, #tpu.memory_space<vmem>>, vector<128x128xbf16>
    %cst_114 = arith.constant dense<0.000000e+00> : vector<8x128xf32>
    %418 = tpu.matmul %416, %417, %cst_114 {dimension_numbers = #tpu.dot_dimension_numbers<[1], [0], [0], [1], [0, 0, 1, 1], [], []>} : vector<8x128xbf16>, vector<128x128xbf16>, vector<8x128xf32> -> vector<8x128xf32>
    %c0_115 = arith.constant 0 : index
    %c0_116 = arith.constant 0 : index
    %419 = vector.load %arg10[%c0_115, %c0_116] : memref<1x128xf32, #tpu.memory_space<vmem>>, vector<1x128xf32>
    %420 = vector.broadcast %419 : vector<1x128xf32> to vector<8x128xf32>
    %421 = arith.addf %418, %420 : vector<8x128xf32>
    %c0_117 = arith.constant 0 : index
    %c0_118 = arith.constant 0 : index
    %422 = vector.load %arg11[%c0_117, %c0_118] : memref<8x128xf32, #tpu.memory_space<vmem>>, vector<8x128xf32>
    tpu.vector_store %arg11[%c0_117, %c0_118], %421 {strides = array<i32>} : memref<8x128xf32, #tpu.memory_space<vmem>>, vector<8x128xf32>,
    return
  }
}

</mosaic_0001>

<llo_original>
// kernel: lstm_forward.1
$region0: #{lstm_forward.1}
  #allocation0 [shape = 'u32[]', space=smem, size = 0x4, offset = 0x4, fixed_abs, tag = 'smem constant byte address 0x4 - core index']
  #allocation1 [shape = 'u32[144,128]{1,0:T(1,128)}', space=vmem, size = 0x12000, scoped, tag = 'internal scratch']
  #allocation2 [shape = 'bf16[64,128]{1,0:T(8,128)(2,1)}', space=vmem, size = 0x4000, scoped, tag = 'scratch operand']
  #allocation3 [shape = 'f32[64,512]{1,0:T(8,128)}', space=vmem, size = 0x20000, scoped, tag = 'scratch operand']
  %s0 = inlined_call_operand.vmem [shape: bf16[64,4], index: 0, kind: input, shape index: {}]
  %s1 = inlined_call_operand.vmem [shape: f32[2,8,128], index: 1, kind: input, shape index: {}]
  %s2 = inlined_call_operand.vmem [shape: f32[2,8,128], index: 2, kind: input, shape index: {}]
  %s3 = inlined_call_operand.vmem [shape: bf16[4,512], index: 3, kind: input, shape index: {}]
  %s4 = inlined_call_operand.hbm [shape: bf16[128,512], index: 4, kind: input, shape index: {}]
  %s5 = inlined_call_operand.vmem [shape: f32[1,512], index: 5, kind: input, shape index: {}]
  %s6 = inlined_call_operand.hbm [shape: bf16[128,512], index: 6, kind: input, shape index: {}]
  %s7 = inlined_call_operand.hbm [shape: bf16[128,512], index: 7, kind: input, shape index: {}]
  %s8 = inlined_call_operand.vmem [shape: f32[1,512], index: 8, kind: input, shape index: {}]
  %s9 = inlined_call_operand.vmem [shape: bf16[128,128], index: 9, kind: input, shape index: {}]
  %s10 = inlined_call_operand.vmem [shape: f32[1,128], index: 10, kind: input, shape index: {}]
  %s11 = inlined_call_operand.vmem [shape: f32[8,128], index: 11, kind: output, shape index: {}]
  %s12 = sld [smem:[#allocation0]]
  $region66: #{lstm_forward.1} parent=0
    _
  %s14 = ssub.s32 1, %s12
  %s15 = scalar_select 0, %s14, %s12
  $region1: #{lstm_forward.1} parent=0
    #allocation4 [shape = 'u8[131072]{0}', space=vmem, size = 0x20000, scoped, tag = 'input window, operand 4, single buffered']
    #allocation5 [shape = 's32[1]{0}', space=sflag, size = 0x4, scoped, tag = 'scoped memory for lstm_forward.1']
    #allocation6 [shape = 'u8[131072]{0}', space=vmem, size = 0x20000, scoped, tag = 'input window, operand 6, single buffered']
    #allocation7 [shape = 's32[1]{0}', space=sflag, size = 0x4, scoped, tag = 'scoped memory for lstm_forward.1']
    #allocation8 [shape = 'u8[131072]{0}', space=vmem, size = 0x20000, scoped, tag = 'input window, operand 7, single buffered']
    %16 = vsyncpa [#allocation5], 0
    %17 = vsyncpa [#allocation7], 0
    // Predicated region
    $region2: #{lstm_forward.1} parent=1 // pred_check
      _
    $region3: #{lstm_forward.1} parent=1 // pred_check_branch
      %19 = sbr.rel (0) target = $region5
    $region4: #{lstm_forward.1} parent=1 // pred_region
      _
    $region5: #{lstm_forward.1} parent=1 // pred_fallthru
      _
    // Predicated region
    $region6: #{lstm_forward.1} parent=1 // pred_check
      _
    $region7: #{lstm_forward.1} parent=1 // pred_check_branch
      %21 = sbr.rel (0) target = $region9
    $region8: #{lstm_forward.1} parent=1 // pred_region
      _
    $region9: #{lstm_forward.1} parent=1 // pred_fallthru
      _
    // Predicated region
    $region10: #{lstm_forward.1} parent=1 // pred_check
      _
    $region11: #{lstm_forward.1} parent=1 // pred_check_branch
      %23 = sbr.rel (0) target = $region13
    $region12: #{lstm_forward.1} parent=1 // pred_region
      _
    $region13: #{lstm_forward.1} parent=1 // pred_fallthru
      _
    // Predicated region
    $region14: #{lstm_forward.1} parent=1 // pred_check
      _
    $region15: #{lstm_forward.1} parent=1 // pred_check_branch
      %25 = sbr.rel (0) target = $region17
    $region16: #{lstm_forward.1} parent=1 // pred_region
      _
    $region17: #{lstm_forward.1} parent=1 // pred_fallthru
      _
    // Predicated region
    $region18: #{lstm_forward.1} parent=1 // pred_check
      _
    $region19: #{lstm_forward.1} parent=1 // pred_check_branch
      %27 = sbr.rel (0) target = $region21
    $region20: #{lstm_forward.1} parent=1 // pred_region
      %s29 = ssub.s32 4096, 4096
      %30 = vsyncadd [#allocation5], %s29
      %s31 = sshll.u32 [#allocation4], 4
      %s32 = int_to_ptr.vmem [resolvable:$true] %s31
      %37 = dma.hbm_to_vmem [thread:$0]  %s4, 4096, %s32, [#allocation5], 256, 256, 16
    $region21: #{lstm_forward.1} parent=1 // pred_fallthru
      _
    // Predicated region
    $region22: #{lstm_forward.1} parent=1 // pred_check
      _
    $region23: #{lstm_forward.1} parent=1 // pred_check_branch
      %39 = sbr.rel (0) target = $region25
    $region24: #{lstm_forward.1} parent=1 // pred_region
      _
    $region25: #{lstm_forward.1} parent=1 // pred_fallthru
      _
    // Predicated region
    $region26: #{lstm_forward.1} parent=1 // pred_check
      _
    $region27: #{lstm_forward.1} parent=1 // pred_check_branch
      %41 = sbr.rel (0) target = $region29
    $region28: #{lstm_forward.1} parent=1 // pred_region
      %s43 = ssub.s32 4096, 4096
      %44 = vsyncadd [#allocation7], %s43
      %s45 = sshll.u32 [#allocation6], 4
      %s46 = int_to_ptr.vmem [resolvable:$true] %s45
      %51 = dma.hbm_to_vmem [thread:$0]  %s6, 4096, %s46, [#allocation7], 256, 256, 16
    $region29: #{lstm_forward.1} parent=1 // pred_fallthru
      _
    // Predicated region
    $region30: #{lstm_forward.1} parent=1 // pred_check
      _
    $region31: #{lstm_forward.1} parent=1 // pred_check_branch
      %53 = sbr.rel (0) target = $region33
    $region32: #{lstm_forward.1} parent=1 // pred_region
      %s55 = ssub.s32 4096, 4096
      %56 = vsyncadd [#allocation7], %s55
      %s57 = sshll.u32 [#allocation8], 4
      %s58 = int_to_ptr.vmem [resolvable:$true] %s57
      %63 = dma.hbm_to_vmem [thread:$0]  %s7, 4096, %s58, [#allocation7], 256, 256, 16
    $region33: #{lstm_forward.1} parent=1 // pred_fallthru
      _
    // Predicated region
    $region34: #{lstm_forward.1} parent=1 // pred_check
      _
    $region35: #{lstm_forward.1} parent=1 // pred_check_branch
      %65 = sbr.rel (0) target = $region37
    $region36: #{lstm_forward.1} parent=1 // pred_region
      _
    $region37: #{lstm_forward.1} parent=1 // pred_fallthru
      _
    // Predicated region
    $region38: #{lstm_forward.1} parent=1 // pred_check
      _
    $region39: #{lstm_forward.1} parent=1 // pred_check_branch
      %67 = sbr.rel (0) target = $region41
    $region40: #{lstm_forward.1} parent=1 // pred_region
      _
    $region41: #{lstm_forward.1} parent=1 // pred_fallthru
      _
    // Predicated region
    $region42: #{lstm_forward.1} parent=1 // pred_check
      _
    $region43: #{lstm_forward.1} parent=1 // pred_check_branch
      %69 = sbr.rel (0) target = $region45
    $region44: #{lstm_forward.1} parent=1 // pred_region
      _
    $region45: #{lstm_forward.1} parent=1 // pred_fallthru
      _
    // Predicated region
    $region46: #{lstm_forward.1} parent=1 // pred_check
      _
    $region47: #{lstm_forward.1} parent=1 // pred_check_branch
      %71 = sbr.rel (0) target = $region49
    $region48: #{lstm_forward.1} parent=1 // pred_region
      %72 = dma.done [#allocation5], 4096
    $region49: #{lstm_forward.1} parent=1 // pred_fallthru
      _
    // Predicated region
    $region50: #{lstm_forward.1} parent=1 // pred_check
      _
    $region51: #{lstm_forward.1} parent=1 // pred_check_branch
      %74 = sbr.rel (0) target = $region53
    $region52: #{lstm_forward.1} parent=1 // pred_region
      %75 = dma.done [#allocation7], 4096
    $region53: #{lstm_forward.1} parent=1 // pred_fallthru
      _
    // Predicated region
    $region54: #{lstm_forward.1} parent=1 // pred_check
      _
    $region55: #{lstm_forward.1} parent=1 // pred_check_branch
      %77 = sbr.rel (0) target = $region57
    $region56: #{lstm_forward.1} parent=1 // pred_region
      %78 = dma.done [#allocation7], 4096
    $region57: #{lstm_forward.1} parent=1 // pred_fallthru
      _
    %v80 = vld [vmem:[%s0] sm:$0xf]
    %v81 = vld [vmem:[%s0 + $0x4] sm:$0xf]
    %v82 = vld [vmem:[%s0 + $0x8] sm:$0xf]
    %v83 = vld [vmem:[%s0 + $0xc] sm:$0xf]
    %v84 = vld [vmem:[%s0 + $0x10] sm:$0xf]
    %v85 = vld [vmem:[%s0 + $0x14] sm:$0xf]
    %v86 = vld [vmem:[%s0 + $0x18] sm:$0xf]
    %v87 = vld [vmem:[%s0 + $0x1c] sm:$0xf]
    %v88 = vld [vmem:[%s3] sm:$0xff]
    %v89 = vld [vmem:[%s5] sm:$0xf]
    %v91 = vlaneseq
    %v92 = vshrl.u32 %v91, 7
    %v93 = vsub.s32 0, %v92
    %v94 = vrot.slane %v89, %v93
    %v95 = vlaneseq
    %v96 = vshrl.u32 %v95, 7
    %v97 = vsub.s32 1, %v96
    %v98 = vrot.slane %v89, %v97
    %v99 = vlaneseq
    %v100 = vshrl.u32 %v99, 7
    %v101 = vsub.s32 2, %v100
    %v102 = vrot.slane %v89, %v101
    %v103 = vlaneseq
    %v104 = vshrl.u32 %v103, 7
    %v105 = vsub.s32 3, %v104
    %v106 = vrot.slane %v89, %v105
    %v119 = vunpack.c.l.b16 %v80
    %v120 = vunpack.c.l.b16 %v81
    %v121 = vunpack.c.l.b16 %v82
    %v122 = vunpack.c.l.b16 %v83
    %v123 = vunpack.c.l.b16 %v84
    %v124 = vunpack.c.l.b16 %v85
    %v125 = vunpack.c.l.b16 %v86
    %v126 = vunpack.c.l.b16 %v87
    %v127 = vpack.c.b16 %v120, %v119
    %v128 = vpack.c.b16 %v122, %v121
    %v129 = vpack.c.b16 %v124, %v123
    %v130 = vpack.c.b16 %v126, %v125
    %v132 = vcombine.high %v88, %v88
    %v134 = vunpack.c.l.s4 1983009808
    %v135 = vunpack.c.0.s8 %v134
    %v136 = vlaneseq
    %v137 = vshrl.u32 %v136, 7
    %v138 = vsub.s32 %v135, %v137
    %v139 = vrot.slane %v88, %v138
    %v141 = vunpack.c.l.s4 1983009808
    %v142 = vunpack.c.0.s8 %v141
    %v143 = vlaneseq
    %v144 = vshrl.u32 %v143, 7
    %v145 = vsub.s32 %v142, %v144
    %v146 = vrot.slane %v132, %v145
    %v147 = vcombine.high %v139, %v139
    %v148 = vcombine.high %v146, %v146
    %vm149 = vcmask 31744
    %v151 = vsel %vm149, %v127, 0
    %v154 = vsel %vm149, %v128, 0
    %v157 = vsel %vm149, %v129, 0
    %v160 = vsel %vm149, %v130, 0
    %vm162 = vcmask 1041408
    %v164 = vsel %vm162, %v139, 0
    %v167 = vsel %vm162, %v147, 0
    %v170 = vsel %vm162, %v146, 0
    %v173 = vsel %vm162, %v148, 0
    %175 = vmatprep.subr.bf16.mxu0 0
    %176 = vmatpush1.bf16.msra.mxu0 0
    %177 = vmatprep.subr.bf16.mxu0 0
    %178 = vmatpush1.bf16.msra.mxu0 0
    %179 = vmatprep.subr.bf16.mxu0 0
    %180 = vmatpush1.bf16.msra.mxu0 0
    %181 = vmatprep.subr.bf16.mxu0 0
    %182 = vmatpush1.bf16.msra.mxu0 0
    %183 = vmatprep.subr.bf16.mxu0 0
    %184 = vmatpush1.bf16.msra.mxu0 0
    %185 = vmatprep.subr.bf16.mxu0 0
    %186 = vmatpush1.bf16.msra.mxu0 0
    %187 = vmatprep.subr.bf16.mxu0 0
    %188 = vmatpush1.bf16.msra.mxu0 0
    %189 = vmatprep.subr.bf16.mxu0 %v167
    %190 = vmatpush1.bf16.msra.mxu0 %v164
    %191 = vmatprep.subr.bf16.mxu0 0
    %192 = vmatpush2.bf16.msra.mxu0 0
    %193 = vmatprep.subr.bf16.mxu0 0
    %194 = vmatpush2.bf16.msra.mxu0 0
    %195 = vmatprep.subr.bf16.mxu0 0
    %196 = vmatpush2.bf16.msra.mxu0 0
    %197 = vmatprep.subr.bf16.mxu0 0
    %198 = vmatpush2.bf16.msra.mxu0 0
    %199 = vmatprep.subr.bf16.mxu0 0
    %200 = vmatpush2.bf16.msra.mxu0 0
    %201 = vmatprep.subr.bf16.mxu0 0
    %202 = vmatpush2.bf16.msra.mxu0 0
    %203 = vmatprep.subr.bf16.mxu0 0
    %204 = vmatpush2.bf16.msra.mxu0 0
    %205 = vmatprep.subr.bf16.mxu0 0
    %206 = vmatpush2.bf16.msra.mxu0 0
    %207 = vmatprep.mubr.bf16.mxu0 0
    %208 = vmatmul.mubr.bf16.gmra.mxu0 %v151
    %v209 = vpop.f32.mrf.mxu0
    %v210 = vadd.f32 %v94, %v209
    %v211 = vpop.f32.mrf.mxu0
    %v212 = vadd.f32 %v98, %v211
    %v213 = vpop.f32.mrf.mxu0
    %v214 = vadd.f32 %v94, %v213
    %v215 = vpop.f32.mrf.mxu0
    %v216 = vadd.f32 %v98, %v215
    %217 = vmatprep.mubr.bf16.mxu0 0
    %218 = vmatmul.mubr.bf16.gmra.mxu0 %v154
    %v219 = vpop.f32.mrf.mxu0
    %v220 = vadd.f32 %v94, %v219
    %v221 = vpop.f32.mrf.mxu0
    %v222 = vadd.f32 %v98, %v221
    %v223 = vpop.f32.mrf.mxu0
    %v224 = vadd.f32 %v94, %v223
    %v225 = vpop.f32.mrf.mxu0
    %v226 = vadd.f32 %v98, %v225
    %227 = vmatprep.mubr.bf16.mxu0 0
    %228 = vmatmul.mubr.bf16.gmra.mxu0 %v157
    %v229 = vpop.f32.mrf.mxu0
    %v230 = vadd.f32 %v94, %v229
    %v231 = vpop.f32.mrf.mxu0
    %v232 = vadd.f32 %v98, %v231
    %v233 = vpop.f32.mrf.mxu0
    %v234 = vadd.f32 %v94, %v233
    %v235 = vpop.f32.mrf.mxu0
    %v236 = vadd.f32 %v98, %v235
    %237 = vmatprep.mubr.bf16.mxu0 0
    %238 = vmatmul.mubr.bf16.gmra.mxu0 %v160
    %v239 = vpop.f32.mrf.mxu0
    %v240 = vadd.f32 %v94, %v239
    %v241 = vpop.f32.mrf.mxu0
    %v242 = vadd.f32 %v98, %v241
    %v243 = vpop.f32.mrf.mxu0
    %v244 = vadd.f32 %v94, %v243
    %v245 = vpop.f32.mrf.mxu0
    %v246 = vadd.f32 %v98, %v245
    %247 = vdwg.mxu0
    %248 = vmatprep.subr.bf16.mxu0 0
    %249 = vmatpush1.bf16.msra.mxu0 0
    %250 = vmatprep.subr.bf16.mxu0 0
    %251 = vmatpush1.bf16.msra.mxu0 0
    %252 = vmatprep.subr.bf16.mxu0 0
    %253 = vmatpush1.bf16.msra.mxu0 0
    %254 = vmatprep.subr.bf16.mxu0 0
    %255 = vmatpush1.bf16.msra.mxu0 0
    %256 = vmatprep.subr.bf16.mxu0 0
    %257 = vmatpush1.bf16.msra.mxu0 0
    %258 = vmatprep.subr.bf16.mxu0 0
    %259 = vmatpush1.bf16.msra.mxu0 0
    %260 = vmatprep.subr.bf16.mxu0 0
    %261 = vmatpush1.bf16.msra.mxu0 0
    %262 = vmatprep.subr.bf16.mxu0 %v173
    %263 = vmatpush1.bf16.msra.mxu0 %v170
    %264 = vmatprep.subr.bf16.mxu0 0
    %265 = vmatpush2.bf16.msra.mxu0 0
    %266 = vmatprep.subr.bf16.mxu0 0
    %267 = vmatpush2.bf16.msra.mxu0 0
    %268 = vmatprep.subr.bf16.mxu0 0
    %269 = vmatpush2.bf16.msra.mxu0 0
    %270 = vmatprep.subr.bf16.mxu0 0
    %271 = vmatpush2.bf16.msra.mxu0 0
    %272 = vmatprep.subr.bf16.mxu0 0
    %273 = vmatpush2.bf16.msra.mxu0 0
    %274 = vmatprep.subr.bf16.mxu0 0
    %275 = vmatpush2.bf16.msra.mxu0 0
    %276 = vmatprep.subr.bf16.mxu0 0
    %277 = vmatpush2.bf16.msra.mxu0 0
    %278 = vmatprep.subr.bf16.mxu0 0
    %279 = vmatpush2.bf16.msra.mxu0 0
    %280 = vmatprep.mubr.bf16.mxu0 0
    %281 = vmatmul.mubr.bf16.gmra.mxu0 %v151
    %v282 = vpop.f32.mrf.mxu0
    %v283 = vadd.f32 %v102, %v282
    %v284 = vpop.f32.mrf.mxu0
    %v285 = vadd.f32 %v106, %v284
    %v286 = vpop.f32.mrf.mxu0
    %v287 = vadd.f32 %v102, %v286
    %v288 = vpop.f32.mrf.mxu0
    %v289 = vadd.f32 %v106, %v288
    %290 = vmatprep.mubr.bf16.mxu0 0
    %291 = vmatmul.mubr.bf16.gmra.mxu0 %v154
    %v292 = vpop.f32.mrf.mxu0
    %v293 = vadd.f32 %v102, %v292
    %v294 = vpop.f32.mrf.mxu0
    %v295 = vadd.f32 %v106, %v294
    %v296 = vpop.f32.mrf.mxu0
    %v297 = vadd.f32 %v102, %v296
    %v298 = vpop.f32.mrf.mxu0
    %v299 = vadd.f32 %v106, %v298
    %300 = vmatprep.mubr.bf16.mxu0 0
    %301 = vmatmul.mubr.bf16.gmra.mxu0 %v157
    %v302 = vpop.f32.mrf.mxu0
    %v303 = vadd.f32 %v102, %v302
    %v304 = vpop.f32.mrf.mxu0
    %v305 = vadd.f32 %v106, %v304
    %v306 = vpop.f32.mrf.mxu0
    %v307 = vadd.f32 %v102, %v306
    %v308 = vpop.f32.mrf.mxu0
    %v309 = vadd.f32 %v106, %v308
    %310 = vmatprep.mubr.bf16.mxu0 0
    %311 = vmatmul.mubr.bf16.gmra.mxu0 %v160
    %v312 = vpop.f32.mrf.mxu0
    %v313 = vadd.f32 %v102, %v312
    %v314 = vpop.f32.mrf.mxu0
    %v315 = vadd.f32 %v106, %v314
    %v316 = vpop.f32.mrf.mxu0
    %v317 = vadd.f32 %v102, %v316
    %v318 = vpop.f32.mrf.mxu0
    %v319 = vadd.f32 %v106, %v318
    %320 = vdwg.mxu0
    %321 = vst [vmem:[#allocation3] sm:$0xff] %v210
    %322 = vst [vmem:[#allocation3 + $0x8] sm:$0xff] %v212
    %323 = vst [vmem:[#allocation3 + $0x10] sm:$0xff] %v283
    %324 = vst [vmem:[#allocation3 + $0x18] sm:$0xff] %v285
    %325 = vst [vmem:[#allocation3 + $0x20] sm:$0xff] %v214
    %326 = vst [vmem:[#allocation3 + $0x28] sm:$0xff] %v216
    %327 = vst [vmem:[#allocation3 + $0x30] sm:$0xff] %v287
    %328 = vst [vmem:[#allocation3 + $0x38] sm:$0xff] %v289
    %329 = vst [vmem:[#allocation3 + $0x40] sm:$0xff] %v220
    %330 = vst [vmem:[#allocation3 + $0x48] sm:$0xff] %v222
    %331 = vst [vmem:[#allocation3 + $0x50] sm:$0xff] %v293
    %332 = vst [vmem:[#allocation3 + $0x58] sm:$0xff] %v295
    %333 = vst [vmem:[#allocation3 + $0x60] sm:$0xff] %v224
    %334 = vst [vmem:[#allocation3 + $0x68] sm:$0xff] %v226
    %335 = vst [vmem:[#allocation3 + $0x70] sm:$0xff] %v297
    %336 = vst [vmem:[#allocation3 + $0x78] sm:$0xff] %v299
    %337 = vst [vmem:[#allocation3 + $0x80] sm:$0xff] %v230
    %338 = vst [vmem:[#allocation3 + $0x88] sm:$0xff] %v232
    %339 = vst [vmem:[#allocation3 + $0x90] sm:$0xff] %v303
    %340 = vst [vmem:[#allocation3 + $0x98] sm:$0xff] %v305
    %341 = vst [vmem:[#allocation3 + $0xa0] sm:$0xff] %v234
    %342 = vst [vmem:[#allocation3 + $0xa8] sm:$0xff] %v236
    %343 = vst [vmem:[#allocation3 + $0xb0] sm:$0xff] %v307
    %344 = vst [vmem:[#allocation3 + $0xb8] sm:$0xff] %v309
    %345 = vst [vmem:[#allocation3 + $0xc0] sm:$0xff] %v240
    %346 = vst [vmem:[#allocation3 + $0xc8] sm:$0xff] %v242
    %347 = vst [vmem:[#allocation3 + $0xd0] sm:$0xff] %v313
    %348 = vst [vmem:[#allocation3 + $0xd8] sm:$0xff] %v315
    %349 = vst [vmem:[#allocation3 + $0xe0] sm:$0xff] %v244
    %350 = vst [vmem:[#allocation3 + $0xe8] sm:$0xff] %v246
    %351 = vst [vmem:[#allocation3 + $0xf0] sm:$0xff] %v317
    %352 = vst [vmem:[#allocation3 + $0xf8] sm:$0xff] %v319
    %v353 = vld [vmem:[#allocation4] sm:$0xff]
    %v354 = vld [vmem:[#allocation4 + $0x8] sm:$0xff]
    %v355 = vld [vmem:[#allocation4 + $0x10] sm:$0xff]
    %v356 = vld [vmem:[#allocation4 + $0x18] sm:$0xff]
    %v357 = vld [vmem:[#allocation4 + $0x20] sm:$0xff]
    %v358 = vld [vmem:[#allocation4 + $0x28] sm:$0xff]
    %v359 = vld [vmem:[#allocation4 + $0x30] sm:$0xff]
    %v360 = vld [vmem:[#allocation4 + $0x38] sm:$0xff]
    %v361 = vld [vmem:[#allocation4 + $0x40] sm:$0xff]
    %v362 = vld [vmem:[#allocation4 + $0x48] sm:$0xff]
    %v363 = vld [vmem:[#allocation4 + $0x50] sm:$0xff]
    %v364 = vld [vmem:[#allocation4 + $0x58] sm:$0xff]
    %v365 = vld [vmem:[#allocation4 + $0x60] sm:$0xff]
    %v366 = vld [vmem:[#allocation4 + $0x68] sm:$0xff]
    %v367 = vld [vmem:[#allocation4 + $0x70] sm:$0xff]
    %v368 = vld [vmem:[#allocation4 + $0x78] sm:$0xff]
    %v369 = vld [vmem:[#allocation4 + $0x80] sm:$0xff]
    %v370 = vld [vmem:[#allocation4 + $0x88] sm:$0xff]
    %v371 = vld [vmem:[#allocation4 + $0x90] sm:$0xff]
    %v372 = vld [vmem:[#allocation4 + $0x98] sm:$0xff]
    %v373 = vld [vmem:[#allocation4 + $0xa0] sm:$0xff]
    %v374 = vld [vmem:[#allocation4 + $0xa8] sm:$0xff]
    %v375 = vld [vmem:[#allocation4 + $0xb0] sm:$0xff]
    %v376 = vld [vmem:[#allocation4 + $0xb8] sm:$0xff]
    %v377 = vld [vmem:[#allocation4 + $0xc0] sm:$0xff]
    %v378 = vld [vmem:[#allocation4 + $0xc8] sm:$0xff]
    %v379 = vld [vmem:[#allocation4 + $0xd0] sm:$0xff]
    %v380 = vld [vmem:[#allocation4 + $0xd8] sm:$0xff]
    %v381 = vld [vmem:[#allocation4 + $0xe0] sm:$0xff]
    %v382 = vld [vmem:[#allocation4 + $0xe8] sm:$0xff]
    %v383 = vld [vmem:[#allocation4 + $0xf0] sm:$0xff]
    %v384 = vld [vmem:[#allocation4 + $0xf8] sm:$0xff]
    %v385 = vld [vmem:[%s1] sm:$0xff]
    %v386 = vld [vmem:[%s2] sm:$0xff]
    %s387 = smul.u32 0, 4
    %s388 = smul.addr %s387, 8
    %s389 = scalar_lea.vmem [#allocation3], %s388
    %v390 = vld [vmem:[%s389] sm:$0xff]
    %v391 = vld [vmem:[%s389 + $0x8] sm:$0xff]
    %v392 = vld [vmem:[%s389 + $0x10] sm:$0xff]
    %v393 = vld [vmem:[%s389 + $0x18] sm:$0xff]
    %v394 = vpack.c.bf16 %v385, %v385
    %v427 = vunpack.c.l.b16 %v353
    %v428 = vunpack.c.h.b16 %v353
    %v429 = vunpack.c.l.b16 %v354
    %v430 = vunpack.c.h.b16 %v354
    %v431 = vunpack.c.l.b16 %v355
    %v432 = vunpack.c.h.b16 %v355
    %v433 = vunpack.c.l.b16 %v356
    %v434 = vunpack.c.h.b16 %v356
    %v435 = vunpack.c.l.b16 %v357
    %v436 = vunpack.c.h.b16 %v357
    %v437 = vunpack.c.l.b16 %v358
    %v438 = vunpack.c.h.b16 %v358
    %v439 = vunpack.c.l.b16 %v359
    %v440 = vunpack.c.h.b16 %v359
    %v441 = vunpack.c.l.b16 %v360
    %v442 = vunpack.c.h.b16 %v360
    %v443 = vunpack.c.l.b16 %v361
    %v444 = vunpack.c.h.b16 %v361
    %v445 = vunpack.c.l.b16 %v362
    %v446 = vunpack.c.h.b16 %v362
    %v447 = vunpack.c.l.b16 %v363
    %v448 = vunpack.c.h.b16 %v363
    %v449 = vunpack.c.l.b16 %v364
    %v450 = vunpack.c.h.b16 %v364
    %v451 = vunpack.c.l.b16 %v365
    %v452 = vunpack.c.h.b16 %v365
    %v453 = vunpack.c.l.b16 %v366
    %v454 = vunpack.c.h.b16 %v366
    %v455 = vunpack.c.l.b16 %v367
    %v456 = vunpack.c.h.b16 %v367
    %v457 = vunpack.c.l.b16 %v368
    %v458 = vunpack.c.h.b16 %v368
    %v459 = vunpack.c.l.b16 %v369
    %v460 = vunpack.c.h.b16 %v369
    %v461 = vunpack.c.l.b16 %v370
    %v462 = vunpack.c.h.b16 %v370
    %v463 = vunpack.c.l.b16 %v371
    %v464 = vunpack.c.h.b16 %v371
    %v465 = vunpack.c.l.b16 %v372
    %v466 = vunpack.c.h.b16 %v372
    %v467 = vunpack.c.l.b16 %v373
    %v468 = vunpack.c.h.b16 %v373
    %v469 = vunpack.c.l.b16 %v374
    %v470 = vunpack.c.h.b16 %v374
    %v471 = vunpack.c.l.b16 %v375
    %v472 = vunpack.c.h.b16 %v375
    %v473 = vunpack.c.l.b16 %v376
    %v474 = vunpack.c.h.b16 %v376
    %v475 = vunpack.c.l.b16 %v377
    %v476 = vunpack.c.h.b16 %v377
    %v477 = vunpack.c.l.b16 %v378
    %v478 = vunpack.c.h.b16 %v378
    %v479 = vunpack.c.l.b16 %v379
    %v480 = vunpack.c.h.b16 %v379
    %v481 = vunpack.c.l.b16 %v380
    %v482 = vunpack.c.h.b16 %v380
    %v483 = vunpack.c.l.b16 %v381
    %v484 = vunpack.c.h.b16 %v381
    %v485 = vunpack.c.l.b16 %v382
    %v486 = vunpack.c.h.b16 %v382
    %v487 = vunpack.c.l.b16 %v383
    %v488 = vunpack.c.h.b16 %v383
    %v489 = vunpack.c.l.b16 %v384
    %v490 = vunpack.c.h.b16 %v384
    %v491 = vpack.c.b16 %v431, %v427
    %v492 = vpack.c.b16 %v432, %v428
    %v493 = vpack.c.b16 %v433, %v429
    %v494 = vpack.c.b16 %v434, %v430
    %v495 = vpack.c.b16 %v439, %v435
    %v496 = vpack.c.b16 %v440, %v436
    %v497 = vpack.c.b16 %v441, %v437
    %v498 = vpack.c.b16 %v442, %v438
    %v499 = vpack.c.b16 %v447, %v443
    %v500 = vpack.c.b16 %v448, %v444
    %v501 = vpack.c.b16 %v449, %v445
    %v502 = vpack.c.b16 %v450, %v446
    %v503 = vpack.c.b16 %v455, %v451
    %v504 = vpack.c.b16 %v456, %v452
    %v505 = vpack.c.b16 %v457, %v453
    %v506 = vpack.c.b16 %v458, %v454
    %v507 = vpack.c.b16 %v463, %v459
    %v508 = vpack.c.b16 %v464, %v460
    %v509 = vpack.c.b16 %v465, %v461
    %v510 = vpack.c.b16 %v466, %v462
    %v511 = vpack.c.b16 %v471, %v467
    %v512 = vpack.c.b16 %v472, %v468
    %v513 = vpack.c.b16 %v473, %v469
    %v514 = vpack.c.b16 %v474, %v470
    %v515 = vpack.c.b16 %v479, %v475
    %v516 = vpack.c.b16 %v480, %v476
    %v517 = vpack.c.b16 %v481, %v477
    %v518 = vpack.c.b16 %v482, %v478
    %v519 = vpack.c.b16 %v487, %v483
    %v520 = vpack.c.b16 %v488, %v484
    %v521 = vpack.c.b16 %v489, %v485
    %v522 = vpack.c.b16 %v490, %v486
    %555 = vmatprep.subr.bf16.mxu0 %v520
    %556 = vmatpush1.bf16.msra.mxu0 %v519
    %557 = vmatprep.subr.bf16.mxu0 %v516
    %558 = vmatpush1.bf16.msra.mxu0 %v515
    %559 = vmatprep.subr.bf16.mxu0 %v512
    %560 = vmatpush1.bf16.msra.mxu0 %v511
    %561 = vmatprep.subr.bf16.mxu0 %v508
    %562 = vmatpush1.bf16.msra.mxu0 %v507
    %563 = vmatprep.subr.bf16.mxu0 %v504
    %564 = vmatpush1.bf16.msra.mxu0 %v503
    %565 = vmatprep.subr.bf16.mxu0 %v500
    %566 = vmatpush1.bf16.msra.mxu0 %v499
    %567 = vmatprep.subr.bf16.mxu0 %v496
    %568 = vmatpush1.bf16.msra.mxu0 %v495
    %569 = vmatprep.subr.bf16.mxu0 %v492
    %570 = vmatpush1.bf16.msra.mxu0 %v491
    %571 = vmatprep.subr.bf16.mxu0 0
    %572 = vmatpush2.bf16.msra.mxu0 0
    %573 = vmatprep.subr.bf16.mxu0 0
    %574 = vmatpush2.bf16.msra.mxu0 0
    %575 = vmatprep.subr.bf16.mxu0 0
    %576 = vmatpush2.bf16.msra.mxu0 0
    %577 = vmatprep.subr.bf16.mxu0 0
    %578 = vmatpush2.bf16.msra.mxu0 0
    %579 = vmatprep.subr.bf16.mxu0 0
    %580 = vmatpush2.bf16.msra.mxu0 0
    %581 = vmatprep.subr.bf16.mxu0 0
    %582 = vmatpush2.bf16.msra.mxu0 0
    %583 = vmatprep.subr.bf16.mxu0 0
    %584 = vmatpush2.bf16.msra.mxu0 0
    %585 = vmatprep.subr.bf16.mxu0 0
    %586 = vmatpush2.bf16.msra.mxu0 0
    %587 = vmatprep.mubr.bf16.mxu0 0
    %588 = vmatmul.mubr.bf16.gmra.mxu0 %v394
    %v589 = vpop.f32.mrf.mxu0
    %v590 = vadd.f32 0.0, %v589
    %v591 = vpop.f32.mrf.mxu0
    %v592 = vadd.f32 0.0, %v591
    %v593 = vpop.f32.mrf.mxu0
    %v594 = vpop.f32.mrf.mxu0
    %595 = vdwg.mxu0
    %596 = vmatprep.subr.bf16.mxu0 %v522
    %597 = vmatpush1.bf16.msra.mxu0 %v521
    %598 = vmatprep.subr.bf16.mxu0 %v518
    %599 = vmatpush1.bf16.msra.mxu0 %v517
    %600 = vmatprep.subr.bf16.mxu0 %v514
    %601 = vmatpush1.bf16.msra.mxu0 %v513
    %602 = vmatprep.subr.bf16.mxu0 %v510
    %603 = vmatpush1.bf16.msra.mxu0 %v509
    %604 = vmatprep.subr.bf16.mxu0 %v506
    %605 = vmatpush1.bf16.msra.mxu0 %v505
    %606 = vmatprep.subr.bf16.mxu0 %v502
    %607 = vmatpush1.bf16.msra.mxu0 %v501
    %608 = vmatprep.subr.bf16.mxu0 %v498
    %609 = vmatpush1.bf16.msra.mxu0 %v497
    %610 = vmatprep.subr.bf16.mxu0 %v494
    %611 = vmatpush1.bf16.msra.mxu0 %v493
    %612 = vmatprep.subr.bf16.mxu0 0
    %613 = vmatpush2.bf16.msra.mxu0 0
    %614 = vmatprep.subr.bf16.mxu0 0
    %615 = vmatpush2.bf16.msra.mxu0 0
    %616 = vmatprep.subr.bf16.mxu0 0
    %617 = vmatpush2.bf16.msra.mxu0 0
    %618 = vmatprep.subr.bf16.mxu0 0
    %619 = vmatpush2.bf16.msra.mxu0 0
    %620 = vmatprep.subr.bf16.mxu0 0
    %621 = vmatpush2.bf16.msra.mxu0 0
    %622 = vmatprep.subr.bf16.mxu0 0
    %623 = vmatpush2.bf16.msra.mxu0 0
    %624 = vmatprep.subr.bf16.mxu0 0
    %625 = vmatpush2.bf16.msra.mxu0 0
    %626 = vmatprep.subr.bf16.mxu0 0
    %627 = vmatpush2.bf16.msra.mxu0 0
    %628 = vmatprep.mubr.bf16.mxu0 0
    %629 = vmatmul.mubr.bf16.gmra.mxu0 %v394
    %v630 = vpop.f32.mrf.mxu0
    %v631 = vadd.f32 0.0, %v630
    %v632 = vpop.f32.mrf.mxu0
    %v633 = vadd.f32 0.0, %v632
    %v634 = vpop.f32.mrf.mxu0
    %v635 = vpop.f32.mrf.mxu0
    %636 = vdwg.mxu0
    %v637 = vadd.f32 %v390, %v590
    %v638 = vadd.f32 %v391, %v592
    %v639 = vadd.f32 %v392, %v631
    %v640 = vadd.f32 %v393, %v633
    %v641 = vxor.u32 %v637, 2147483648
    %v642 = vxor.u32 %v638, 2147483648
    %v643 = vxor.u32 %v639, 2147483648
    %v644 = vmul.f32 %v641, 1.442695
    %v645 = vpow.pop %v644
    %v646 = vmul.f32 %v642, 1.442695
    %v647 = vpow.pop %v646
    %v648 = vmul.f32 %v643, 1.442695
    %v649 = vpow.pop %v648
    %v650 = vadd.f32 %v645, 1.0
    %v651 = vadd.f32 %v647, 1.0
    %v652 = vadd.f32 %v649, 1.0
    %v653 = vrcp.pop %v650
    %v654 = vmul.f32 1.0, %v653
    %v655 = vrcp.pop %v651
    %v656 = vmul.f32 1.0, %v655
    %v657 = vrcp.pop %v652
    %v658 = vmul.f32 1.0, %v657
    %v659 = vtanh.pop %v640
    %v660 = vmul.f32 %v656, %v386
    %v661 = vmul.f32 %v654, %v659
    %v662 = vadd.f32 %v660, %v661
    %v663 = vtanh.pop %v662
    %v664 = vmul.f32 %v658, %v663
    %v665 = vpack.c.bf16 %v664, %v664
    %666 = vst [vmem:[#allocation2] sm:$0xf] %v665
    %s667 = smul.u32 1, 4
    %s668 = smul.addr %s667, 8
    %s669 = scalar_lea.vmem [#allocation3], %s668
    %v670 = vld [vmem:[%s669] sm:$0xff]
    %v671 = vld [vmem:[%s669 + $0x8] sm:$0xff]
    %v672 = vld [vmem:[%s669 + $0x10] sm:$0xff]
    %v673 = vld [vmem:[%s669 + $0x18] sm:$0xff]
    %674 = vmatprep.subr.bf16.mxu0 %v520
    %675 = vmatpush1.bf16.msra.mxu0 %v519
    %676 = vmatprep.subr.bf16.mxu0 %v516
    %677 = vmatpush1.bf16.msra.mxu0 %v515
    %678 = vmatprep.subr.bf16.mxu0 %v512
    %679 = vmatpush1.bf16.msra.mxu0 %v511
    %680 = vmatprep.subr.bf16.mxu0 %v508
    %681 = vmatpush1.bf16.msra.mxu0 %v507
    %682 = vmatprep.subr.bf16.mxu0 %v504
    %683 = vmatpush1.bf16.msra.mxu0 %v503
    %684 = vmatprep.subr.bf16.mxu0 %v500
    %685 = vmatpush1.bf16.msra.mxu0 %v499
    %686 = vmatprep.subr.bf16.mxu0 %v496
    %687 = vmatpush1.bf16.msra.mxu0 %v495
    %688 = vmatprep.subr.bf16.mxu0 %v492
    %689 = vmatpush1.bf16.msra.mxu0 %v491
    %690 = vmatprep.subr.bf16.mxu0 0
    %691 = vmatpush2.bf16.msra.mxu0 0
    %692 = vmatprep.subr.bf16.mxu0 0
    %693 = vmatpush2.bf16.msra.mxu0 0
    %694 = vmatprep.subr.bf16.mxu0 0
    %695 = vmatpush2.bf16.msra.mxu0 0
    %696 = vmatprep.subr.bf16.mxu0 0
    %697 = vmatpush2.bf16.msra.mxu0 0
    %698 = vmatprep.subr.bf16.mxu0 0
    %699 = vmatpush2.bf16.msra.mxu0 0
    %700 = vmatprep.subr.bf16.mxu0 0
    %701 = vmatpush2.bf16.msra.mxu0 0
    %702 = vmatprep.subr.bf16.mxu0 0
    %703 = vmatpush2.bf16.msra.mxu0 0
    %704 = vmatprep.subr.bf16.mxu0 0
    %705 = vmatpush2.bf16.msra.mxu0 0
    %706 = vmatprep.mubr.bf16.mxu0 0
    %707 = vmatmul.mubr.bf16.gmra.mxu0 %v665
    %v708 = vpop.f32.mrf.mxu0
    %v709 = vadd.f32 0.0, %v708
    %v710 = vpop.f32.mrf.mxu0
    %v711 = vadd.f32 0.0, %v710
    %v712 = vpop.f32.mrf.mxu0
    %v713 = vpop.f32.mrf.mxu0
    %714 = vdwg.mxu0
    %715 = vmatprep.subr.bf16.mxu0 %v522
    %716 = vmatpush1.bf16.msra.mxu0 %v521
    %717 = vmatprep.subr.bf16.mxu0 %v518
    %718 = vmatpush1.bf16.msra.mxu0 %v517
    %719 = vmatprep.subr.bf16.mxu0 %v514
    %720 = vmatpush1.bf16.msra.mxu0 %v513
    %721 = vmatprep.subr.bf16.mxu0 %v510
    %722 = vmatpush1.bf16.msra.mxu0 %v509
    %723 = vmatprep.subr.bf16.mxu0 %v506
    %724 = vmatpush1.bf16.msra.mxu0 %v505
    %725 = vmatprep.subr.bf16.mxu0 %v502
    %726 = vmatpush1.bf16.msra.mxu0 %v501
    %727 = vmatprep.subr.bf16.mxu0 %v498
    %728 = vmatpush1.bf16.msra.mxu0 %v497
    %729 = vmatprep.subr.bf16.mxu0 %v494
    %730 = vmatpush1.bf16.msra.mxu0 %v493
    %731 = vmatprep.subr.bf16.mxu0 0
    %732 = vmatpush2.bf16.msra.mxu0 0
    %733 = vmatprep.subr.bf16.mxu0 0
    %734 = vmatpush2.bf16.msra.mxu0 0
    %735 = vmatprep.subr.bf16.mxu0 0
    %736 = vmatpush2.bf16.msra.mxu0 0
    %737 = vmatprep.subr.bf16.mxu0 0
    %738 = vmatpush2.bf16.msra.mxu0 0
    %739 = vmatprep.subr.bf16.mxu0 0
    %740 = vmatpush2.bf16.msra.mxu0 0
    %741 = vmatprep.subr.bf16.mxu0 0
    %742 = vmatpush2.bf16.msra.mxu0 0
    %743 = vmatprep.subr.bf16.mxu0 0
    %744 = vmatpush2.bf16.msra.mxu0 0
    %745 = vmatprep.subr.bf16.mxu0 0
    %746 = vmatpush2.bf16.msra.mxu0 0
    %747 = vmatprep.mubr.bf16.mxu0 0
    %748 = vmatmul.mubr.bf16.gmra.mxu0 %v665
    %v749 = vpop.f32.mrf.mxu0
    %v750 = vadd.f32 0.0, %v749
    %v751 = vpop.f32.mrf.mxu0
    %v752 = vadd.f32 0.0, %v751
    %v753 = vpop.f32.mrf.mxu0
    %v754 = vpop.f32.mrf.mxu0
    %755 = vdwg.mxu0
    %v756 = vadd.f32 %v670, %v709
    %v757 = vadd.f32 %v671, %v711
    %v758 = vadd.f32 %v672, %v750
    %v759 = vadd.f32 %v673, %v752
    %v760 = vxor.u32 %v756, 2147483648
    %v761 = vxor.u32 %v757, 2147483648
    %v762 = vxor.u32 %v758, 2147483648
    %v763 = vmul.f32 %v760, 1.442695
    %v764 = vpow.pop %v763
    %v765 = vmul.f32 %v761, 1.442695
    %v766 = vpow.pop %v765
    %v767 = vmul.f32 %v762, 1.442695
    %v768 = vpow.pop %v767
    %v769 = vadd.f32 %v764, 1.0
    %v770 = vadd.f32 %v766, 1.0
    %v771 = vadd.f32 %v768, 1.0
    %v772 = vrcp.pop %v769
    %v773 = vmul.f32 1.0, %v772
    %v774 = vrcp.pop %v770
    %v775 = vmul.f32 1.0, %v774
    %v776 = vrcp.pop %v771
    %v777 = vmul.f32 1.0, %v776
    %v778 = vtanh.pop %v759
    %v779 = vmul.f32 %v775, %v662
    %v780 = vmul.f32 %v773, %v778
    %v781 = vadd.f32 %v779, %v780
    %v782 = vtanh.pop %v781
    %v783 = vmul.f32 %v777, %v782
    %v784 = vpack.c.bf16 %v783, %v783
    %s785 = scalar_lea.vmem [#allocation2], 4
    %786 = vst [vmem:[%s785] sm:$0xf] %v784
    %s787 = smul.u32 2, 4
    %s788 = smul.addr %s787, 8
    %s789 = scalar_lea.vmem [#allocation3], %s788
    %v790 = vld [vmem:[%s789] sm:$0xff]
    %v791 = vld [vmem:[%s789 + $0x8] sm:$0xff]
    %v792 = vld [vmem:[%s789 + $0x10] sm:$0xff]
    %v793 = vld [vmem:[%s789 + $0x18] sm:$0xff]
    %794 = vmatprep.subr.bf16.mxu0 %v520
    %795 = vmatpush1.bf16.msra.mxu0 %v519
    %796 = vmatprep.subr.bf16.mxu0 %v516
    %797 = vmatpush1.bf16.msra.mxu0 %v515
    %798 = vmatprep.subr.bf16.mxu0 %v512
    %799 = vmatpush1.bf16.msra.mxu0 %v511
    %800 = vmatprep.subr.bf16.mxu0 %v508
    %801 = vmatpush1.bf16.msra.mxu0 %v507
    %802 = vmatprep.subr.bf16.mxu0 %v504
    %803 = vmatpush1.bf16.msra.mxu0 %v503
    %804 = vmatprep.subr.bf16.mxu0 %v500
    %805 = vmatpush1.bf16.msra.mxu0 %v499
    %806 = vmatprep.subr.bf16.mxu0 %v496
    %807 = vmatpush1.bf16.msra.mxu0 %v495
    %808 = vmatprep.subr.bf16.mxu0 %v492
    %809 = vmatpush1.bf16.msra.mxu0 %v491
    %810 = vmatprep.subr.bf16.mxu0 0
    %811 = vmatpush2.bf16.msra.mxu0 0
    %812 = vmatprep.subr.bf16.mxu0 0
    %813 = vmatpush2.bf16.msra.mxu0 0
    %814 = vmatprep.subr.bf16.mxu0 0
    %815 = vmatpush2.bf16.msra.mxu0 0
    %816 = vmatprep.subr.bf16.mxu0 0
    %817 = vmatpush2.bf16.msra.mxu0 0
    %818 = vmatprep.subr.bf16.mxu0 0
    %819 = vmatpush2.bf16.msra.mxu0 0
    %820 = vmatprep.subr.bf16.mxu0 0
    %821 = vmatpush2.bf16.msra.mxu0 0
    %822 = vmatprep.subr.bf16.mxu0 0
    %823 = vmatpush2.bf16.msra.mxu0 0
    %824 = vmatprep.subr.bf16.mxu0 0
    %825 = vmatpush2.bf16.msra.mxu0 0
    %826 = vmatprep.mubr.bf16.mxu0 0
    %827 = vmatmul.mubr.bf16.gmra.mxu0 %v784
    %v828 = vpop.f32.mrf.mxu0
    %v829 = vadd.f32 0.0, %v828
    %v830 = vpop.f32.mrf.mxu0
    %v831 = vadd.f32 0.0, %v830
    %v832 = vpop.f32.mrf.mxu0
    %v833 = vpop.f32.mrf.mxu0
    %834 = vdwg.mxu0
    %835 = vmatprep.subr.bf16.mxu0 %v522
    %836 = vmatpush1.bf16.msra.mxu0 %v521
    %837 = vmatprep.subr.bf16.mxu0 %v518
    %838 = vmatpush1.bf16.msra.mxu0 %v517
    %839 = vmatprep.subr.bf16.mxu0 %v514
    %840 = vmatpush1.bf16.msra.mxu0 %v513
    %841 = vmatprep.subr.bf16.mxu0 %v510
    %842 = vmatpush1.bf16.msra.mxu0 %v509
    %843 = vmatprep.subr.bf16.mxu0 %v506
    %844 = vmatpush1.bf16.msra.mxu0 %v505
    %845 = vmatprep.subr.bf16.mxu0 %v502
    %846 = vmatpush1.bf16.msra.mxu0 %v501
    %847 = vmatprep.subr.bf16.mxu0 %v498
    %848 = vmatpush1.bf16.msra.mxu0 %v497
    %849 = vmatprep.subr.bf16.mxu0 %v494
    %850 = vmatpush1.bf16.msra.mxu0 %v493
    %851 = vmatprep.subr.bf16.mxu0 0
    %852 = vmatpush2.bf16.msra.mxu0 0
    %853 = vmatprep.subr.bf16.mxu0 0
    %854 = vmatpush2.bf16.msra.mxu0 0
    %855 = vmatprep.subr.bf16.mxu0 0
    %856 = vmatpush2.bf16.msra.mxu0 0
    %857 = vmatprep.subr.bf16.mxu0 0
    %858 = vmatpush2.bf16.msra.mxu0 0
    %859 = vmatprep.subr.bf16.mxu0 0
    %860 = vmatpush2.bf16.msra.mxu0 0
    %861 = vmatprep.subr.bf16.mxu0 0
    %862 = vmatpush2.bf16.msra.mxu0 0
    %863 = vmatprep.subr.bf16.mxu0 0
    %864 = vmatpush2.bf16.msra.mxu0 0
    %865 = vmatprep.subr.bf16.mxu0 0
    %866 = vmatpush2.bf16.msra.mxu0 0
    %867 = vmatprep.mubr.bf16.mxu0 0
    %868 = vmatmul.mubr.bf16.gmra.mxu0 %v784
    %v869 = vpop.f32.mrf.mxu0
    %v870 = vadd.f32 0.0, %v869
    %v871 = vpop.f32.mrf.mxu0
    %v872 = vadd.f32 0.0, %v871
    %v873 = vpop.f32.mrf.mxu0
    %v874 = vpop.f32.mrf.mxu0
    %875 = vdwg.mxu0
    %v876 = vadd.f32 %v790, %v829
    %v877 = vadd.f32 %v791, %v831
    %v878 = vadd.f32 %v792, %v870
    %v879 = vadd.f32 %v793, %v872
    %v880 = vxor.u32 %v876, 2147483648
    %v881 = vxor.u32 %v877, 2147483648
    %v882 = vxor.u32 %v878, 2147483648
    %v883 = vmul.f32 %v880, 1.442695
    %v884 = vpow.pop %v883
    %v885 = vmul.f32 %v881, 1.442695
    %v886 = vpow.pop %v885
    %v887 = vmul.f32 %v882, 1.442695
    %v888 = vpow.pop %v887
    %v889 = vadd.f32 %v884, 1.0
    %v890 = vadd.f32 %v886, 1.0
    %v891 = vadd.f32 %v888, 1.0
    %v892 = vrcp.pop %v889
    %v893 = vmul.f32 1.0, %v892
    %v894 = vrcp.pop %v890
    %v895 = vmul.f32 1.0, %v894
    %v896 = vrcp.pop %v891
    %v897 = vmul.f32 1.0, %v896
    %v898 = vtanh.pop %v879
    %v899 = vmul.f32 %v895, %v781
    %v900 = vmul.f32 %v893, %v898
    %v901 = vadd.f32 %v899, %v900
    %v902 = vtanh.pop %v901
    %v903 = vmul.f32 %v897, %v902
    %v904 = vpack.c.bf16 %v903, %v903
    %s905 = scalar_lea.vmem [#allocation2], 8
    %906 = vst [vmem:[%s905] sm:$0xf] %v904
    %s907 = smul.u32 3, 4
    %s908 = smul.addr %s907, 8
    %s909 = scalar_lea.vmem [#allocation3], %s908
    %v910 = vld [vmem:[%s909] sm:$0xff]
    %v911 = vld [vmem:[%s909 + $0x8] sm:$0xff]
    %v912 = vld [vmem:[%s909 + $0x10] sm:$0xff]
    %v913 = vld [vmem:[%s909 + $0x18] sm:$0xff]
    %914 = vmatprep.subr.bf16.mxu0 %v520
    %915 = vmatpush1.bf16.msra.mxu0 %v519
    %916 = vmatprep.subr.bf16.mxu0 %v516
    %917 = vmatpush1.bf16.msra.mxu0 %v515
    %918 = vmatprep.subr.bf16.mxu0 %v512
    %919 = vmatpush1.bf16.msra.mxu0 %v511
    %920 = vmatprep.subr.bf16.mxu0 %v508
    %921 = vmatpush1.bf16.msra.mxu0 %v507
    %922 = vmatprep.subr.bf16.mxu0 %v504
    %923 = vmatpush1.bf16.msra.mxu0 %v503
    %924 = vmatprep.subr.bf16.mxu0 %v500
    %925 = vmatpush1.bf16.msra.mxu0 %v499
    %926 = vmatprep.subr.bf16.mxu0 %v496
    %927 = vmatpush1.bf16.msra.mxu0 %v495
    %928 = vmatprep.subr.bf16.mxu0 %v492
    %929 = vmatpush1.bf16.msra.mxu0 %v491
    %930 = vmatprep.subr.bf16.mxu0 0
    %931 = vmatpush2.bf16.msra.mxu0 0
    %932 = vmatprep.subr.bf16.mxu0 0
    %933 = vmatpush2.bf16.msra.mxu0 0
    %934 = vmatprep.subr.bf16.mxu0 0
    %935 = vmatpush2.bf16.msra.mxu0 0
    %936 = vmatprep.subr.bf16.mxu0 0
    %937 = vmatpush2.bf16.msra.mxu0 0
    %938 = vmatprep.subr.bf16.mxu0 0
    %939 = vmatpush2.bf16.msra.mxu0 0
    %940 = vmatprep.subr.bf16.mxu0 0
    %941 = vmatpush2.bf16.msra.mxu0 0
    %942 = vmatprep.subr.bf16.mxu0 0
    %943 = vmatpush2.bf16.msra.mxu0 0
    %944 = vmatprep.subr.bf16.mxu0 0
    %945 = vmatpush2.bf16.msra.mxu0 0
    %946 = vmatprep.mubr.bf16.mxu0 0
    %947 = vmatmul.mubr.bf16.gmra.mxu0 %v904
    %v948 = vpop.f32.mrf.mxu0
    %v949 = vadd.f32 0.0, %v948
    %v950 = vpop.f32.mrf.mxu0
    %v951 = vadd.f32 0.0, %v950
    %v952 = vpop.f32.mrf.mxu0
    %v953 = vpop.f32.mrf.mxu0
    %954 = vdwg.mxu0
    %955 = vmatprep.subr.bf16.mxu0 %v522
    %956 = vmatpush1.bf16.msra.mxu0 %v521
    %957 = vmatprep.subr.bf16.mxu0 %v518
    %958 = vmatpush1.bf16.msra.mxu0 %v517
    %959 = vmatprep.subr.bf16.mxu0 %v514
    %960 = vmatpush1.bf16.msra.mxu0 %v513
    %961 = vmatprep.subr.bf16.mxu0 %v510
    %962 = vmatpush1.bf16.msra.mxu0 %v509
    %963 = vmatprep.subr.bf16.mxu0 %v506
    %964 = vmatpush1.bf16.msra.mxu0 %v505
    %965 = vmatprep.subr.bf16.mxu0 %v502
    %966 = vmatpush1.bf16.msra.mxu0 %v501
    %967 = vmatprep.subr.bf16.mxu0 %v498
    %968 = vmatpush1.bf16.msra.mxu0 %v497
    %969 = vmatprep.subr.bf16.mxu0 %v494
    %970 = vmatpush1.bf16.msra.mxu0 %v493
    %971 = vmatprep.subr.bf16.mxu0 0
    %972 = vmatpush2.bf16.msra.mxu0 0
    %973 = vmatprep.subr.bf16.mxu0 0
    %974 = vmatpush2.bf16.msra.mxu0 0
    %975 = vmatprep.subr.bf16.mxu0 0
    %976 = vmatpush2.bf16.msra.mxu0 0
    %977 = vmatprep.subr.bf16.mxu0 0
    %978 = vmatpush2.bf16.msra.mxu0 0
    %979 = vmatprep.subr.bf16.mxu0 0
    %980 = vmatpush2.bf16.msra.mxu0 0
    %981 = vmatprep.subr.bf16.mxu0 0
    %982 = vmatpush2.bf16.msra.mxu0 0
    %983 = vmatprep.subr.bf16.mxu0 0
    %984 = vmatpush2.bf16.msra.mxu0 0
    %985 = vmatprep.subr.bf16.mxu0 0
    %986 = vmatpush2.bf16.msra.mxu0 0
    %987 = vmatprep.mubr.bf16.mxu0 0
    %988 = vmatmul.mubr.bf16.gmra.mxu0 %v904
    %v989 = vpop.f32.mrf.mxu0
    %v990 = vadd.f32 0.0, %v989
    %v991 = vpop.f32.mrf.mxu0
    %v992 = vadd.f32 0.0, %v991
    %v993 = vpop.f32.mrf.mxu0
    %v994 = vpop.f32.mrf.mxu0
    %995 = vdwg.mxu0
    %v996 = vadd.f32 %v910, %v949
    %v997 = vadd.f32 %v911, %v951
    %v998 = vadd.f32 %v912, %v990
    %v999 = vadd.f32 %v913, %v992
    %v1000 = vxor.u32 %v996, 2147483648
    %v1001 = vxor.u32 %v997, 2147483648
    %v1002 = vxor.u32 %v998, 2147483648
    %v1003 = vmul.f32 %v1000, 1.442695
    %v1004 = vpow.pop %v1003
    %v1005 = vmul.f32 %v1001, 1.442695
    %v1006 = vpow.pop %v1005
    %v1007 = vmul.f32 %v1002, 1.442695
    %v1008 = vpow.pop %v1007
    %v1009 = vadd.f32 %v1004, 1.0
    %v1010 = vadd.f32 %v1006, 1.0
    %v1011 = vadd.f32 %v1008, 1.0
    %v1012 = vrcp.pop %v1009
    %v1013 = vmul.f32 1.0, %v1012
    %v1014 = vrcp.pop %v1010
    %v1015 = vmul.f32 1.0, %v1014
    %v1016 = vrcp.pop %v1011
    %v1017 = vmul.f32 1.0, %v1016
    %v1018 = vtanh.pop %v999
    %v1019 = vmul.f32 %v1015, %v901
    %v1020 = vmul.f32 %v1013, %v1018
    %v1021 = vadd.f32 %v1019, %v1020
    %v1022 = vtanh.pop %v1021
    %v1023 = vmul.f32 %v1017, %v1022
    %v1024 = vpack.c.bf16 %v1023, %v1023
    %s1025 = scalar_lea.vmem [#allocation2], 12
    %1026 = vst [vmem:[%s1025] sm:$0xf] %v1024
    %s1027 = smul.u32 4, 4
    %s1028 = smul.addr %s1027, 8
    %s1029 = scalar_lea.vmem [#allocation3], %s1028
    %v1030 = vld [vmem:[%s1029] sm:$0xff]
    %v1031 = vld [vmem:[%s1029 + $0x8] sm:$0xff]
    %v1032 = vld [vmem:[%s1029 + $0x10] sm:$0xff]
    %v1033 = vld [vmem:[%s1029 + $0x18] sm:$0xff]
    %1034 = vmatprep.subr.bf16.mxu0 %v520
    %1035 = vmatpush1.bf16.msra.mxu0 %v519
    %1036 = vmatprep.subr.bf16.mxu0 %v516
    %1037 = vmatpush1.bf16.msra.mxu0 %v515
    %1038 = vmatprep.subr.bf16.mxu0 %v512
    %1039 = vmatpush1.bf16.msra.mxu0 %v511
    %1040 = vmatprep.subr.bf16.mxu0 %v508
    %1041 = vmatpush1.bf16.msra.mxu0 %v507
    %1042 = vmatprep.subr.bf16.mxu0 %v504
    %1043 = vmatpush1.bf16.msra.mxu0 %v503
    %1044 = vmatprep.subr.bf16.mxu0 %v500
    %1045 = vmatpush1.bf16.msra.mxu0 %v499
    %1046 = vmatprep.subr.bf16.mxu0 %v496
    %1047 = vmatpush1.bf16.msra.mxu0 %v495
    %1048 = vmatprep.subr.bf16.mxu0 %v492
    %1049 = vmatpush1.bf16.msra.mxu0 %v491
    %1050 = vmatprep.subr.bf16.mxu0 0
    %1051 = vmatpush2.bf16.msra.mxu0 0
    %1052 = vmatprep.subr.bf16.mxu0 0
    %1053 = vmatpush2.bf16.msra.mxu0 0
    %1054 = vmatprep.subr.bf16.mxu0 0
    %1055 = vmatpush2.bf16.msra.mxu0 0
    %1056 = vmatprep.subr.bf16.mxu0 0
    %1057 = vmatpush2.bf16.msra.mxu0 0
    %1058 = vmatprep.subr.bf16.mxu0 0
    %1059 = vmatpush2.bf16.msra.mxu0 0
    %1060 = vmatprep.subr.bf16.mxu0 0
    %1061 = vmatpush2.bf16.msra.mxu0 0
    %1062 = vmatprep.subr.bf16.mxu0 0
    %1063 = vmatpush2.bf16.msra.mxu0 0
    %1064 = vmatprep.subr.bf16.mxu0 0
    %1065 = vmatpush2.bf16.msra.mxu0 0
    %1066 = vmatprep.mubr.bf16.mxu0 0
    %1067 = vmatmul.mubr.bf16.gmra.mxu0 %v1024
    %v1068 = vpop.f32.mrf.mxu0
    %v1069 = vadd.f32 0.0, %v1068
    %v1070 = vpop.f32.mrf.mxu0
    %v1071 = vadd.f32 0.0, %v1070
    %v1072 = vpop.f32.mrf.mxu0
    %v1073 = vpop.f32.mrf.mxu0
    %1074 = vdwg.mxu0
    %1075 = vmatprep.subr.bf16.mxu0 %v522
    %1076 = vmatpush1.bf16.msra.mxu0 %v521
    %1077 = vmatprep.subr.bf16.mxu0 %v518
    %1078 = vmatpush1.bf16.msra.mxu0 %v517
    %1079 = vmatprep.subr.bf16.mxu0 %v514
    %1080 = vmatpush1.bf16.msra.mxu0 %v513
    %1081 = vmatprep.subr.bf16.mxu0 %v510
    %1082 = vmatpush1.bf16.msra.mxu0 %v509
    %1083 = vmatprep.subr.bf16.mxu0 %v506
    %1084 = vmatpush1.bf16.msra.mxu0 %v505
    %1085 = vmatprep.subr.bf16.mxu0 %v502
    %1086 = vmatpush1.bf16.msra.mxu0 %v501
    %1087 = vmatprep.subr.bf16.mxu0 %v498
    %1088 = vmatpush1.bf16.msra.mxu0 %v497
    %1089 = vmatprep.subr.bf16.mxu0 %v494
    %1090 = vmatpush1.bf16.msra.mxu0 %v493
    %1091 = vmatprep.subr.bf16.mxu0 0
    %1092 = vmatpush2.bf16.msra.mxu0 0
    %1093 = vmatprep.subr.bf16.mxu0 0
    %1094 = vmatpush2.bf16.msra.mxu0 0
    %1095 = vmatprep.subr.bf16.mxu0 0
    %1096 = vmatpush2.bf16.msra.mxu0 0
    %1097 = vmatprep.subr.bf16.mxu0 0
    %1098 = vmatpush2.bf16.msra.mxu0 0
    %1099 = vmatprep.subr.bf16.mxu0 0
    %1100 = vmatpush2.bf16.msra.mxu0 0
    %1101 = vmatprep.subr.bf16.mxu0 0
    %1102 = vmatpush2.bf16.msra.mxu0 0
    %1103 = vmatprep.subr.bf16.mxu0 0
    %1104 = vmatpush2.bf16.msra.mxu0 0
    %1105 = vmatprep.subr.bf16.mxu0 0
    %1106 = vmatpush2.bf16.msra.mxu0 0
    %1107 = vmatprep.mubr.bf16.mxu0 0
    %1108 = vmatmul.mubr.bf16.gmra.mxu0 %v1024
    %v1109 = vpop.f32.mrf.mxu0
    %v1110 = vadd.f32 0.0, %v1109
    %v1111 = vpop.f32.mrf.mxu0
    %v1112 = vadd.f32 0.0, %v1111
    %v1113 = vpop.f32.mrf.mxu0
    %v1114 = vpop.f32.mrf.mxu0
    %1115 = vdwg.mxu0
    %v1116 = vadd.f32 %v1030, %v1069
    %v1117 = vadd.f32 %v1031, %v1071
    %v1118 = vadd.f32 %v1032, %v1110
    %v1119 = vadd.f32 %v1033, %v1112
    %v1120 = vxor.u32 %v1116, 2147483648
    %v1121 = vxor.u32 %v1117, 2147483648
    %v1122 = vxor.u32 %v1118, 2147483648
    %v1123 = vmul.f32 %v1120, 1.442695
    %v1124 = vpow.pop %v1123
    %v1125 = vmul.f32 %v1121, 1.442695
    %v1126 = vpow.pop %v1125
    %v1127 = vmul.f32 %v1122, 1.442695
    %v1128 = vpow.pop %v1127
    %v1129 = vadd.f32 %v1124, 1.0
    %v1130 = vadd.f32 %v1126, 1.0
    %v1131 = vadd.f32 %v1128, 1.0
    %v1132 = vrcp.pop %v1129
    %v1133 = vmul.f32 1.0, %v1132
    %v1134 = vrcp.pop %v1130
    %v1135 = vmul.f32 1.0, %v1134
    %v1136 = vrcp.pop %v1131
    %v1137 = vmul.f32 1.0, %v1136
    %v1138 = vtanh.pop %v1119
    %v1139 = vmul.f32 %v1135, %v1021
    %v1140 = vmul.f32 %v1133, %v1138
    %v1141 = vadd.f32 %v1139, %v1140
    %v1142 = vtanh.pop %v1141
    %v1143 = vmul.f32 %v1137, %v1142
    %v1144 = vpack.c.bf16 %v1143, %v1143
    %s1145 = scalar_lea.vmem [#allocation2], 16
    %1146 = vst [vmem:[%s1145] sm:$0xf] %v1144
    %s1147 = smul.u32 5, 4
    %s1148 = smul.addr %s1147, 8
    %s1149 = scalar_lea.vmem [#allocation3], %s1148
    %v1150 = vld [vmem:[%s1149] sm:$0xff]
    %v1151 = vld [vmem:[%s1149 + $0x8] sm:$0xff]
    %v1152 = vld [vmem:[%s1149 + $0x10] sm:$0xff]
    %v1153 = vld [vmem:[%s1149 + $0x18] sm:$0xff]
    %1154 = vmatprep.subr.bf16.mxu0 %v520
    %1155 = vmatpush1.bf16.msra.mxu0 %v519
    %1156 = vmatprep.subr.bf16.mxu0 %v516
    %1157 = vmatpush1.bf16.msra.mxu0 %v515
    %1158 = vmatprep.subr.bf16.mxu0 %v512
    %1159 = vmatpush1.bf16.msra.mxu0 %v511
    %1160 = vmatprep.subr.bf16.mxu0 %v508
    %1161 = vmatpush1.bf16.msra.mxu0 %v507
    %1162 = vmatprep.subr.bf16.mxu0 %v504
    %1163 = vmatpush1.bf16.msra.mxu0 %v503
    %1164 = vmatprep.subr.bf16.mxu0 %v500
    %1165 = vmatpush1.bf16.msra.mxu0 %v499
    %1166 = vmatprep.subr.bf16.mxu0 %v496
    %1167 = vmatpush1.bf16.msra.mxu0 %v495
    %1168 = vmatprep.subr.bf16.mxu0 %v492
    %1169 = vmatpush1.bf16.msra.mxu0 %v491
    %1170 = vmatprep.subr.bf16.mxu0 0
    %1171 = vmatpush2.bf16.msra.mxu0 0
    %1172 = vmatprep.subr.bf16.mxu0 0
    %1173 = vmatpush2.bf16.msra.mxu0 0
    %1174 = vmatprep.subr.bf16.mxu0 0
    %1175 = vmatpush2.bf16.msra.mxu0 0
    %1176 = vmatprep.subr.bf16.mxu0 0
    %1177 = vmatpush2.bf16.msra.mxu0 0
    %1178 = vmatprep.subr.bf16.mxu0 0
    %1179 = vmatpush2.bf16.msra.mxu0 0
    %1180 = vmatprep.subr.bf16.mxu0 0
    %1181 = vmatpush2.bf16.msra.mxu0 0
    %1182 = vmatprep.subr.bf16.mxu0 0
    %1183 = vmatpush2.bf16.msra.mxu0 0
    %1184 = vmatprep.subr.bf16.mxu0 0
    %1185 = vmatpush2.bf16.msra.mxu0 0
    %1186 = vmatprep.mubr.bf16.mxu0 0
    %1187 = vmatmul.mubr.bf16.gmra.mxu0 %v1144
    %v1188 = vpop.f32.mrf.mxu0
    %v1189 = vadd.f32 0.0, %v1188
    %v1190 = vpop.f32.mrf.mxu0
    %v1191 = vadd.f32 0.0, %v1190
    %v1192 = vpop.f32.mrf.mxu0
    %v1193 = vpop.f32.mrf.mxu0
    %1194 = vdwg.mxu0
    %1195 = vmatprep.subr.bf16.mxu0 %v522
    %1196 = vmatpush1.bf16.msra.mxu0 %v521
    %1197 = vmatprep.subr.bf16.mxu0 %v518
    %1198 = vmatpush1.bf16.msra.mxu0 %v517
    %1199 = vmatprep.subr.bf16.mxu0 %v514
    %1200 = vmatpush1.bf16.msra.mxu0 %v513
    %1201 = vmatprep.subr.bf16.mxu0 %v510
    %1202 = vmatpush1.bf16.msra.mxu0 %v509
    %1203 = vmatprep.subr.bf16.mxu0 %v506
    %1204 = vmatpush1.bf16.msra.mxu0 %v505
    %1205 = vmatprep.subr.bf16.mxu0 %v502
    %1206 = vmatpush1.bf16.msra.mxu0 %v501
    %1207 = vmatprep.subr.bf16.mxu0 %v498
    %1208 = vmatpush1.bf16.msra.mxu0 %v497
    %1209 = vmatprep.subr.bf16.mxu0 %v494
    %1210 = vmatpush1.bf16.msra.mxu0 %v493
    %1211 = vmatprep.subr.bf16.mxu0 0
    %1212 = vmatpush2.bf16.msra.mxu0 0
    %1213 = vmatprep.subr.bf16.mxu0 0
    %1214 = vmatpush2.bf16.msra.mxu0 0
    %1215 = vmatprep.subr.bf16.mxu0 0
    %1216 = vmatpush2.bf16.msra.mxu0 0
    %1217 = vmatprep.subr.bf16.mxu0 0
    %1218 = vmatpush2.bf16.msra.mxu0 0
    %1219 = vmatprep.subr.bf16.mxu0 0
    %1220 = vmatpush2.bf16.msra.mxu0 0
    %1221 = vmatprep.subr.bf16.mxu0 0
    %1222 = vmatpush2.bf16.msra.mxu0 0
    %1223 = vmatprep.subr.bf16.mxu0 0
    %1224 = vmatpush2.bf16.msra.mxu0 0
    %1225 = vmatprep.subr.bf16.mxu0 0
    %1226 = vmatpush2.bf16.msra.mxu0 0
    %1227 = vmatprep.mubr.bf16.mxu0 0
    %1228 = vmatmul.mubr.bf16.gmra.mxu0 %v1144
    %v1229 = vpop.f32.mrf.mxu0
    %v1230 = vadd.f32 0.0, %v1229
    %v1231 = vpop.f32.mrf.mxu0
    %v1232 = vadd.f32 0.0, %v1231
    %v1233 = vpop.f32.mrf.mxu0
    %v1234 = vpop.f32.mrf.mxu0
    %1235 = vdwg.mxu0
    %v1236 = vadd.f32 %v1150, %v1189
    %v1237 = vadd.f32 %v1151, %v1191
    %v1238 = vadd.f32 %v1152, %v1230
    %v1239 = vadd.f32 %v1153, %v1232
    %v1240 = vxor.u32 %v1236, 2147483648
    %v1241 = vxor.u32 %v1237, 2147483648
    %v1242 = vxor.u32 %v1238, 2147483648
    %v1243 = vmul.f32 %v1240, 1.442695
    %v1244 = vpow.pop %v1243
    %v1245 = vmul.f32 %v1241, 1.442695
    %v1246 = vpow.pop %v1245
    %v1247 = vmul.f32 %v1242, 1.442695
    %v1248 = vpow.pop %v1247
    %v1249 = vadd.f32 %v1244, 1.0
    %v1250 = vadd.f32 %v1246, 1.0
    %v1251 = vadd.f32 %v1248, 1.0
    %v1252 = vrcp.pop %v1249
    %v1253 = vmul.f32 1.0, %v1252
    %v1254 = vrcp.pop %v1250
    %v1255 = vmul.f32 1.0, %v1254
    %v1256 = vrcp.pop %v1251
    %v1257 = vmul.f32 1.0, %v1256
    %v1258 = vtanh.pop %v1239
    %v1259 = vmul.f32 %v1255, %v1141
    %v1260 = vmul.f32 %v1253, %v1258
    %v1261 = vadd.f32 %v1259, %v1260
    %v1262 = vtanh.pop %v1261
    %v1263 = vmul.f32 %v1257, %v1262
    %v1264 = vpack.c.bf16 %v1263, %v1263
    %s1265 = scalar_lea.vmem [#allocation2], 20
    %1266 = vst [vmem:[%s1265] sm:$0xf] %v1264
    %s1267 = smul.u32 6, 4
    %s1268 = smul.addr %s1267, 8
    %s1269 = scalar_lea.vmem [#allocation3], %s1268
    %v1270 = vld [vmem:[%s1269] sm:$0xff]
    %v1271 = vld [vmem:[%s1269 + $0x8] sm:$0xff]
    %v1272 = vld [vmem:[%s1269 + $0x10] sm:$0xff]
    %v1273 = vld [vmem:[%s1269 + $0x18] sm:$0xff]
    %1274 = vmatprep.subr.bf16.mxu0 %v520
    %1275 = vmatpush1.bf16.msra.mxu0 %v519
    %1276 = vmatprep.subr.bf16.mxu0 %v516
    %1277 = vmatpush1.bf16.msra.mxu0 %v515
    %1278 = vmatprep.subr.bf16.mxu0 %v512
    %1279 = vmatpush1.bf16.msra.mxu0 %v511
    %1280 = vmatprep.subr.bf16.mxu0 %v508
    %1281 = vmatpush1.bf16.msra.mxu0 %v507
    %1282 = vmatprep.subr.bf16.mxu0 %v504
    %1283 = vmatpush1.bf16.msra.mxu0 %v503
    %1284 = vmatprep.subr.bf16.mxu0 %v500
    %1285 = vmatpush1.bf16.msra.mxu0 %v499
    %1286 = vmatprep.subr.bf16.mxu0 %v496
    %1287 = vmatpush1.bf16.msra.mxu0 %v495
    %1288 = vmatprep.subr.bf16.mxu0 %v492
    %1289 = vmatpush1.bf16.msra.mxu0 %v491
    %1290 = vmatprep.subr.bf16.mxu0 0
    %1291 = vmatpush2.bf16.msra.mxu0 0
    %1292 = vmatprep.subr.bf16.mxu0 0
    %1293 = vmatpush2.bf16.msra.mxu0 0
    %1294 = vmatprep.subr.bf16.mxu0 0
    %1295 = vmatpush2.bf16.msra.mxu0 0
    %1296 = vmatprep.subr.bf16.mxu0 0
    %1297 = vmatpush2.bf16.msra.mxu0 0
    %1298 = vmatprep.subr.bf16.mxu0 0
    %1299 = vmatpush2.bf16.msra.mxu0 0
    %1300 = vmatprep.subr.bf16.mxu0 0
    %1301 = vmatpush2.bf16.msra.mxu0 0
    %1302 = vmatprep.subr.bf16.mxu0 0
    %1303 = vmatpush2.bf16.msra.mxu0 0
    %1304 = vmatprep.subr.bf16.mxu0 0
    %1305 = vmatpush2.bf16.msra.mxu0 0
    %1306 = vmatprep.mubr.bf16.mxu0 0
    %1307 = vmatmul.mubr.bf16.gmra.mxu0 %v1264
    %v1308 = vpop.f32.mrf.mxu0
    %v1309 = vadd.f32 0.0, %v1308
    %v1310 = vpop.f32.mrf.mxu0
    %v1311 = vadd.f32 0.0, %v1310
    %v1312 = vpop.f32.mrf.mxu0
    %v1313 = vpop.f32.mrf.mxu0
    %1314 = vdwg.mxu0
    %1315 = vmatprep.subr.bf16.mxu0 %v522
    %1316 = vmatpush1.bf16.msra.mxu0 %v521
    %1317 = vmatprep.subr.bf16.mxu0 %v518
    %1318 = vmatpush1.bf16.msra.mxu0 %v517
    %1319 = vmatprep.subr.bf16.mxu0 %v514
    %1320 = vmatpush1.bf16.msra.mxu0 %v513
    %1321 = vmatprep.subr.bf16.mxu0 %v510
    %1322 = vmatpush1.bf16.msra.mxu0 %v509
    %1323 = vmatprep.subr.bf16.mxu0 %v506
    %1324 = vmatpush1.bf16.msra.mxu0 %v505
    %1325 = vmatprep.subr.bf16.mxu0 %v502
    %1326 = vmatpush1.bf16.msra.mxu0 %v501
    %1327 = vmatprep.subr.bf16.mxu0 %v498
    %1328 = vmatpush1.bf16.msra.mxu0 %v497
    %1329 = vmatprep.subr.bf16.mxu0 %v494
    %1330 = vmatpush1.bf16.msra.mxu0 %v493
    %1331 = vmatprep.subr.bf16.mxu0 0
    %1332 = vmatpush2.bf16.msra.mxu0 0
    %1333 = vmatprep.subr.bf16.mxu0 0
    %1334 = vmatpush2.bf16.msra.mxu0 0
    %1335 = vmatprep.subr.bf16.mxu0 0
    %1336 = vmatpush2.bf16.msra.mxu0 0
    %1337 = vmatprep.subr.bf16.mxu0 0
    %1338 = vmatpush2.bf16.msra.mxu0 0
    %1339 = vmatprep.subr.bf16.mxu0 0
    %1340 = vmatpush2.bf16.msra.mxu0 0
    %1341 = vmatprep.subr.bf16.mxu0 0
    %1342 = vmatpush2.bf16.msra.mxu0 0
    %1343 = vmatprep.subr.bf16.mxu0 0
    %1344 = vmatpush2.bf16.msra.mxu0 0
    %1345 = vmatprep.subr.bf16.mxu0 0
    %1346 = vmatpush2.bf16.msra.mxu0 0
    %1347 = vmatprep.mubr.bf16.mxu0 0
    %1348 = vmatmul.mubr.bf16.gmra.mxu0 %v1264
    %v1349 = vpop.f32.mrf.mxu0
    %v1350 = vadd.f32 0.0, %v1349
    %v1351 = vpop.f32.mrf.mxu0
    %v1352 = vadd.f32 0.0, %v1351
    %v1353 = vpop.f32.mrf.mxu0
    %v1354 = vpop.f32.mrf.mxu0
    %1355 = vdwg.mxu0
    %v1356 = vadd.f32 %v1270, %v1309
    %v1357 = vadd.f32 %v1271, %v1311
    %v1358 = vadd.f32 %v1272, %v1350
    %v1359 = vadd.f32 %v1273, %v1352
    %v1360 = vxor.u32 %v1356, 2147483648
    %v1361 = vxor.u32 %v1357, 2147483648
    %v1362 = vxor.u32 %v1358, 2147483648
    %v1363 = vmul.f32 %v1360, 1.442695
    %v1364 = vpow.pop %v1363
    %v1365 = vmul.f32 %v1361, 1.442695
    %v1366 = vpow.pop %v1365
    %v1367 = vmul.f32 %v1362, 1.442695
    %v1368 = vpow.pop %v1367
    %v1369 = vadd.f32 %v1364, 1.0
    %v1370 = vadd.f32 %v1366, 1.0
    %v1371 = vadd.f32 %v1368, 1.0
    %v1372 = vrcp.pop %v1369
    %v1373 = vmul.f32 1.0, %v1372
    %v1374 = vrcp.pop %v1370
    %v1375 = vmul.f32 1.0, %v1374
    %v1376 = vrcp.pop %v1371
    %v1377 = vmul.f32 1.0, %v1376
    %v1378 = vtanh.pop %v1359
    %v1379 = vmul.f32 %v1375, %v1261
    %v1380 = vmul.f32 %v1373, %v1378
    %v1381 = vadd.f32 %v1379, %v1380
    %v1382 = vtanh.pop %v1381
    %v1383 = vmul.f32 %v1377, %v1382
    %v1384 = vpack.c.bf16 %v1383, %v1383
    %s1385 = scalar_lea.vmem [#allocation2], 24
    %1386 = vst [vmem:[%s1385] sm:$0xf] %v1384
    %s1387 = smul.u32 7, 4
    %s1388 = smul.addr %s1387, 8
    %s1389 = scalar_lea.vmem [#allocation3], %s1388
    %v1390 = vld [vmem:[%s1389] sm:$0xff]
    %v1391 = vld [vmem:[%s1389 + $0x8] sm:$0xff]
    %v1392 = vld [vmem:[%s1389 + $0x10] sm:$0xff]
    %v1393 = vld [vmem:[%s1389 + $0x18] sm:$0xff]
    %1394 = vmatprep.subr.bf16.mxu0 %v520
    %1395 = vmatpush1.bf16.msra.mxu0 %v519
    %1396 = vmatprep.subr.bf16.mxu0 %v516
    %1397 = vmatpush1.bf16.msra.mxu0 %v515
    %1398 = vmatprep.subr.bf16.mxu0 %v512
    %1399 = vmatpush1.bf16.msra.mxu0 %v511
    %1400 = vmatprep.subr.bf16.mxu0 %v508
    %1401 = vmatpush1.bf16.msra.mxu0 %v507
    %1402 = vmatprep.subr.bf16.mxu0 %v504
    %1403 = vmatpush1.bf16.msra.mxu0 %v503
    %1404 = vmatprep.subr.bf16.mxu0 %v500
    %1405 = vmatpush1.bf16.msra.mxu0 %v499
    %1406 = vmatprep.subr.bf16.mxu0 %v496
    %1407 = vmatpush1.bf16.msra.mxu0 %v495
    %1408 = vmatprep.subr.bf16.mxu0 %v492
    %1409 = vmatpush1.bf16.msra.mxu0 %v491
    %1410 = vmatprep.subr.bf16.mxu0 0
    %1411 = vmatpush2.bf16.msra.mxu0 0
    %1412 = vmatprep.subr.bf16.mxu0 0
    %1413 = vmatpush2.bf16.msra.mxu0 0
    %1414 = vmatprep.subr.bf16.mxu0 0
    %1415 = vmatpush2.bf16.msra.mxu0 0
    %1416 = vmatprep.subr.bf16.mxu0 0
    %1417 = vmatpush2.bf16.msra.mxu0 0
    %1418 = vmatprep.subr.bf16.mxu0 0
    %1419 = vmatpush2.bf16.msra.mxu0 0
    %1420 = vmatprep.subr.bf16.mxu0 0
    %1421 = vmatpush2.bf16.msra.mxu0 0
    %1422 = vmatprep.subr.bf16.mxu0 0
    %1423 = vmatpush2.bf16.msra.mxu0 0
    %1424 = vmatprep.subr.bf16.mxu0 0
    %1425 = vmatpush2.bf16.msra.mxu0 0
    %1426 = vmatprep.mubr.bf16.mxu0 0
    %1427 = vmatmul.mubr.bf16.gmra.mxu0 %v1384
    %v1428 = vpop.f32.mrf.mxu0
    %v1429 = vadd.f32 0.0, %v1428
    %v1430 = vpop.f32.mrf.mxu0
    %v1431 = vadd.f32 0.0, %v1430
    %v1432 = vpop.f32.mrf.mxu0
    %v1433 = vpop.f32.mrf.mxu0
    %1434 = vdwg.mxu0
    %1435 = vmatprep.subr.bf16.mxu0 %v522
    %1436 = vmatpush1.bf16.msra.mxu0 %v521
    %1437 = vmatprep.subr.bf16.mxu0 %v518
    %1438 = vmatpush1.bf16.msra.mxu0 %v517
    %1439 = vmatprep.subr.bf16.mxu0 %v514
    %1440 = vmatpush1.bf16.msra.mxu0 %v513
    %1441 = vmatprep.subr.bf16.mxu0 %v510
    %1442 = vmatpush1.bf16.msra.mxu0 %v509
    %1443 = vmatprep.subr.bf16.mxu0 %v506
    %1444 = vmatpush1.bf16.msra.mxu0 %v505
    %1445 = vmatprep.subr.bf16.mxu0 %v502
    %1446 = vmatpush1.bf16.msra.mxu0 %v501
    %1447 = vmatprep.subr.bf16.mxu0 %v498
    %1448 = vmatpush1.bf16.msra.mxu0 %v497
    %1449 = vmatprep.subr.bf16.mxu0 %v494
    %1450 = vmatpush1.bf16.msra.mxu0 %v493
    %1451 = vmatprep.subr.bf16.mxu0 0
    %1452 = vmatpush2.bf16.msra.mxu0 0
    %1453 = vmatprep.subr.bf16.mxu0 0
    %1454 = vmatpush2.bf16.msra.mxu0 0
    %1455 = vmatprep.subr.bf16.mxu0 0
    %1456 = vmatpush2.bf16.msra.mxu0 0
    %1457 = vmatprep.subr.bf16.mxu0 0
    %1458 = vmatpush2.bf16.msra.mxu0 0
    %1459 = vmatprep.subr.bf16.mxu0 0
    %1460 = vmatpush2.bf16.msra.mxu0 0
    %1461 = vmatprep.subr.bf16.mxu0 0
    %1462 = vmatpush2.bf16.msra.mxu0 0
    %1463 = vmatprep.subr.bf16.mxu0 0
    %1464 = vmatpush2.bf16.msra.mxu0 0
    %1465 = vmatprep.subr.bf16.mxu0 0
    %1466 = vmatpush2.bf16.msra.mxu0 0
    %1467 = vmatprep.mubr.bf16.mxu0 0
    %1468 = vmatmul.mubr.bf16.gmra.mxu0 %v1384
    %v1469 = vpop.f32.mrf.mxu0
    %v1470 = vadd.f32 0.0, %v1469
    %v1471 = vpop.f32.mrf.mxu0
    %v1472 = vadd.f32 0.0, %v1471
    %v1473 = vpop.f32.mrf.mxu0
    %v1474 = vpop.f32.mrf.mxu0
    %1475 = vdwg.mxu0
    %v1476 = vadd.f32 %v1390, %v1429
    %v1477 = vadd.f32 %v1391, %v1431
    %v1478 = vadd.f32 %v1392, %v1470
    %v1479 = vadd.f32 %v1393, %v1472
    %v1480 = vxor.u32 %v1476, 2147483648
    %v1481 = vxor.u32 %v1477, 2147483648
    %v1482 = vxor.u32 %v1478, 2147483648
    %v1483 = vmul.f32 %v1480, 1.442695
    %v1484 = vpow.pop %v1483
    %v1485 = vmul.f32 %v1481, 1.442695
    %v1486 = vpow.pop %v1485
    %v1487 = vmul.f32 %v1482, 1.442695
    %v1488 = vpow.pop %v1487
    %v1489 = vadd.f32 %v1484, 1.0
    %v1490 = vadd.f32 %v1486, 1.0
    %v1491 = vadd.f32 %v1488, 1.0
    %v1492 = vrcp.pop %v1489
    %v1493 = vmul.f32 1.0, %v1492
    %v1494 = vrcp.pop %v1490
    %v1495 = vmul.f32 1.0, %v1494
    %v1496 = vrcp.pop %v1491
    %v1497 = vmul.f32 1.0, %v1496
    %v1498 = vtanh.pop %v1479
    %v1499 = vmul.f32 %v1495, %v1381
    %v1500 = vmul.f32 %v1493, %v1498
    %v1501 = vadd.f32 %v1499, %v1500
    %v1502 = vtanh.pop %v1501
    %v1503 = vmul.f32 %v1497, %v1502
    %v1504 = vpack.c.bf16 %v1503, %v1503
    %s1505 = scalar_lea.vmem [#allocation2], 28
    %1506 = vst [vmem:[%s1505] sm:$0xf] %v1504
    %v1507 = vld [vmem:[#allocation2] sm:$0xf]
    %v1508 = vld [vmem:[#allocation2 + $0x4] sm:$0xf]
    %v1509 = vld [vmem:[#allocation2 + $0x8] sm:$0xf]
    %v1510 = vld [vmem:[#allocation2 + $0xc] sm:$0xf]
    %v1511 = vld [vmem:[#allocation2 + $0x10] sm:$0xf]
    %v1512 = vld [vmem:[#allocation2 + $0x14] sm:$0xf]
    %v1513 = vld [vmem:[#allocation2 + $0x18] sm:$0xf]
    %v1514 = vld [vmem:[#allocation2 + $0x1c] sm:$0xf]
    %v1515 = vld [vmem:[#allocation6] sm:$0xff]
    %v1516 = vld [vmem:[#allocation6 + $0x8] sm:$0xff]
    %v1517 = vld [vmem:[#allocation6 + $0x10] sm:$0xff]
    %v1518 = vld [vmem:[#allocation6 + $0x18] sm:$0xff]
    %v1519 = vld [vmem:[#allocation6 + $0x20] sm:$0xff]
    %v1520 = vld [vmem:[#allocation6 + $0x28] sm:$0xff]
    %v1521 = vld [vmem:[#allocation6 + $0x30] sm:$0xff]
    %v1522 = vld [vmem:[#allocation6 + $0x38] sm:$0xff]
    %v1523 = vld [vmem:[#allocation6 + $0x40] sm:$0xff]
    %v1524 = vld [vmem:[#allocation6 + $0x48] sm:$0xff]
    %v1525 = vld [vmem:[#allocation6 + $0x50] sm:$0xff]
    %v1526 = vld [vmem:[#allocation6 + $0x58] sm:$0xff]
    %v1527 = vld [vmem:[#allocation6 + $0x60] sm:$0xff]
    %v1528 = vld [vmem:[#allocation6 + $0x68] sm:$0xff]
    %v1529 = vld [vmem:[#allocation6 + $0x70] sm:$0xff]
    %v1530 = vld [vmem:[#allocation6 + $0x78] sm:$0xff]
    %v1531 = vld [vmem:[#allocation6 + $0x80] sm:$0xff]
    %v1532 = vld [vmem:[#allocation6 + $0x88] sm:$0xff]
    %v1533 = vld [vmem:[#allocation6 + $0x90] sm:$0xff]
    %v1534 = vld [vmem:[#allocation6 + $0x98] sm:$0xff]
    %v1535 = vld [vmem:[#allocation6 + $0xa0] sm:$0xff]
    %v1536 = vld [vmem:[#allocation6 + $0xa8] sm:$0xff]
    %v1537 = vld [vmem:[#allocation6 + $0xb0] sm:$0xff]
    %v1538 = vld [vmem:[#allocation6 + $0xb8] sm:$0xff]
    %v1539 = vld [vmem:[#allocation6 + $0xc0] sm:$0xff]
    %v1540 = vld [vmem:[#allocation6 + $0xc8] sm:$0xff]
    %v1541 = vld [vmem:[#allocation6 + $0xd0] sm:$0xff]
    %v1542 = vld [vmem:[#allocation6 + $0xd8] sm:$0xff]
    %v1543 = vld [vmem:[#allocation6 + $0xe0] sm:$0xff]
    %v1544 = vld [vmem:[#allocation6 + $0xe8] sm:$0xff]
    %v1545 = vld [vmem:[#allocation6 + $0xf0] sm:$0xff]
    %v1546 = vld [vmem:[#allocation6 + $0xf8] sm:$0xff]
    %v1547 = vld [vmem:[%s8] sm:$0xf]
    %v1549 = vlaneseq
    %v1550 = vshrl.u32 %v1549, 7
    %v1551 = vsub.s32 0, %v1550
    %v1552 = vrot.slane %v1547, %v1551
    %v1553 = vlaneseq
    %v1554 = vshrl.u32 %v1553, 7
    %v1555 = vsub.s32 1, %v1554
    %v1556 = vrot.slane %v1547, %v1555
    %v1557 = vlaneseq
    %v1558 = vshrl.u32 %v1557, 7
    %v1559 = vsub.s32 2, %v1558
    %v1560 = vrot.slane %v1547, %v1559
    %v1561 = vlaneseq
    %v1562 = vshrl.u32 %v1561, 7
    %v1563 = vsub.s32 3, %v1562
    %v1564 = vrot.slane %v1547, %v1563
    %v1577 = vunpack.c.l.b16 %v1507
    %v1578 = vunpack.c.l.b16 %v1508
    %v1579 = vunpack.c.l.b16 %v1509
    %v1580 = vunpack.c.l.b16 %v1510
    %v1581 = vunpack.c.l.b16 %v1511
    %v1582 = vunpack.c.l.b16 %v1512
    %v1583 = vunpack.c.l.b16 %v1513
    %v1584 = vunpack.c.l.b16 %v1514
    %v1585 = vpack.c.b16 %v1578, %v1577
    %v1586 = vpack.c.b16 %v1580, %v1579
    %v1587 = vpack.c.b16 %v1582, %v1581
    %v1588 = vpack.c.b16 %v1584, %v1583
    %v1625 = vunpack.c.l.b16 %v1515
    %v1626 = vunpack.c.h.b16 %v1515
    %v1627 = vunpack.c.l.b16 %v1516
    %v1628 = vunpack.c.h.b16 %v1516
    %v1629 = vunpack.c.l.b16 %v1517
    %v1630 = vunpack.c.h.b16 %v1517
    %v1631 = vunpack.c.l.b16 %v1518
    %v1632 = vunpack.c.h.b16 %v1518
    %v1633 = vunpack.c.l.b16 %v1519
    %v1634 = vunpack.c.h.b16 %v1519
    %v1635 = vunpack.c.l.b16 %v1520
    %v1636 = vunpack.c.h.b16 %v1520
    %v1637 = vunpack.c.l.b16 %v1521
    %v1638 = vunpack.c.h.b16 %v1521
    %v1639 = vunpack.c.l.b16 %v1522
    %v1640 = vunpack.c.h.b16 %v1522
    %v1641 = vunpack.c.l.b16 %v1523
    %v1642 = vunpack.c.h.b16 %v1523
    %v1643 = vunpack.c.l.b16 %v1524
    %v1644 = vunpack.c.h.b16 %v1524
    %v1645 = vunpack.c.l.b16 %v1525
    %v1646 = vunpack.c.h.b16 %v1525
    %v1647 = vunpack.c.l.b16 %v1526
    %v1648 = vunpack.c.h.b16 %v1526
    %v1649 = vunpack.c.l.b16 %v1527
    %v1650 = vunpack.c.h.b16 %v1527
    %v1651 = vunpack.c.l.b16 %v1528
    %v1652 = vunpack.c.h.b16 %v1528
    %v1653 = vunpack.c.l.b16 %v1529
    %v1654 = vunpack.c.h.b16 %v1529
    %v1655 = vunpack.c.l.b16 %v1530
    %v1656 = vunpack.c.h.b16 %v1530
    %v1657 = vunpack.c.l.b16 %v1531
    %v1658 = vunpack.c.h.b16 %v1531
    %v1659 = vunpack.c.l.b16 %v1532
    %v1660 = vunpack.c.h.b16 %v1532
    %v1661 = vunpack.c.l.b16 %v1533
    %v1662 = vunpack.c.h.b16 %v1533
    %v1663 = vunpack.c.l.b16 %v1534
    %v1664 = vunpack.c.h.b16 %v1534
    %v1665 = vunpack.c.l.b16 %v1535
    %v1666 = vunpack.c.h.b16 %v1535
    %v1667 = vunpack.c.l.b16 %v1536
    %v1668 = vunpack.c.h.b16 %v1536
    %v1669 = vunpack.c.l.b16 %v1537
    %v1670 = vunpack.c.h.b16 %v1537
    %v1671 = vunpack.c.l.b16 %v1538
    %v1672 = vunpack.c.h.b16 %v1538
    %v1673 = vunpack.c.l.b16 %v1539
    %v1674 = vunpack.c.h.b16 %v1539
    %v1675 = vunpack.c.l.b16 %v1540
    %v1676 = vunpack.c.h.b16 %v1540
    %v1677 = vunpack.c.l.b16 %v1541
    %v1678 = vunpack.c.h.b16 %v1541
    %v1679 = vunpack.c.l.b16 %v1542
    %v1680 = vunpack.c.h.b16 %v1542
    %v1681 = vunpack.c.l.b16 %v1543
    %v1682 = vunpack.c.h.b16 %v1543
    %v1683 = vunpack.c.l.b16 %v1544
    %v1684 = vunpack.c.h.b16 %v1544
    %v1685 = vunpack.c.l.b16 %v1545
    %v1686 = vunpack.c.h.b16 %v1545
    %v1687 = vunpack.c.l.b16 %v1546
    %v1688 = vunpack.c.h.b16 %v1546
    %v1689 = vpack.c.b16 %v1629, %v1625
    %v1690 = vpack.c.b16 %v1630, %v1626
    %v1691 = vpack.c.b16 %v1631, %v1627
    %v1692 = vpack.c.b16 %v1632, %v1628
    %v1693 = vpack.c.b16 %v1637, %v1633
    %v1694 = vpack.c.b16 %v1638, %v1634
    %v1695 = vpack.c.b16 %v1639, %v1635
    %v1696 = vpack.c.b16 %v1640, %v1636
    %v1697 = vpack.c.b16 %v1645, %v1641
    %v1698 = vpack.c.b16 %v1646, %v1642
    %v1699 = vpack.c.b16 %v1647, %v1643
    %v1700 = vpack.c.b16 %v1648, %v1644
    %v1701 = vpack.c.b16 %v1653, %v1649
    %v1702 = vpack.c.b16 %v1654, %v1650
    %v1703 = vpack.c.b16 %v1655, %v1651
    %v1704 = vpack.c.b16 %v1656, %v1652
    %v1705 = vpack.c.b16 %v1661, %v1657
    %v1706 = vpack.c.b16 %v1662, %v1658
    %v1707 = vpack.c.b16 %v1663, %v1659
    %v1708 = vpack.c.b16 %v1664, %v1660
    %v1709 = vpack.c.b16 %v1669, %v1665
    %v1710 = vpack.c.b16 %v1670, %v1666
    %v1711 = vpack.c.b16 %v1671, %v1667
    %v1712 = vpack.c.b16 %v1672, %v1668
    %v1713 = vpack.c.b16 %v1677, %v1673
    %v1714 = vpack.c.b16 %v1678, %v1674
    %v1715 = vpack.c.b16 %v1679, %v1675
    %v1716 = vpack.c.b16 %v1680, %v1676
    %v1717 = vpack.c.b16 %v1685, %v1681
    %v1718 = vpack.c.b16 %v1686, %v1682
    %v1719 = vpack.c.b16 %v1687, %v1683
    %v1720 = vpack.c.b16 %v1688, %v1684
    %1753 = vmatprep.subr.bf16.mxu0 %v1718
    %1754 = vmatpush1.bf16.msra.mxu0 %v1717
    %1755 = vmatprep.subr.bf16.mxu0 %v1714
    %1756 = vmatpush1.bf16.msra.mxu0 %v1713
    %1757 = vmatprep.subr.bf16.mxu0 %v1710
    %1758 = vmatpush1.bf16.msra.mxu0 %v1709
    %1759 = vmatprep.subr.bf16.mxu0 %v1706
    %1760 = vmatpush1.bf16.msra.mxu0 %v1705
    %1761 = vmatprep.subr.bf16.mxu0 %v1702
    %1762 = vmatpush1.bf16.msra.mxu0 %v1701
    %1763 = vmatprep.subr.bf16.mxu0 %v1698
    %1764 = vmatpush1.bf16.msra.mxu0 %v1697
    %1765 = vmatprep.subr.bf16.mxu0 %v1694
    %1766 = vmatpush1.bf16.msra.mxu0 %v1693
    %1767 = vmatprep.subr.bf16.mxu0 %v1690
    %1768 = vmatpush1.bf16.msra.mxu0 %v1689
    %1769 = vmatprep.subr.bf16.mxu0 0
    %1770 = vmatpush2.bf16.msra.mxu0 0
    %1771 = vmatprep.subr.bf16.mxu0 0
    %1772 = vmatpush2.bf16.msra.mxu0 0
    %1773 = vmatprep.subr.bf16.mxu0 0
    %1774 = vmatpush2.bf16.msra.mxu0 0
    %1775 = vmatprep.subr.bf16.mxu0 0
    %1776 = vmatpush2.bf16.msra.mxu0 0
    %1777 = vmatprep.subr.bf16.mxu0 0
    %1778 = vmatpush2.bf16.msra.mxu0 0
    %1779 = vmatprep.subr.bf16.mxu0 0
    %1780 = vmatpush2.bf16.msra.mxu0 0
    %1781 = vmatprep.subr.bf16.mxu0 0
    %1782 = vmatpush2.bf16.msra.mxu0 0
    %1783 = vmatprep.subr.bf16.mxu0 0
    %1784 = vmatpush2.bf16.msra.mxu0 0
    %1785 = vmatprep.mubr.bf16.mxu0 0
    %1786 = vmatmul.mubr.bf16.gmra.mxu0 %v1585
    %v1787 = vpop.f32.mrf.mxu0
    %v1788 = vadd.f32 %v1552, %v1787
    %v1789 = vpop.f32.mrf.mxu0
    %v1790 = vadd.f32 %v1556, %v1789
    %v1791 = vpop.f32.mrf.mxu0
    %v1792 = vadd.f32 %v1552, %v1791
    %v1793 = vpop.f32.mrf.mxu0
    %v1794 = vadd.f32 %v1556, %v1793
    %1795 = vmatprep.mubr.bf16.mxu0 0
    %1796 = vmatmul.mubr.bf16.gmra.mxu0 %v1586
    %v1797 = vpop.f32.mrf.mxu0
    %v1798 = vadd.f32 %v1552, %v1797
    %v1799 = vpop.f32.mrf.mxu0
    %v1800 = vadd.f32 %v1556, %v1799
    %v1801 = vpop.f32.mrf.mxu0
    %v1802 = vadd.f32 %v1552, %v1801
    %v1803 = vpop.f32.mrf.mxu0
    %v1804 = vadd.f32 %v1556, %v1803
    %1805 = vmatprep.mubr.bf16.mxu0 0
    %1806 = vmatmul.mubr.bf16.gmra.mxu0 %v1587
    %v1807 = vpop.f32.mrf.mxu0
    %v1808 = vadd.f32 %v1552, %v1807
    %v1809 = vpop.f32.mrf.mxu0
    %v1810 = vadd.f32 %v1556, %v1809
    %v1811 = vpop.f32.mrf.mxu0
    %v1812 = vadd.f32 %v1552, %v1811
    %v1813 = vpop.f32.mrf.mxu0
    %v1814 = vadd.f32 %v1556, %v1813
    %1815 = vmatprep.mubr.bf16.mxu0 0
    %1816 = vmatmul.mubr.bf16.gmra.mxu0 %v1588
    %v1817 = vpop.f32.mrf.mxu0
    %v1818 = vadd.f32 %v1552, %v1817
    %v1819 = vpop.f32.mrf.mxu0
    %v1820 = vadd.f32 %v1556, %v1819
    %v1821 = vpop.f32.mrf.mxu0
    %v1822 = vadd.f32 %v1552, %v1821
    %v1823 = vpop.f32.mrf.mxu0
    %v1824 = vadd.f32 %v1556, %v1823
    %1825 = vdwg.mxu0
    %1826 = vmatprep.subr.bf16.mxu0 %v1720
    %1827 = vmatpush1.bf16.msra.mxu0 %v1719
    %1828 = vmatprep.subr.bf16.mxu0 %v1716
    %1829 = vmatpush1.bf16.msra.mxu0 %v1715
    %1830 = vmatprep.subr.bf16.mxu0 %v1712
    %1831 = vmatpush1.bf16.msra.mxu0 %v1711
    %1832 = vmatprep.subr.bf16.mxu0 %v1708
    %1833 = vmatpush1.bf16.msra.mxu0 %v1707
    %1834 = vmatprep.subr.bf16.mxu0 %v1704
    %1835 = vmatpush1.bf16.msra.mxu0 %v1703
    %1836 = vmatprep.subr.bf16.mxu0 %v1700
    %1837 = vmatpush1.bf16.msra.mxu0 %v1699
    %1838 = vmatprep.subr.bf16.mxu0 %v1696
    %1839 = vmatpush1.bf16.msra.mxu0 %v1695
    %1840 = vmatprep.subr.bf16.mxu0 %v1692
    %1841 = vmatpush1.bf16.msra.mxu0 %v1691
    %1842 = vmatprep.subr.bf16.mxu0 0
    %1843 = vmatpush2.bf16.msra.mxu0 0
    %1844 = vmatprep.subr.bf16.mxu0 0
    %1845 = vmatpush2.bf16.msra.mxu0 0
    %1846 = vmatprep.subr.bf16.mxu0 0
    %1847 = vmatpush2.bf16.msra.mxu0 0
    %1848 = vmatprep.subr.bf16.mxu0 0
    %1849 = vmatpush2.bf16.msra.mxu0 0
    %1850 = vmatprep.subr.bf16.mxu0 0
    %1851 = vmatpush2.bf16.msra.mxu0 0
    %1852 = vmatprep.subr.bf16.mxu0 0
    %1853 = vmatpush2.bf16.msra.mxu0 0
    %1854 = vmatprep.subr.bf16.mxu0 0
    %1855 = vmatpush2.bf16.msra.mxu0 0
    %1856 = vmatprep.subr.bf16.mxu0 0
    %1857 = vmatpush2.bf16.msra.mxu0 0
    %1858 = vmatprep.mubr.bf16.mxu0 0
    %1859 = vmatmul.mubr.bf16.gmra.mxu0 %v1585
    %v1860 = vpop.f32.mrf.mxu0
    %v1861 = vadd.f32 %v1560, %v1860
    %v1862 = vpop.f32.mrf.mxu0
    %v1863 = vadd.f32 %v1564, %v1862
    %v1864 = vpop.f32.mrf.mxu0
    %v1865 = vadd.f32 %v1560, %v1864
    %v1866 = vpop.f32.mrf.mxu0
    %v1867 = vadd.f32 %v1564, %v1866
    %1868 = vmatprep.mubr.bf16.mxu0 0
    %1869 = vmatmul.mubr.bf16.gmra.mxu0 %v1586
    %v1870 = vpop.f32.mrf.mxu0
    %v1871 = vadd.f32 %v1560, %v1870
    %v1872 = vpop.f32.mrf.mxu0
    %v1873 = vadd.f32 %v1564, %v1872
    %v1874 = vpop.f32.mrf.mxu0
    %v1875 = vadd.f32 %v1560, %v1874
    %v1876 = vpop.f32.mrf.mxu0
    %v1877 = vadd.f32 %v1564, %v1876
    %1878 = vmatprep.mubr.bf16.mxu0 0
    %1879 = vmatmul.mubr.bf16.gmra.mxu0 %v1587
    %v1880 = vpop.f32.mrf.mxu0
    %v1881 = vadd.f32 %v1560, %v1880
    %v1882 = vpop.f32.mrf.mxu0
    %v1883 = vadd.f32 %v1564, %v1882
    %v1884 = vpop.f32.mrf.mxu0
    %v1885 = vadd.f32 %v1560, %v1884
    %v1886 = vpop.f32.mrf.mxu0
    %v1887 = vadd.f32 %v1564, %v1886
    %1888 = vmatprep.mubr.bf16.mxu0 0
    %1889 = vmatmul.mubr.bf16.gmra.mxu0 %v1588
    %v1890 = vpop.f32.mrf.mxu0
    %v1891 = vadd.f32 %v1560, %v1890
    %v1892 = vpop.f32.mrf.mxu0
    %v1893 = vadd.f32 %v1564, %v1892
    %v1894 = vpop.f32.mrf.mxu0
    %v1895 = vadd.f32 %v1560, %v1894
    %v1896 = vpop.f32.mrf.mxu0
    %v1897 = vadd.f32 %v1564, %v1896
    %1898 = vdwg.mxu0
    %1899 = vst [vmem:[#allocation3] sm:$0xff] %v1788
    %1900 = vst [vmem:[#allocation3 + $0x8] sm:$0xff] %v1790
    %1901 = vst [vmem:[#allocation3 + $0x10] sm:$0xff] %v1861
    %1902 = vst [vmem:[#allocation3 + $0x18] sm:$0xff] %v1863
    %1903 = vst [vmem:[#allocation3 + $0x20] sm:$0xff] %v1792
    %1904 = vst [vmem:[#allocation3 + $0x28] sm:$0xff] %v1794
    %1905 = vst [vmem:[#allocation3 + $0x30] sm:$0xff] %v1865
    %1906 = vst [vmem:[#allocation3 + $0x38] sm:$0xff] %v1867
    %1907 = vst [vmem:[#allocation3 + $0x40] sm:$0xff] %v1798
    %1908 = vst [vmem:[#allocation3 + $0x48] sm:$0xff] %v1800
    %1909 = vst [vmem:[#allocation3 + $0x50] sm:$0xff] %v1871
    %1910 = vst [vmem:[#allocation3 + $0x58] sm:$0xff] %v1873
    %1911 = vst [vmem:[#allocation3 + $0x60] sm:$0xff] %v1802
    %1912 = vst [vmem:[#allocation3 + $0x68] sm:$0xff] %v1804
    %1913 = vst [vmem:[#allocation3 + $0x70] sm:$0xff] %v1875
    %1914 = vst [vmem:[#allocation3 + $0x78] sm:$0xff] %v1877
    %1915 = vst [vmem:[#allocation3 + $0x80] sm:$0xff] %v1808
    %1916 = vst [vmem:[#allocation3 + $0x88] sm:$0xff] %v1810
    %1917 = vst [vmem:[#allocation3 + $0x90] sm:$0xff] %v1881
    %1918 = vst [vmem:[#allocation3 + $0x98] sm:$0xff] %v1883
    %1919 = vst [vmem:[#allocation3 + $0xa0] sm:$0xff] %v1812
    %1920 = vst [vmem:[#allocation3 + $0xa8] sm:$0xff] %v1814
    %1921 = vst [vmem:[#allocation3 + $0xb0] sm:$0xff] %v1885
    %1922 = vst [vmem:[#allocation3 + $0xb8] sm:$0xff] %v1887
    %1923 = vst [vmem:[#allocation3 + $0xc0] sm:$0xff] %v1818
    %1924 = vst [vmem:[#allocation3 + $0xc8] sm:$0xff] %v1820
    %1925 = vst [vmem:[#allocation3 + $0xd0] sm:$0xff] %v1891
    %1926 = vst [vmem:[#allocation3 + $0xd8] sm:$0xff] %v1893
    %1927 = vst [vmem:[#allocation3 + $0xe0] sm:$0xff] %v1822
    %1928 = vst [vmem:[#allocation3 + $0xe8] sm:$0xff] %v1824
    %1929 = vst [vmem:[#allocation3 + $0xf0] sm:$0xff] %v1895
    %1930 = vst [vmem:[#allocation3 + $0xf8] sm:$0xff] %v1897
    %v1931 = vld [vmem:[#allocation8] sm:$0xff]
    %v1932 = vld [vmem:[#allocation8 + $0x8] sm:$0xff]
    %v1933 = vld [vmem:[#allocation8 + $0x10] sm:$0xff]
    %v1934 = vld [vmem:[#allocation8 + $0x18] sm:$0xff]
    %v1935 = vld [vmem:[#allocation8 + $0x20] sm:$0xff]
    %v1936 = vld [vmem:[#allocation8 + $0x28] sm:$0xff]
    %v1937 = vld [vmem:[#allocation8 + $0x30] sm:$0xff]
    %v1938 = vld [vmem:[#allocation8 + $0x38] sm:$0xff]
    %v1939 = vld [vmem:[#allocation8 + $0x40] sm:$0xff]
    %v1940 = vld [vmem:[#allocation8 + $0x48] sm:$0xff]
    %v1941 = vld [vmem:[#allocation8 + $0x50] sm:$0xff]
    %v1942 = vld [vmem:[#allocation8 + $0x58] sm:$0xff]
    %v1943 = vld [vmem:[#allocation8 + $0x60] sm:$0xff]
    %v1944 = vld [vmem:[#allocation8 + $0x68] sm:$0xff]
    %v1945 = vld [vmem:[#allocation8 + $0x70] sm:$0xff]
    %v1946 = vld [vmem:[#allocation8 + $0x78] sm:$0xff]
    %v1947 = vld [vmem:[#allocation8 + $0x80] sm:$0xff]
    %v1948 = vld [vmem:[#allocation8 + $0x88] sm:$0xff]
    %v1949 = vld [vmem:[#allocation8 + $0x90] sm:$0xff]
    %v1950 = vld [vmem:[#allocation8 + $0x98] sm:$0xff]
    %v1951 = vld [vmem:[#allocation8 + $0xa0] sm:$0xff]
    %v1952 = vld [vmem:[#allocation8 + $0xa8] sm:$0xff]
    %v1953 = vld [vmem:[#allocation8 + $0xb0] sm:$0xff]
    %v1954 = vld [vmem:[#allocation8 + $0xb8] sm:$0xff]
    %v1955 = vld [vmem:[#allocation8 + $0xc0] sm:$0xff]
    %v1956 = vld [vmem:[#allocation8 + $0xc8] sm:$0xff]
    %v1957 = vld [vmem:[#allocation8 + $0xd0] sm:$0xff]
    %v1958 = vld [vmem:[#allocation8 + $0xd8] sm:$0xff]
    %v1959 = vld [vmem:[#allocation8 + $0xe0] sm:$0xff]
    %v1960 = vld [vmem:[#allocation8 + $0xe8] sm:$0xff]
    %v1961 = vld [vmem:[#allocation8 + $0xf0] sm:$0xff]
    %v1962 = vld [vmem:[#allocation8 + $0xf8] sm:$0xff]
    %s1963 = scalar_lea.vmem %s1, 8
    %v1964 = vld [vmem:[%s1963] sm:$0xff]
    %s1965 = scalar_lea.vmem %s2, 8
    %v1966 = vld [vmem:[%s1965] sm:$0xff]
    %v1967 = vld [vmem:[%s389] sm:$0xff]
    %v1968 = vld [vmem:[%s389 + $0x8] sm:$0xff]
    %v1969 = vld [vmem:[%s389 + $0x10] sm:$0xff]
    %v1970 = vld [vmem:[%s389 + $0x18] sm:$0xff]
    %v1971 = vpack.c.bf16 %v1964, %v1964
    %v2004 = vunpack.c.l.b16 %v1931
    %v2005 = vunpack.c.h.b16 %v1931
    %v2006 = vunpack.c.l.b16 %v1932
    %v2007 = vunpack.c.h.b16 %v1932
    %v2008 = vunpack.c.l.b16 %v1933
    %v2009 = vunpack.c.h.b16 %v1933
    %v2010 = vunpack.c.l.b16 %v1934
    %v2011 = vunpack.c.h.b16 %v1934
    %v2012 = vunpack.c.l.b16 %v1935
    %v2013 = vunpack.c.h.b16 %v1935
    %v2014 = vunpack.c.l.b16 %v1936
    %v2015 = vunpack.c.h.b16 %v1936
    %v2016 = vunpack.c.l.b16 %v1937
    %v2017 = vunpack.c.h.b16 %v1937
    %v2018 = vunpack.c.l.b16 %v1938
    %v2019 = vunpack.c.h.b16 %v1938
    %v2020 = vunpack.c.l.b16 %v1939
    %v2021 = vunpack.c.h.b16 %v1939
    %v2022 = vunpack.c.l.b16 %v1940
    %v2023 = vunpack.c.h.b16 %v1940
    %v2024 = vunpack.c.l.b16 %v1941
    %v2025 = vunpack.c.h.b16 %v1941
    %v2026 = vunpack.c.l.b16 %v1942
    %v2027 = vunpack.c.h.b16 %v1942
    %v2028 = vunpack.c.l.b16 %v1943
    %v2029 = vunpack.c.h.b16 %v1943
    %v2030 = vunpack.c.l.b16 %v1944
    %v2031 = vunpack.c.h.b16 %v1944
    %v2032 = vunpack.c.l.b16 %v1945
    %v2033 = vunpack.c.h.b16 %v1945
    %v2034 = vunpack.c.l.b16 %v1946
    %v2035 = vunpack.c.h.b16 %v1946
    %v2036 = vunpack.c.l.b16 %v1947
    %v2037 = vunpack.c.h.b16 %v1947
    %v2038 = vunpack.c.l.b16 %v1948
    %v2039 = vunpack.c.h.b16 %v1948
    %v2040 = vunpack.c.l.b16 %v1949
    %v2041 = vunpack.c.h.b16 %v1949
    %v2042 = vunpack.c.l.b16 %v1950
    %v2043 = vunpack.c.h.b16 %v1950
    %v2044 = vunpack.c.l.b16 %v1951
    %v2045 = vunpack.c.h.b16 %v1951
    %v2046 = vunpack.c.l.b16 %v1952
    %v2047 = vunpack.c.h.b16 %v1952
    %v2048 = vunpack.c.l.b16 %v1953
    %v2049 = vunpack.c.h.b16 %v1953
    %v2050 = vunpack.c.l.b16 %v1954
    %v2051 = vunpack.c.h.b16 %v1954
    %v2052 = vunpack.c.l.b16 %v1955
    %v2053 = vunpack.c.h.b16 %v1955
    %v2054 = vunpack.c.l.b16 %v1956
    %v2055 = vunpack.c.h.b16 %v1956
    %v2056 = vunpack.c.l.b16 %v1957
    %v2057 = vunpack.c.h.b16 %v1957
    %v2058 = vunpack.c.l.b16 %v1958
    %v2059 = vunpack.c.h.b16 %v1958
    %v2060 = vunpack.c.l.b16 %v1959
    %v2061 = vunpack.c.h.b16 %v1959
    %v2062 = vunpack.c.l.b16 %v1960
    %v2063 = vunpack.c.h.b16 %v1960
    %v2064 = vunpack.c.l.b16 %v1961
    %v2065 = vunpack.c.h.b16 %v1961
    %v2066 = vunpack.c.l.b16 %v1962
    %v2067 = vunpack.c.h.b16 %v1962
    %v2068 = vpack.c.b16 %v2008, %v2004
    %v2069 = vpack.c.b16 %v2009, %v2005
    %v2070 = vpack.c.b16 %v2010, %v2006
    %v2071 = vpack.c.b16 %v2011, %v2007
    %v2072 = vpack.c.b16 %v2016, %v2012
    %v2073 = vpack.c.b16 %v2017, %v2013
    %v2074 = vpack.c.b16 %v2018, %v2014
    %v2075 = vpack.c.b16 %v2019, %v2015
    %v2076 = vpack.c.b16 %v2024, %v2020
    %v2077 = vpack.c.b16 %v2025, %v2021
    %v2078 = vpack.c.b16 %v2026, %v2022
    %v2079 = vpack.c.b16 %v2027, %v2023
    %v2080 = vpack.c.b16 %v2032, %v2028
    %v2081 = vpack.c.b16 %v2033, %v2029
    %v2082 = vpack.c.b16 %v2034, %v2030
    %v2083 = vpack.c.b16 %v2035, %v2031
    %v2084 = vpack.c.b16 %v2040, %v2036
    %v2085 = vpack.c.b16 %v2041, %v2037
    %v2086 = vpack.c.b16 %v2042, %v2038
    %v2087 = vpack.c.b16 %v2043, %v2039
    %v2088 = vpack.c.b16 %v2048, %v2044
    %v2089 = vpack.c.b16 %v2049, %v2045
    %v2090 = vpack.c.b16 %v2050, %v2046
    %v2091 = vpack.c.b16 %v2051, %v2047
    %v2092 = vpack.c.b16 %v2056, %v2052
    %v2093 = vpack.c.b16 %v2057, %v2053
    %v2094 = vpack.c.b16 %v2058, %v2054
    %v2095 = vpack.c.b16 %v2059, %v2055
    %v2096 = vpack.c.b16 %v2064, %v2060
    %v2097 = vpack.c.b16 %v2065, %v2061
    %v2098 = vpack.c.b16 %v2066, %v2062
    %v2099 = vpack.c.b16 %v2067, %v2063
    %2132 = vmatprep.subr.bf16.mxu0 %v2097
    %2133 = vmatpush1.bf16.msra.mxu0 %v2096
    %2134 = vmatprep.subr.bf16.mxu0 %v2093
    %2135 = vmatpush1.bf16.msra.mxu0 %v2092
    %2136 = vmatprep.subr.bf16.mxu0 %v2089
    %2137 = vmatpush1.bf16.msra.mxu0 %v2088
    %2138 = vmatprep.subr.bf16.mxu0 %v2085
    %2139 = vmatpush1.bf16.msra.mxu0 %v2084
    %2140 = vmatprep.subr.bf16.mxu0 %v2081
    %2141 = vmatpush1.bf16.msra.mxu0 %v2080
    %2142 = vmatprep.subr.bf16.mxu0 %v2077
    %2143 = vmatpush1.bf16.msra.mxu0 %v2076
    %2144 = vmatprep.subr.bf16.mxu0 %v2073
    %2145 = vmatpush1.bf16.msra.mxu0 %v2072
    %2146 = vmatprep.subr.bf16.mxu0 %v2069
    %2147 = vmatpush1.bf16.msra.mxu0 %v2068
    %2148 = vmatprep.subr.bf16.mxu0 0
    %2149 = vmatpush2.bf16.msra.mxu0 0
    %2150 = vmatprep.subr.bf16.mxu0 0
    %2151 = vmatpush2.bf16.msra.mxu0 0
    %2152 = vmatprep.subr.bf16.mxu0 0
    %2153 = vmatpush2.bf16.msra.mxu0 0
    %2154 = vmatprep.subr.bf16.mxu0 0
    %2155 = vmatpush2.bf16.msra.mxu0 0
    %2156 = vmatprep.subr.bf16.mxu0 0
    %2157 = vmatpush2.bf16.msra.mxu0 0
    %2158 = vmatprep.subr.bf16.mxu0 0
    %2159 = vmatpush2.bf16.msra.mxu0 0
    %2160 = vmatprep.subr.bf16.mxu0 0
    %2161 = vmatpush2.bf16.msra.mxu0 0
    %2162 = vmatprep.subr.bf16.mxu0 0
    %2163 = vmatpush2.bf16.msra.mxu0 0
    %2164 = vmatprep.mubr.bf16.mxu0 0
    %2165 = vmatmul.mubr.bf16.gmra.mxu0 %v1971
    %v2166 = vpop.f32.mrf.mxu0
    %v2167 = vadd.f32 0.0, %v2166
    %v2168 = vpop.f32.mrf.mxu0
    %v2169 = vadd.f32 0.0, %v2168
    %v2170 = vpop.f32.mrf.mxu0
    %v2171 = vpop.f32.mrf.mxu0
    %2172 = vdwg.mxu0
    %2173 = vmatprep.subr.bf16.mxu0 %v2099
    %2174 = vmatpush1.bf16.msra.mxu0 %v2098
    %2175 = vmatprep.subr.bf16.mxu0 %v2095
    %2176 = vmatpush1.bf16.msra.mxu0 %v2094
    %2177 = vmatprep.subr.bf16.mxu0 %v2091
    %2178 = vmatpush1.bf16.msra.mxu0 %v2090
    %2179 = vmatprep.subr.bf16.mxu0 %v2087
    %2180 = vmatpush1.bf16.msra.mxu0 %v2086
    %2181 = vmatprep.subr.bf16.mxu0 %v2083
    %2182 = vmatpush1.bf16.msra.mxu0 %v2082
    %2183 = vmatprep.subr.bf16.mxu0 %v2079
    %2184 = vmatpush1.bf16.msra.mxu0 %v2078
    %2185 = vmatprep.subr.bf16.mxu0 %v2075
    %2186 = vmatpush1.bf16.msra.mxu0 %v2074
    %2187 = vmatprep.subr.bf16.mxu0 %v2071
    %2188 = vmatpush1.bf16.msra.mxu0 %v2070
    %2189 = vmatprep.subr.bf16.mxu0 0
    %2190 = vmatpush2.bf16.msra.mxu0 0
    %2191 = vmatprep.subr.bf16.mxu0 0
    %2192 = vmatpush2.bf16.msra.mxu0 0
    %2193 = vmatprep.subr.bf16.mxu0 0
    %2194 = vmatpush2.bf16.msra.mxu0 0
    %2195 = vmatprep.subr.bf16.mxu0 0
    %2196 = vmatpush2.bf16.msra.mxu0 0
    %2197 = vmatprep.subr.bf16.mxu0 0
    %2198 = vmatpush2.bf16.msra.mxu0 0
    %2199 = vmatprep.subr.bf16.mxu0 0
    %2200 = vmatpush2.bf16.msra.mxu0 0
    %2201 = vmatprep.subr.bf16.mxu0 0
    %2202 = vmatpush2.bf16.msra.mxu0 0
    %2203 = vmatprep.subr.bf16.mxu0 0
    %2204 = vmatpush2.bf16.msra.mxu0 0
    %2205 = vmatprep.mubr.bf16.mxu0 0
    %2206 = vmatmul.mubr.bf16.gmra.mxu0 %v1971
    %v2207 = vpop.f32.mrf.mxu0
    %v2208 = vadd.f32 0.0, %v2207
    %v2209 = vpop.f32.mrf.mxu0
    %v2210 = vadd.f32 0.0, %v2209
    %v2211 = vpop.f32.mrf.mxu0
    %v2212 = vpop.f32.mrf.mxu0
    %2213 = vdwg.mxu0
    %v2214 = vadd.f32 %v1967, %v2167
    %v2215 = vadd.f32 %v1968, %v2169
    %v2216 = vadd.f32 %v1969, %v2208
    %v2217 = vadd.f32 %v1970, %v2210
    %v2218 = vxor.u32 %v2214, 2147483648
    %v2219 = vxor.u32 %v2215, 2147483648
    %v2220 = vxor.u32 %v2216, 2147483648
    %v2221 = vmul.f32 %v2218, 1.442695
    %v2222 = vpow.pop %v2221
    %v2223 = vmul.f32 %v2219, 1.442695
    %v2224 = vpow.pop %v2223
    %v2225 = vmul.f32 %v2220, 1.442695
    %v2226 = vpow.pop %v2225
    %v2227 = vadd.f32 %v2222, 1.0
    %v2228 = vadd.f32 %v2224, 1.0
    %v2229 = vadd.f32 %v2226, 1.0
    %v2230 = vrcp.pop %v2227
    %v2231 = vmul.f32 1.0, %v2230
    %v2232 = vrcp.pop %v2228
    %v2233 = vmul.f32 1.0, %v2232
    %v2234 = vrcp.pop %v2229
    %v2235 = vmul.f32 1.0, %v2234
    %v2236 = vtanh.pop %v2217
    %v2237 = vmul.f32 %v2233, %v1966
    %v2238 = vmul.f32 %v2231, %v2236
    %v2239 = vadd.f32 %v2237, %v2238
    %v2240 = vtanh.pop %v2239
    %v2241 = vmul.f32 %v2235, %v2240
    %v2242 = vld [vmem:[%s669] sm:$0xff]
    %v2243 = vld [vmem:[%s669 + $0x8] sm:$0xff]
    %v2244 = vld [vmem:[%s669 + $0x10] sm:$0xff]
    %v2245 = vld [vmem:[%s669 + $0x18] sm:$0xff]
    %v2246 = vpack.c.bf16 %v2241, %v2241
    %2247 = vmatprep.subr.bf16.mxu0 %v2097
    %2248 = vmatpush1.bf16.msra.mxu0 %v2096
    %2249 = vmatprep.subr.bf16.mxu0 %v2093
    %2250 = vmatpush1.bf16.msra.mxu0 %v2092
    %2251 = vmatprep.subr.bf16.mxu0 %v2089
    %2252 = vmatpush1.bf16.msra.mxu0 %v2088
    %2253 = vmatprep.subr.bf16.mxu0 %v2085
    %2254 = vmatpush1.bf16.msra.mxu0 %v2084
    %2255 = vmatprep.subr.bf16.mxu0 %v2081
    %2256 = vmatpush1.bf16.msra.mxu0 %v2080
    %2257 = vmatprep.subr.bf16.mxu0 %v2077
    %2258 = vmatpush1.bf16.msra.mxu0 %v2076
    %2259 = vmatprep.subr.bf16.mxu0 %v2073
    %2260 = vmatpush1.bf16.msra.mxu0 %v2072
    %2261 = vmatprep.subr.bf16.mxu0 %v2069
    %2262 = vmatpush1.bf16.msra.mxu0 %v2068
    %2263 = vmatprep.subr.bf16.mxu0 0
    %2264 = vmatpush2.bf16.msra.mxu0 0
    %2265 = vmatprep.subr.bf16.mxu0 0
    %2266 = vmatpush2.bf16.msra.mxu0 0
    %2267 = vmatprep.subr.bf16.mxu0 0
    %2268 = vmatpush2.bf16.msra.mxu0 0
    %2269 = vmatprep.subr.bf16.mxu0 0
    %2270 = vmatpush2.bf16.msra.mxu0 0
    %2271 = vmatprep.subr.bf16.mxu0 0
    %2272 = vmatpush2.bf16.msra.mxu0 0
    %2273 = vmatprep.subr.bf16.mxu0 0
    %2274 = vmatpush2.bf16.msra.mxu0 0
    %2275 = vmatprep.subr.bf16.mxu0 0
    %2276 = vmatpush2.bf16.msra.mxu0 0
    %2277 = vmatprep.subr.bf16.mxu0 0
    %2278 = vmatpush2.bf16.msra.mxu0 0
    %2279 = vmatprep.mubr.bf16.mxu0 0
    %2280 = vmatmul.mubr.bf16.gmra.mxu0 %v2246
    %v2281 = vpop.f32.mrf.mxu0
    %v2282 = vadd.f32 0.0, %v2281
    %v2283 = vpop.f32.mrf.mxu0
    %v2284 = vadd.f32 0.0, %v2283
    %v2285 = vpop.f32.mrf.mxu0
    %v2286 = vpop.f32.mrf.mxu0
    %2287 = vdwg.mxu0
    %2288 = vmatprep.subr.bf16.mxu0 %v2099
    %2289 = vmatpush1.bf16.msra.mxu0 %v2098
    %2290 = vmatprep.subr.bf16.mxu0 %v2095
    %2291 = vmatpush1.bf16.msra.mxu0 %v2094
    %2292 = vmatprep.subr.bf16.mxu0 %v2091
    %2293 = vmatpush1.bf16.msra.mxu0 %v2090
    %2294 = vmatprep.subr.bf16.mxu0 %v2087
    %2295 = vmatpush1.bf16.msra.mxu0 %v2086
    %2296 = vmatprep.subr.bf16.mxu0 %v2083
    %2297 = vmatpush1.bf16.msra.mxu0 %v2082
    %2298 = vmatprep.subr.bf16.mxu0 %v2079
    %2299 = vmatpush1.bf16.msra.mxu0 %v2078
    %2300 = vmatprep.subr.bf16.mxu0 %v2075
    %2301 = vmatpush1.bf16.msra.mxu0 %v2074
    %2302 = vmatprep.subr.bf16.mxu0 %v2071
    %2303 = vmatpush1.bf16.msra.mxu0 %v2070
    %2304 = vmatprep.subr.bf16.mxu0 0
    %2305 = vmatpush2.bf16.msra.mxu0 0
    %2306 = vmatprep.subr.bf16.mxu0 0
    %2307 = vmatpush2.bf16.msra.mxu0 0
    %2308 = vmatprep.subr.bf16.mxu0 0
    %2309 = vmatpush2.bf16.msra.mxu0 0
    %2310 = vmatprep.subr.bf16.mxu0 0
    %2311 = vmatpush2.bf16.msra.mxu0 0
    %2312 = vmatprep.subr.bf16.mxu0 0
    %2313 = vmatpush2.bf16.msra.mxu0 0
    %2314 = vmatprep.subr.bf16.mxu0 0
    %2315 = vmatpush2.bf16.msra.mxu0 0
    %2316 = vmatprep.subr.bf16.mxu0 0
    %2317 = vmatpush2.bf16.msra.mxu0 0
    %2318 = vmatprep.subr.bf16.mxu0 0
    %2319 = vmatpush2.bf16.msra.mxu0 0
    %2320 = vmatprep.mubr.bf16.mxu0 0
    %2321 = vmatmul.mubr.bf16.gmra.mxu0 %v2246
    %v2322 = vpop.f32.mrf.mxu0
    %v2323 = vadd.f32 0.0, %v2322
    %v2324 = vpop.f32.mrf.mxu0
    %v2325 = vadd.f32 0.0, %v2324
    %v2326 = vpop.f32.mrf.mxu0
    %v2327 = vpop.f32.mrf.mxu0
    %2328 = vdwg.mxu0
    %v2329 = vadd.f32 %v2242, %v2282
    %v2330 = vadd.f32 %v2243, %v2284
    %v2331 = vadd.f32 %v2244, %v2323
    %v2332 = vadd.f32 %v2245, %v2325
    %v2333 = vxor.u32 %v2329, 2147483648
    %v2334 = vxor.u32 %v2330, 2147483648
    %v2335 = vxor.u32 %v2331, 2147483648
    %v2336 = vmul.f32 %v2333, 1.442695
    %v2337 = vpow.pop %v2336
    %v2338 = vmul.f32 %v2334, 1.442695
    %v2339 = vpow.pop %v2338
    %v2340 = vmul.f32 %v2335, 1.442695
    %v2341 = vpow.pop %v2340
    %v2342 = vadd.f32 %v2337, 1.0
    %v2343 = vadd.f32 %v2339, 1.0
    %v2344 = vadd.f32 %v2341, 1.0
    %v2345 = vrcp.pop %v2342
    %v2346 = vmul.f32 1.0, %v2345
    %v2347 = vrcp.pop %v2343
    %v2348 = vmul.f32 1.0, %v2347
    %v2349 = vrcp.pop %v2344
    %v2350 = vmul.f32 1.0, %v2349
    %v2351 = vtanh.pop %v2332
    %v2352 = vmul.f32 %v2348, %v2239
    %v2353 = vmul.f32 %v2346, %v2351
    %v2354 = vadd.f32 %v2352, %v2353
    %v2355 = vtanh.pop %v2354
    %v2356 = vmul.f32 %v2350, %v2355
    %v2357 = vld [vmem:[%s789] sm:$0xff]
    %v2358 = vld [vmem:[%s789 + $0x8] sm:$0xff]
    %v2359 = vld [vmem:[%s789 + $0x10] sm:$0xff]
    %v2360 = vld [vmem:[%s789 + $0x18] sm:$0xff]
    %v2361 = vpack.c.bf16 %v2356, %v2356
    %2362 = vmatprep.subr.bf16.mxu0 %v2097
    %2363 = vmatpush1.bf16.msra.mxu0 %v2096
    %2364 = vmatprep.subr.bf16.mxu0 %v2093
    %2365 = vmatpush1.bf16.msra.mxu0 %v2092
    %2366 = vmatprep.subr.bf16.mxu0 %v2089
    %2367 = vmatpush1.bf16.msra.mxu0 %v2088
    %2368 = vmatprep.subr.bf16.mxu0 %v2085
    %2369 = vmatpush1.bf16.msra.mxu0 %v2084
    %2370 = vmatprep.subr.bf16.mxu0 %v2081
    %2371 = vmatpush1.bf16.msra.mxu0 %v2080
    %2372 = vmatprep.subr.bf16.mxu0 %v2077
    %2373 = vmatpush1.bf16.msra.mxu0 %v2076
    %2374 = vmatprep.subr.bf16.mxu0 %v2073
    %2375 = vmatpush1.bf16.msra.mxu0 %v2072
    %2376 = vmatprep.subr.bf16.mxu0 %v2069
    %2377 = vmatpush1.bf16.msra.mxu0 %v2068
    %2378 = vmatprep.subr.bf16.mxu0 0
    %2379 = vmatpush2.bf16.msra.mxu0 0
    %2380 = vmatprep.subr.bf16.mxu0 0
    %2381 = vmatpush2.bf16.msra.mxu0 0
    %2382 = vmatprep.subr.bf16.mxu0 0
    %2383 = vmatpush2.bf16.msra.mxu0 0
    %2384 = vmatprep.subr.bf16.mxu0 0
    %2385 = vmatpush2.bf16.msra.mxu0 0
    %2386 = vmatprep.subr.bf16.mxu0 0
    %2387 = vmatpush2.bf16.msra.mxu0 0
    %2388 = vmatprep.subr.bf16.mxu0 0
    %2389 = vmatpush2.bf16.msra.mxu0 0
    %2390 = vmatprep.subr.bf16.mxu0 0
    %2391 = vmatpush2.bf16.msra.mxu0 0
    %2392 = vmatprep.subr.bf16.mxu0 0
    %2393 = vmatpush2.bf16.msra.mxu0 0
    %2394 = vmatprep.mubr.bf16.mxu0 0
    %2395 = vmatmul.mubr.bf16.gmra.mxu0 %v2361
    %v2396 = vpop.f32.mrf.mxu0
    %v2397 = vadd.f32 0.0, %v2396
    %v2398 = vpop.f32.mrf.mxu0
    %v2399 = vadd.f32 0.0, %v2398
    %v2400 = vpop.f32.mrf.mxu0
    %v2401 = vpop.f32.mrf.mxu0
    %2402 = vdwg.mxu0
    %2403 = vmatprep.subr.bf16.mxu0 %v2099
    %2404 = vmatpush1.bf16.msra.mxu0 %v2098
    %2405 = vmatprep.subr.bf16.mxu0 %v2095
    %2406 = vmatpush1.bf16.msra.mxu0 %v2094
    %2407 = vmatprep.subr.bf16.mxu0 %v2091
    %2408 = vmatpush1.bf16.msra.mxu0 %v2090
    %2409 = vmatprep.subr.bf16.mxu0 %v2087
    %2410 = vmatpush1.bf16.msra.mxu0 %v2086
    %2411 = vmatprep.subr.bf16.mxu0 %v2083
    %2412 = vmatpush1.bf16.msra.mxu0 %v2082
    %2413 = vmatprep.subr.bf16.mxu0 %v2079
    %2414 = vmatpush1.bf16.msra.mxu0 %v2078
    %2415 = vmatprep.subr.bf16.mxu0 %v2075
    %2416 = vmatpush1.bf16.msra.mxu0 %v2074
    %2417 = vmatprep.subr.bf16.mxu0 %v2071
    %2418 = vmatpush1.bf16.msra.mxu0 %v2070
    %2419 = vmatprep.subr.bf16.mxu0 0
    %2420 = vmatpush2.bf16.msra.mxu0 0
    %2421 = vmatprep.subr.bf16.mxu0 0
    %2422 = vmatpush2.bf16.msra.mxu0 0
    %2423 = vmatprep.subr.bf16.mxu0 0
    %2424 = vmatpush2.bf16.msra.mxu0 0
    %2425 = vmatprep.subr.bf16.mxu0 0
    %2426 = vmatpush2.bf16.msra.mxu0 0
    %2427 = vmatprep.subr.bf16.mxu0 0
    %2428 = vmatpush2.bf16.msra.mxu0 0
    %2429 = vmatprep.subr.bf16.mxu0 0
    %2430 = vmatpush2.bf16.msra.mxu0 0
    %2431 = vmatprep.subr.bf16.mxu0 0
    %2432 = vmatpush2.bf16.msra.mxu0 0
    %2433 = vmatprep.subr.bf16.mxu0 0
    %2434 = vmatpush2.bf16.msra.mxu0 0
    %2435 = vmatprep.mubr.bf16.mxu0 0
    %2436 = vmatmul.mubr.bf16.gmra.mxu0 %v2361
    %v2437 = vpop.f32.mrf.mxu0
    %v2438 = vadd.f32 0.0, %v2437
    %v2439 = vpop.f32.mrf.mxu0
    %v2440 = vadd.f32 0.0, %v2439
    %v2441 = vpop.f32.mrf.mxu0
    %v2442 = vpop.f32.mrf.mxu0
    %2443 = vdwg.mxu0
    %v2444 = vadd.f32 %v2357, %v2397
    %v2445 = vadd.f32 %v2358, %v2399
    %v2446 = vadd.f32 %v2359, %v2438
    %v2447 = vadd.f32 %v2360, %v2440
    %v2448 = vxor.u32 %v2444, 2147483648
    %v2449 = vxor.u32 %v2445, 2147483648
    %v2450 = vxor.u32 %v2446, 2147483648
    %v2451 = vmul.f32 %v2448, 1.442695
    %v2452 = vpow.pop %v2451
    %v2453 = vmul.f32 %v2449, 1.442695
    %v2454 = vpow.pop %v2453
    %v2455 = vmul.f32 %v2450, 1.442695
    %v2456 = vpow.pop %v2455
    %v2457 = vadd.f32 %v2452, 1.0
    %v2458 = vadd.f32 %v2454, 1.0
    %v2459 = vadd.f32 %v2456, 1.0
    %v2460 = vrcp.pop %v2457
    %v2461 = vmul.f32 1.0, %v2460
    %v2462 = vrcp.pop %v2458
    %v2463 = vmul.f32 1.0, %v2462
    %v2464 = vrcp.pop %v2459
    %v2465 = vmul.f32 1.0, %v2464
    %v2466 = vtanh.pop %v2447
    %v2467 = vmul.f32 %v2463, %v2354
    %v2468 = vmul.f32 %v2461, %v2466
    %v2469 = vadd.f32 %v2467, %v2468
    %v2470 = vtanh.pop %v2469
    %v2471 = vmul.f32 %v2465, %v2470
    %v2472 = vld [vmem:[%s909] sm:$0xff]
    %v2473 = vld [vmem:[%s909 + $0x8] sm:$0xff]
    %v2474 = vld [vmem:[%s909 + $0x10] sm:$0xff]
    %v2475 = vld [vmem:[%s909 + $0x18] sm:$0xff]
    %v2476 = vpack.c.bf16 %v2471, %v2471
    %2477 = vmatprep.subr.bf16.mxu0 %v2097
    %2478 = vmatpush1.bf16.msra.mxu0 %v2096
    %2479 = vmatprep.subr.bf16.mxu0 %v2093
    %2480 = vmatpush1.bf16.msra.mxu0 %v2092
    %2481 = vmatprep.subr.bf16.mxu0 %v2089
    %2482 = vmatpush1.bf16.msra.mxu0 %v2088
    %2483 = vmatprep.subr.bf16.mxu0 %v2085
    %2484 = vmatpush1.bf16.msra.mxu0 %v2084
    %2485 = vmatprep.subr.bf16.mxu0 %v2081
    %2486 = vmatpush1.bf16.msra.mxu0 %v2080
    %2487 = vmatprep.subr.bf16.mxu0 %v2077
    %2488 = vmatpush1.bf16.msra.mxu0 %v2076
    %2489 = vmatprep.subr.bf16.mxu0 %v2073
    %2490 = vmatpush1.bf16.msra.mxu0 %v2072
    %2491 = vmatprep.subr.bf16.mxu0 %v2069
    %2492 = vmatpush1.bf16.msra.mxu0 %v2068
    %2493 = vmatprep.subr.bf16.mxu0 0
    %2494 = vmatpush2.bf16.msra.mxu0 0
    %2495 = vmatprep.subr.bf16.mxu0 0
    %2496 = vmatpush2.bf16.msra.mxu0 0
    %2497 = vmatprep.subr.bf16.mxu0 0
    %2498 = vmatpush2.bf16.msra.mxu0 0
    %2499 = vmatprep.subr.bf16.mxu0 0
    %2500 = vmatpush2.bf16.msra.mxu0 0
    %2501 = vmatprep.subr.bf16.mxu0 0
    %2502 = vmatpush2.bf16.msra.mxu0 0
    %2503 = vmatprep.subr.bf16.mxu0 0
    %2504 = vmatpush2.bf16.msra.mxu0 0
    %2505 = vmatprep.subr.bf16.mxu0 0
    %2506 = vmatpush2.bf16.msra.mxu0 0
    %2507 = vmatprep.subr.bf16.mxu0 0
    %2508 = vmatpush2.bf16.msra.mxu0 0
    %2509 = vmatprep.mubr.bf16.mxu0 0
    %2510 = vmatmul.mubr.bf16.gmra.mxu0 %v2476
    %v2511 = vpop.f32.mrf.mxu0
    %v2512 = vadd.f32 0.0, %v2511
    %v2513 = vpop.f32.mrf.mxu0
    %v2514 = vadd.f32 0.0, %v2513
    %v2515 = vpop.f32.mrf.mxu0
    %v2516 = vpop.f32.mrf.mxu0
    %2517 = vdwg.mxu0
    %2518 = vmatprep.subr.bf16.mxu0 %v2099
    %2519 = vmatpush1.bf16.msra.mxu0 %v2098
    %2520 = vmatprep.subr.bf16.mxu0 %v2095
    %2521 = vmatpush1.bf16.msra.mxu0 %v2094
    %2522 = vmatprep.subr.bf16.mxu0 %v2091
    %2523 = vmatpush1.bf16.msra.mxu0 %v2090
    %2524 = vmatprep.subr.bf16.mxu0 %v2087
    %2525 = vmatpush1.bf16.msra.mxu0 %v2086
    %2526 = vmatprep.subr.bf16.mxu0 %v2083
    %2527 = vmatpush1.bf16.msra.mxu0 %v2082
    %2528 = vmatprep.subr.bf16.mxu0 %v2079
    %2529 = vmatpush1.bf16.msra.mxu0 %v2078
    %2530 = vmatprep.subr.bf16.mxu0 %v2075
    %2531 = vmatpush1.bf16.msra.mxu0 %v2074
    %2532 = vmatprep.subr.bf16.mxu0 %v2071
    %2533 = vmatpush1.bf16.msra.mxu0 %v2070
    %2534 = vmatprep.subr.bf16.mxu0 0
    %2535 = vmatpush2.bf16.msra.mxu0 0
    %2536 = vmatprep.subr.bf16.mxu0 0
    %2537 = vmatpush2.bf16.msra.mxu0 0
    %2538 = vmatprep.subr.bf16.mxu0 0
    %2539 = vmatpush2.bf16.msra.mxu0 0
    %2540 = vmatprep.subr.bf16.mxu0 0
    %2541 = vmatpush2.bf16.msra.mxu0 0
    %2542 = vmatprep.subr.bf16.mxu0 0
    %2543 = vmatpush2.bf16.msra.mxu0 0
    %2544 = vmatprep.subr.bf16.mxu0 0
    %2545 = vmatpush2.bf16.msra.mxu0 0
    %2546 = vmatprep.subr.bf16.mxu0 0
    %2547 = vmatpush2.bf16.msra.mxu0 0
    %2548 = vmatprep.subr.bf16.mxu0 0
    %2549 = vmatpush2.bf16.msra.mxu0 0
    %2550 = vmatprep.mubr.bf16.mxu0 0
    %2551 = vmatmul.mubr.bf16.gmra.mxu0 %v2476
    %v2552 = vpop.f32.mrf.mxu0
    %v2553 = vadd.f32 0.0, %v2552
    %v2554 = vpop.f32.mrf.mxu0
    %v2555 = vadd.f32 0.0, %v2554
    %v2556 = vpop.f32.mrf.mxu0
    %v2557 = vpop.f32.mrf.mxu0
    %2558 = vdwg.mxu0
    %v2559 = vadd.f32 %v2472, %v2512
    %v2560 = vadd.f32 %v2473, %v2514
    %v2561 = vadd.f32 %v2474, %v2553
    %v2562 = vadd.f32 %v2475, %v2555
    %v2563 = vxor.u32 %v2559, 2147483648
    %v2564 = vxor.u32 %v2560, 2147483648
    %v2565 = vxor.u32 %v2561, 2147483648
    %v2566 = vmul.f32 %v2563, 1.442695
    %v2567 = vpow.pop %v2566
    %v2568 = vmul.f32 %v2564, 1.442695
    %v2569 = vpow.pop %v2568
    %v2570 = vmul.f32 %v2565, 1.442695
    %v2571 = vpow.pop %v2570
    %v2572 = vadd.f32 %v2567, 1.0
    %v2573 = vadd.f32 %v2569, 1.0
    %v2574 = vadd.f32 %v2571, 1.0
    %v2575 = vrcp.pop %v2572
    %v2576 = vmul.f32 1.0, %v2575
    %v2577 = vrcp.pop %v2573
    %v2578 = vmul.f32 1.0, %v2577
    %v2579 = vrcp.pop %v2574
    %v2580 = vmul.f32 1.0, %v2579
    %v2581 = vtanh.pop %v2562
    %v2582 = vmul.f32 %v2578, %v2469
    %v2583 = vmul.f32 %v2576, %v2581
    %v2584 = vadd.f32 %v2582, %v2583
    %v2585 = vtanh.pop %v2584
    %v2586 = vmul.f32 %v2580, %v2585
    %v2587 = vld [vmem:[%s1029] sm:$0xff]
    %v2588 = vld [vmem:[%s1029 + $0x8] sm:$0xff]
    %v2589 = vld [vmem:[%s1029 + $0x10] sm:$0xff]
    %v2590 = vld [vmem:[%s1029 + $0x18] sm:$0xff]
    %v2591 = vpack.c.bf16 %v2586, %v2586
    %2592 = vmatprep.subr.bf16.mxu0 %v2097
    %2593 = vmatpush1.bf16.msra.mxu0 %v2096
    %2594 = vmatprep.subr.bf16.mxu0 %v2093
    %2595 = vmatpush1.bf16.msra.mxu0 %v2092
    %2596 = vmatprep.subr.bf16.mxu0 %v2089
    %2597 = vmatpush1.bf16.msra.mxu0 %v2088
    %2598 = vmatprep.subr.bf16.mxu0 %v2085
    %2599 = vmatpush1.bf16.msra.mxu0 %v2084
    %2600 = vmatprep.subr.bf16.mxu0 %v2081
    %2601 = vmatpush1.bf16.msra.mxu0 %v2080
    %2602 = vmatprep.subr.bf16.mxu0 %v2077
    %2603 = vmatpush1.bf16.msra.mxu0 %v2076
    %2604 = vmatprep.subr.bf16.mxu0 %v2073
    %2605 = vmatpush1.bf16.msra.mxu0 %v2072
    %2606 = vmatprep.subr.bf16.mxu0 %v2069
    %2607 = vmatpush1.bf16.msra.mxu0 %v2068
    %2608 = vmatprep.subr.bf16.mxu0 0
    %2609 = vmatpush2.bf16.msra.mxu0 0
    %2610 = vmatprep.subr.bf16.mxu0 0
    %2611 = vmatpush2.bf16.msra.mxu0 0
    %2612 = vmatprep.subr.bf16.mxu0 0
    %2613 = vmatpush2.bf16.msra.mxu0 0
    %2614 = vmatprep.subr.bf16.mxu0 0
    %2615 = vmatpush2.bf16.msra.mxu0 0
    %2616 = vmatprep.subr.bf16.mxu0 0
    %2617 = vmatpush2.bf16.msra.mxu0 0
    %2618 = vmatprep.subr.bf16.mxu0 0
    %2619 = vmatpush2.bf16.msra.mxu0 0
    %2620 = vmatprep.subr.bf16.mxu0 0
    %2621 = vmatpush2.bf16.msra.mxu0 0
    %2622 = vmatprep.subr.bf16.mxu0 0
    %2623 = vmatpush2.bf16.msra.mxu0 0
    %2624 = vmatprep.mubr.bf16.mxu0 0
    %2625 = vmatmul.mubr.bf16.gmra.mxu0 %v2591
    %v2626 = vpop.f32.mrf.mxu0
    %v2627 = vadd.f32 0.0, %v2626
    %v2628 = vpop.f32.mrf.mxu0
    %v2629 = vadd.f32 0.0, %v2628
    %v2630 = vpop.f32.mrf.mxu0
    %v2631 = vpop.f32.mrf.mxu0
    %2632 = vdwg.mxu0
    %2633 = vmatprep.subr.bf16.mxu0 %v2099
    %2634 = vmatpush1.bf16.msra.mxu0 %v2098
    %2635 = vmatprep.subr.bf16.mxu0 %v2095
    %2636 = vmatpush1.bf16.msra.mxu0 %v2094
    %2637 = vmatprep.subr.bf16.mxu0 %v2091
    %2638 = vmatpush1.bf16.msra.mxu0 %v2090
    %2639 = vmatprep.subr.bf16.mxu0 %v2087
    %2640 = vmatpush1.bf16.msra.mxu0 %v2086
    %2641 = vmatprep.subr.bf16.mxu0 %v2083
    %2642 = vmatpush1.bf16.msra.mxu0 %v2082
    %2643 = vmatprep.subr.bf16.mxu0 %v2079
    %2644 = vmatpush1.bf16.msra.mxu0 %v2078
    %2645 = vmatprep.subr.bf16.mxu0 %v2075
    %2646 = vmatpush1.bf16.msra.mxu0 %v2074
    %2647 = vmatprep.subr.bf16.mxu0 %v2071
    %2648 = vmatpush1.bf16.msra.mxu0 %v2070
    %2649 = vmatprep.subr.bf16.mxu0 0
    %2650 = vmatpush2.bf16.msra.mxu0 0
    %2651 = vmatprep.subr.bf16.mxu0 0
    %2652 = vmatpush2.bf16.msra.mxu0 0
    %2653 = vmatprep.subr.bf16.mxu0 0
    %2654 = vmatpush2.bf16.msra.mxu0 0
    %2655 = vmatprep.subr.bf16.mxu0 0
    %2656 = vmatpush2.bf16.msra.mxu0 0
    %2657 = vmatprep.subr.bf16.mxu0 0
    %2658 = vmatpush2.bf16.msra.mxu0 0
    %2659 = vmatprep.subr.bf16.mxu0 0
    %2660 = vmatpush2.bf16.msra.mxu0 0
    %2661 = vmatprep.subr.bf16.mxu0 0
    %2662 = vmatpush2.bf16.msra.mxu0 0
    %2663 = vmatprep.subr.bf16.mxu0 0
    %2664 = vmatpush2.bf16.msra.mxu0 0
    %2665 = vmatprep.mubr.bf16.mxu0 0
    %2666 = vmatmul.mubr.bf16.gmra.mxu0 %v2591
    %v2667 = vpop.f32.mrf.mxu0
    %v2668 = vadd.f32 0.0, %v2667
    %v2669 = vpop.f32.mrf.mxu0
    %v2670 = vadd.f32 0.0, %v2669
    %v2671 = vpop.f32.mrf.mxu0
    %v2672 = vpop.f32.mrf.mxu0
    %2673 = vdwg.mxu0
    %v2674 = vadd.f32 %v2587, %v2627
    %v2675 = vadd.f32 %v2588, %v2629
    %v2676 = vadd.f32 %v2589, %v2668
    %v2677 = vadd.f32 %v2590, %v2670
    %v2678 = vxor.u32 %v2674, 2147483648
    %v2679 = vxor.u32 %v2675, 2147483648
    %v2680 = vxor.u32 %v2676, 2147483648
    %v2681 = vmul.f32 %v2678, 1.442695
    %v2682 = vpow.pop %v2681
    %v2683 = vmul.f32 %v2679, 1.442695
    %v2684 = vpow.pop %v2683
    %v2685 = vmul.f32 %v2680, 1.442695
    %v2686 = vpow.pop %v2685
    %v2687 = vadd.f32 %v2682, 1.0
    %v2688 = vadd.f32 %v2684, 1.0
    %v2689 = vadd.f32 %v2686, 1.0
    %v2690 = vrcp.pop %v2687
    %v2691 = vmul.f32 1.0, %v2690
    %v2692 = vrcp.pop %v2688
    %v2693 = vmul.f32 1.0, %v2692
    %v2694 = vrcp.pop %v2689
    %v2695 = vmul.f32 1.0, %v2694
    %v2696 = vtanh.pop %v2677
    %v2697 = vmul.f32 %v2693, %v2584
    %v2698 = vmul.f32 %v2691, %v2696
    %v2699 = vadd.f32 %v2697, %v2698
    %v2700 = vtanh.pop %v2699
    %v2701 = vmul.f32 %v2695, %v2700
    %v2702 = vld [vmem:[%s1149] sm:$0xff]
    %v2703 = vld [vmem:[%s1149 + $0x8] sm:$0xff]
    %v2704 = vld [vmem:[%s1149 + $0x10] sm:$0xff]
    %v2705 = vld [vmem:[%s1149 + $0x18] sm:$0xff]
    %v2706 = vpack.c.bf16 %v2701, %v2701
    %2707 = vmatprep.subr.bf16.mxu0 %v2097
    %2708 = vmatpush1.bf16.msra.mxu0 %v2096
    %2709 = vmatprep.subr.bf16.mxu0 %v2093
    %2710 = vmatpush1.bf16.msra.mxu0 %v2092
    %2711 = vmatprep.subr.bf16.mxu0 %v2089
    %2712 = vmatpush1.bf16.msra.mxu0 %v2088
    %2713 = vmatprep.subr.bf16.mxu0 %v2085
    %2714 = vmatpush1.bf16.msra.mxu0 %v2084
    %2715 = vmatprep.subr.bf16.mxu0 %v2081
    %2716 = vmatpush1.bf16.msra.mxu0 %v2080
    %2717 = vmatprep.subr.bf16.mxu0 %v2077
    %2718 = vmatpush1.bf16.msra.mxu0 %v2076
    %2719 = vmatprep.subr.bf16.mxu0 %v2073
    %2720 = vmatpush1.bf16.msra.mxu0 %v2072
    %2721 = vmatprep.subr.bf16.mxu0 %v2069
    %2722 = vmatpush1.bf16.msra.mxu0 %v2068
    %2723 = vmatprep.subr.bf16.mxu0 0
    %2724 = vmatpush2.bf16.msra.mxu0 0
    %2725 = vmatprep.subr.bf16.mxu0 0
    %2726 = vmatpush2.bf16.msra.mxu0 0
    %2727 = vmatprep.subr.bf16.mxu0 0
    %2728 = vmatpush2.bf16.msra.mxu0 0
    %2729 = vmatprep.subr.bf16.mxu0 0
    %2730 = vmatpush2.bf16.msra.mxu0 0
    %2731 = vmatprep.subr.bf16.mxu0 0
    %2732 = vmatpush2.bf16.msra.mxu0 0
    %2733 = vmatprep.subr.bf16.mxu0 0
    %2734 = vmatpush2.bf16.msra.mxu0 0
    %2735 = vmatprep.subr.bf16.mxu0 0
    %2736 = vmatpush2.bf16.msra.mxu0 0
    %2737 = vmatprep.subr.bf16.mxu0 0
    %2738 = vmatpush2.bf16.msra.mxu0 0
    %2739 = vmatprep.mubr.bf16.mxu0 0
    %2740 = vmatmul.mubr.bf16.gmra.mxu0 %v2706
    %v2741 = vpop.f32.mrf.mxu0
    %v2742 = vadd.f32 0.0, %v2741
    %v2743 = vpop.f32.mrf.mxu0
    %v2744 = vadd.f32 0.0, %v2743
    %v2745 = vpop.f32.mrf.mxu0
    %v2746 = vpop.f32.mrf.mxu0
    %2747 = vdwg.mxu0
    %2748 = vmatprep.subr.bf16.mxu0 %v2099
    %2749 = vmatpush1.bf16.msra.mxu0 %v2098
    %2750 = vmatprep.subr.bf16.mxu0 %v2095
    %2751 = vmatpush1.bf16.msra.mxu0 %v2094
    %2752 = vmatprep.subr.bf16.mxu0 %v2091
    %2753 = vmatpush1.bf16.msra.mxu0 %v2090
    %2754 = vmatprep.subr.bf16.mxu0 %v2087
    %2755 = vmatpush1.bf16.msra.mxu0 %v2086
    %2756 = vmatprep.subr.bf16.mxu0 %v2083
    %2757 = vmatpush1.bf16.msra.mxu0 %v2082
    %2758 = vmatprep.subr.bf16.mxu0 %v2079
    %2759 = vmatpush1.bf16.msra.mxu0 %v2078
    %2760 = vmatprep.subr.bf16.mxu0 %v2075
    %2761 = vmatpush1.bf16.msra.mxu0 %v2074
    %2762 = vmatprep.subr.bf16.mxu0 %v2071
    %2763 = vmatpush1.bf16.msra.mxu0 %v2070
    %2764 = vmatprep.subr.bf16.mxu0 0
    %2765 = vmatpush2.bf16.msra.mxu0 0
    %2766 = vmatprep.subr.bf16.mxu0 0
    %2767 = vmatpush2.bf16.msra.mxu0 0
    %2768 = vmatprep.subr.bf16.mxu0 0
    %2769 = vmatpush2.bf16.msra.mxu0 0
    %2770 = vmatprep.subr.bf16.mxu0 0
    %2771 = vmatpush2.bf16.msra.mxu0 0
    %2772 = vmatprep.subr.bf16.mxu0 0
    %2773 = vmatpush2.bf16.msra.mxu0 0
    %2774 = vmatprep.subr.bf16.mxu0 0
    %2775 = vmatpush2.bf16.msra.mxu0 0
    %2776 = vmatprep.subr.bf16.mxu0 0
    %2777 = vmatpush2.bf16.msra.mxu0 0
    %2778 = vmatprep.subr.bf16.mxu0 0
    %2779 = vmatpush2.bf16.msra.mxu0 0
    %2780 = vmatprep.mubr.bf16.mxu0 0
    %2781 = vmatmul.mubr.bf16.gmra.mxu0 %v2706
    %v2782 = vpop.f32.mrf.mxu0
    %v2783 = vadd.f32 0.0, %v2782
    %v2784 = vpop.f32.mrf.mxu0
    %v2785 = vadd.f32 0.0, %v2784
    %v2786 = vpop.f32.mrf.mxu0
    %v2787 = vpop.f32.mrf.mxu0
    %2788 = vdwg.mxu0
    %v2789 = vadd.f32 %v2702, %v2742
    %v2790 = vadd.f32 %v2703, %v2744
    %v2791 = vadd.f32 %v2704, %v2783
    %v2792 = vadd.f32 %v2705, %v2785
    %v2793 = vxor.u32 %v2789, 2147483648
    %v2794 = vxor.u32 %v2790, 2147483648
    %v2795 = vxor.u32 %v2791, 2147483648
    %v2796 = vmul.f32 %v2793, 1.442695
    %v2797 = vpow.pop %v2796
    %v2798 = vmul.f32 %v2794, 1.442695
    %v2799 = vpow.pop %v2798
    %v2800 = vmul.f32 %v2795, 1.442695
    %v2801 = vpow.pop %v2800
    %v2802 = vadd.f32 %v2797, 1.0
    %v2803 = vadd.f32 %v2799, 1.0
    %v2804 = vadd.f32 %v2801, 1.0
    %v2805 = vrcp.pop %v2802
    %v2806 = vmul.f32 1.0, %v2805
    %v2807 = vrcp.pop %v2803
    %v2808 = vmul.f32 1.0, %v2807
    %v2809 = vrcp.pop %v2804
    %v2810 = vmul.f32 1.0, %v2809
    %v2811 = vtanh.pop %v2792
    %v2812 = vmul.f32 %v2808, %v2699
    %v2813 = vmul.f32 %v2806, %v2811
    %v2814 = vadd.f32 %v2812, %v2813
    %v2815 = vtanh.pop %v2814
    %v2816 = vmul.f32 %v2810, %v2815
    %v2817 = vld [vmem:[%s1269] sm:$0xff]
    %v2818 = vld [vmem:[%s1269 + $0x8] sm:$0xff]
    %v2819 = vld [vmem:[%s1269 + $0x10] sm:$0xff]
    %v2820 = vld [vmem:[%s1269 + $0x18] sm:$0xff]
    %v2821 = vpack.c.bf16 %v2816, %v2816
    %2822 = vmatprep.subr.bf16.mxu0 %v2097
    %2823 = vmatpush1.bf16.msra.mxu0 %v2096
    %2824 = vmatprep.subr.bf16.mxu0 %v2093
    %2825 = vmatpush1.bf16.msra.mxu0 %v2092
    %2826 = vmatprep.subr.bf16.mxu0 %v2089
    %2827 = vmatpush1.bf16.msra.mxu0 %v2088
    %2828 = vmatprep.subr.bf16.mxu0 %v2085
    %2829 = vmatpush1.bf16.msra.mxu0 %v2084
    %2830 = vmatprep.subr.bf16.mxu0 %v2081
    %2831 = vmatpush1.bf16.msra.mxu0 %v2080
    %2832 = vmatprep.subr.bf16.mxu0 %v2077
    %2833 = vmatpush1.bf16.msra.mxu0 %v2076
    %2834 = vmatprep.subr.bf16.mxu0 %v2073
    %2835 = vmatpush1.bf16.msra.mxu0 %v2072
    %2836 = vmatprep.subr.bf16.mxu0 %v2069
    %2837 = vmatpush1.bf16.msra.mxu0 %v2068
    %2838 = vmatprep.subr.bf16.mxu0 0
    %2839 = vmatpush2.bf16.msra.mxu0 0
    %2840 = vmatprep.subr.bf16.mxu0 0
    %2841 = vmatpush2.bf16.msra.mxu0 0
    %2842 = vmatprep.subr.bf16.mxu0 0
    %2843 = vmatpush2.bf16.msra.mxu0 0
    %2844 = vmatprep.subr.bf16.mxu0 0
    %2845 = vmatpush2.bf16.msra.mxu0 0
    %2846 = vmatprep.subr.bf16.mxu0 0
    %2847 = vmatpush2.bf16.msra.mxu0 0
    %2848 = vmatprep.subr.bf16.mxu0 0
    %2849 = vmatpush2.bf16.msra.mxu0 0
    %2850 = vmatprep.subr.bf16.mxu0 0
    %2851 = vmatpush2.bf16.msra.mxu0 0
    %2852 = vmatprep.subr.bf16.mxu0 0
    %2853 = vmatpush2.bf16.msra.mxu0 0
    %2854 = vmatprep.mubr.bf16.mxu0 0
    %2855 = vmatmul.mubr.bf16.gmra.mxu0 %v2821
    %v2856 = vpop.f32.mrf.mxu0
    %v2857 = vadd.f32 0.0, %v2856
    %v2858 = vpop.f32.mrf.mxu0
    %v2859 = vadd.f32 0.0, %v2858
    %v2860 = vpop.f32.mrf.mxu0
    %v2861 = vpop.f32.mrf.mxu0
    %2862 = vdwg.mxu0
    %2863 = vmatprep.subr.bf16.mxu0 %v2099
    %2864 = vmatpush1.bf16.msra.mxu0 %v2098
    %2865 = vmatprep.subr.bf16.mxu0 %v2095
    %2866 = vmatpush1.bf16.msra.mxu0 %v2094
    %2867 = vmatprep.subr.bf16.mxu0 %v2091
    %2868 = vmatpush1.bf16.msra.mxu0 %v2090
    %2869 = vmatprep.subr.bf16.mxu0 %v2087
    %2870 = vmatpush1.bf16.msra.mxu0 %v2086
    %2871 = vmatprep.subr.bf16.mxu0 %v2083
    %2872 = vmatpush1.bf16.msra.mxu0 %v2082
    %2873 = vmatprep.subr.bf16.mxu0 %v2079
    %2874 = vmatpush1.bf16.msra.mxu0 %v2078
    %2875 = vmatprep.subr.bf16.mxu0 %v2075
    %2876 = vmatpush1.bf16.msra.mxu0 %v2074
    %2877 = vmatprep.subr.bf16.mxu0 %v2071
    %2878 = vmatpush1.bf16.msra.mxu0 %v2070
    %2879 = vmatprep.subr.bf16.mxu0 0
    %2880 = vmatpush2.bf16.msra.mxu0 0
    %2881 = vmatprep.subr.bf16.mxu0 0
    %2882 = vmatpush2.bf16.msra.mxu0 0
    %2883 = vmatprep.subr.bf16.mxu0 0
    %2884 = vmatpush2.bf16.msra.mxu0 0
    %2885 = vmatprep.subr.bf16.mxu0 0
    %2886 = vmatpush2.bf16.msra.mxu0 0
    %2887 = vmatprep.subr.bf16.mxu0 0
    %2888 = vmatpush2.bf16.msra.mxu0 0
    %2889 = vmatprep.subr.bf16.mxu0 0
    %2890 = vmatpush2.bf16.msra.mxu0 0
    %2891 = vmatprep.subr.bf16.mxu0 0
    %2892 = vmatpush2.bf16.msra.mxu0 0
    %2893 = vmatprep.subr.bf16.mxu0 0
    %2894 = vmatpush2.bf16.msra.mxu0 0
    %2895 = vmatprep.mubr.bf16.mxu0 0
    %2896 = vmatmul.mubr.bf16.gmra.mxu0 %v2821
    %v2897 = vpop.f32.mrf.mxu0
    %v2898 = vadd.f32 0.0, %v2897
    %v2899 = vpop.f32.mrf.mxu0
    %v2900 = vadd.f32 0.0, %v2899
    %v2901 = vpop.f32.mrf.mxu0
    %v2902 = vpop.f32.mrf.mxu0
    %2903 = vdwg.mxu0
    %v2904 = vadd.f32 %v2817, %v2857
    %v2905 = vadd.f32 %v2818, %v2859
    %v2906 = vadd.f32 %v2819, %v2898
    %v2907 = vadd.f32 %v2820, %v2900
    %v2908 = vxor.u32 %v2904, 2147483648
    %v2909 = vxor.u32 %v2905, 2147483648
    %v2910 = vxor.u32 %v2906, 2147483648
    %v2911 = vmul.f32 %v2908, 1.442695
    %v2912 = vpow.pop %v2911
    %v2913 = vmul.f32 %v2909, 1.442695
    %v2914 = vpow.pop %v2913
    %v2915 = vmul.f32 %v2910, 1.442695
    %v2916 = vpow.pop %v2915
    %v2917 = vadd.f32 %v2912, 1.0
    %v2918 = vadd.f32 %v2914, 1.0
    %v2919 = vadd.f32 %v2916, 1.0
    %v2920 = vrcp.pop %v2917
    %v2921 = vmul.f32 1.0, %v2920
    %v2922 = vrcp.pop %v2918
    %v2923 = vmul.f32 1.0, %v2922
    %v2924 = vrcp.pop %v2919
    %v2925 = vmul.f32 1.0, %v2924
    %v2926 = vtanh.pop %v2907
    %v2927 = vmul.f32 %v2923, %v2814
    %v2928 = vmul.f32 %v2921, %v2926
    %v2929 = vadd.f32 %v2927, %v2928
    %v2930 = vtanh.pop %v2929
    %v2931 = vmul.f32 %v2925, %v2930
    %v2932 = vld [vmem:[%s1389] sm:$0xff]
    %v2933 = vld [vmem:[%s1389 + $0x8] sm:$0xff]
    %v2934 = vld [vmem:[%s1389 + $0x10] sm:$0xff]
    %v2935 = vld [vmem:[%s1389 + $0x18] sm:$0xff]
    %v2936 = vpack.c.bf16 %v2931, %v2931
    %2937 = vmatprep.subr.bf16.mxu0 %v2097
    %2938 = vmatpush1.bf16.msra.mxu0 %v2096
    %2939 = vmatprep.subr.bf16.mxu0 %v2093
    %2940 = vmatpush1.bf16.msra.mxu0 %v2092
    %2941 = vmatprep.subr.bf16.mxu0 %v2089
    %2942 = vmatpush1.bf16.msra.mxu0 %v2088
    %2943 = vmatprep.subr.bf16.mxu0 %v2085
    %2944 = vmatpush1.bf16.msra.mxu0 %v2084
    %2945 = vmatprep.subr.bf16.mxu0 %v2081
    %2946 = vmatpush1.bf16.msra.mxu0 %v2080
    %2947 = vmatprep.subr.bf16.mxu0 %v2077
    %2948 = vmatpush1.bf16.msra.mxu0 %v2076
    %2949 = vmatprep.subr.bf16.mxu0 %v2073
    %2950 = vmatpush1.bf16.msra.mxu0 %v2072
    %2951 = vmatprep.subr.bf16.mxu0 %v2069
    %2952 = vmatpush1.bf16.msra.mxu0 %v2068
    %2953 = vmatprep.subr.bf16.mxu0 0
    %2954 = vmatpush2.bf16.msra.mxu0 0
    %2955 = vmatprep.subr.bf16.mxu0 0
    %2956 = vmatpush2.bf16.msra.mxu0 0
    %2957 = vmatprep.subr.bf16.mxu0 0
    %2958 = vmatpush2.bf16.msra.mxu0 0
    %2959 = vmatprep.subr.bf16.mxu0 0
    %2960 = vmatpush2.bf16.msra.mxu0 0
    %2961 = vmatprep.subr.bf16.mxu0 0
    %2962 = vmatpush2.bf16.msra.mxu0 0
    %2963 = vmatprep.subr.bf16.mxu0 0
    %2964 = vmatpush2.bf16.msra.mxu0 0
    %2965 = vmatprep.subr.bf16.mxu0 0
    %2966 = vmatpush2.bf16.msra.mxu0 0
    %2967 = vmatprep.subr.bf16.mxu0 0
    %2968 = vmatpush2.bf16.msra.mxu0 0
    %2969 = vmatprep.mubr.bf16.mxu0 0
    %2970 = vmatmul.mubr.bf16.gmra.mxu0 %v2936
    %v2971 = vpop.f32.mrf.mxu0
    %v2972 = vadd.f32 0.0, %v2971
    %v2973 = vpop.f32.mrf.mxu0
    %v2974 = vadd.f32 0.0, %v2973
    %v2975 = vpop.f32.mrf.mxu0
    %v2976 = vpop.f32.mrf.mxu0
    %2977 = vdwg.mxu0
    %2978 = vmatprep.subr.bf16.mxu0 %v2099
    %2979 = vmatpush1.bf16.msra.mxu0 %v2098
    %2980 = vmatprep.subr.bf16.mxu0 %v2095
    %2981 = vmatpush1.bf16.msra.mxu0 %v2094
    %2982 = vmatprep.subr.bf16.mxu0 %v2091
    %2983 = vmatpush1.bf16.msra.mxu0 %v2090
    %2984 = vmatprep.subr.bf16.mxu0 %v2087
    %2985 = vmatpush1.bf16.msra.mxu0 %v2086
    %2986 = vmatprep.subr.bf16.mxu0 %v2083
    %2987 = vmatpush1.bf16.msra.mxu0 %v2082
    %2988 = vmatprep.subr.bf16.mxu0 %v2079
    %2989 = vmatpush1.bf16.msra.mxu0 %v2078
    %2990 = vmatprep.subr.bf16.mxu0 %v2075
    %2991 = vmatpush1.bf16.msra.mxu0 %v2074
    %2992 = vmatprep.subr.bf16.mxu0 %v2071
    %2993 = vmatpush1.bf16.msra.mxu0 %v2070
    %2994 = vmatprep.subr.bf16.mxu0 0
    %2995 = vmatpush2.bf16.msra.mxu0 0
    %2996 = vmatprep.subr.bf16.mxu0 0
    %2997 = vmatpush2.bf16.msra.mxu0 0
    %2998 = vmatprep.subr.bf16.mxu0 0
    %2999 = vmatpush2.bf16.msra.mxu0 0
    %3000 = vmatprep.subr.bf16.mxu0 0
    %3001 = vmatpush2.bf16.msra.mxu0 0
    %3002 = vmatprep.subr.bf16.mxu0 0
    %3003 = vmatpush2.bf16.msra.mxu0 0
    %3004 = vmatprep.subr.bf16.mxu0 0
    %3005 = vmatpush2.bf16.msra.mxu0 0
    %3006 = vmatprep.subr.bf16.mxu0 0
    %3007 = vmatpush2.bf16.msra.mxu0 0
    %3008 = vmatprep.subr.bf16.mxu0 0
    %3009 = vmatpush2.bf16.msra.mxu0 0
    %3010 = vmatprep.mubr.bf16.mxu0 0
    %3011 = vmatmul.mubr.bf16.gmra.mxu0 %v2936
    %v3012 = vpop.f32.mrf.mxu0
    %v3013 = vadd.f32 0.0, %v3012
    %v3014 = vpop.f32.mrf.mxu0
    %v3015 = vadd.f32 0.0, %v3014
    %v3016 = vpop.f32.mrf.mxu0
    %v3017 = vpop.f32.mrf.mxu0
    %3018 = vdwg.mxu0
    %v3019 = vadd.f32 %v2932, %v2972
    %v3020 = vadd.f32 %v2933, %v2974
    %v3021 = vadd.f32 %v2934, %v3013
    %v3022 = vadd.f32 %v2935, %v3015
    %v3023 = vxor.u32 %v3019, 2147483648
    %v3024 = vxor.u32 %v3020, 2147483648
    %v3025 = vxor.u32 %v3021, 2147483648
    %v3026 = vmul.f32 %v3023, 1.442695
    %v3027 = vpow.pop %v3026
    %v3028 = vmul.f32 %v3024, 1.442695
    %v3029 = vpow.pop %v3028
    %v3030 = vmul.f32 %v3025, 1.442695
    %v3031 = vpow.pop %v3030
    %v3032 = vadd.f32 %v3027, 1.0
    %v3033 = vadd.f32 %v3029, 1.0
    %v3034 = vadd.f32 %v3031, 1.0
    %v3035 = vrcp.pop %v3032
    %v3036 = vmul.f32 1.0, %v3035
    %v3037 = vrcp.pop %v3033
    %v3038 = vmul.f32 1.0, %v3037
    %v3039 = vrcp.pop %v3034
    %v3040 = vmul.f32 1.0, %v3039
    %v3041 = vtanh.pop %v3022
    %v3042 = vmul.f32 %v3038, %v2929
    %v3043 = vmul.f32 %v3036, %v3041
    %v3044 = vadd.f32 %v3042, %v3043
    %v3045 = vtanh.pop %v3044
    %v3046 = vmul.f32 %v3040, %v3045
    %v3047 = vpack.c.bf16 %v3046, %v3046
    %v3048 = vld [vmem:[%s9] sm:$0xf]
    %v3049 = vld [vmem:[%s9 + $0x4] sm:$0xf]
    %v3050 = vld [vmem:[%s9 + $0x8] sm:$0xf]
    %v3051 = vld [vmem:[%s9 + $0xc] sm:$0xf]
    %v3052 = vld [vmem:[%s9 + $0x10] sm:$0xf]
    %v3053 = vld [vmem:[%s9 + $0x14] sm:$0xf]
    %v3054 = vld [vmem:[%s9 + $0x18] sm:$0xf]
    %v3055 = vld [vmem:[%s9 + $0x1c] sm:$0xf]
    %v3056 = vld [vmem:[%s9 + $0x20] sm:$0xf]
    %v3057 = vld [vmem:[%s9 + $0x24] sm:$0xf]
    %v3058 = vld [vmem:[%s9 + $0x28] sm:$0xf]
    %v3059 = vld [vmem:[%s9 + $0x2c] sm:$0xf]
    %v3060 = vld [vmem:[%s9 + $0x30] sm:$0xf]
    %v3061 = vld [vmem:[%s9 + $0x34] sm:$0xf]
    %v3062 = vld [vmem:[%s9 + $0x38] sm:$0xf]
    %v3063 = vld [vmem:[%s9 + $0x3c] sm:$0xf]
    %v3064 = vld [vmem:[%s10] sm:$0x1]
    %v3066 = vlaneseq
    %v3067 = vshrl.u32 %v3066, 7
    %v3068 = vsub.s32 0, %v3067
    %v3069 = vrot.slane %v3064, %v3068
    %v3087 = vunpack.c.l.b16 %v3048
    %v3088 = vunpack.c.l.b16 %v3049
    %v3089 = vunpack.c.l.b16 %v3050
    %v3090 = vunpack.c.l.b16 %v3051
    %v3091 = vunpack.c.l.b16 %v3052
    %v3092 = vunpack.c.l.b16 %v3053
    %v3093 = vunpack.c.l.b16 %v3054
    %v3094 = vunpack.c.l.b16 %v3055
    %v3095 = vunpack.c.l.b16 %v3056
    %v3096 = vunpack.c.l.b16 %v3057
    %v3097 = vunpack.c.l.b16 %v3058
    %v3098 = vunpack.c.l.b16 %v3059
    %v3099 = vunpack.c.l.b16 %v3060
    %v3100 = vunpack.c.l.b16 %v3061
    %v3101 = vunpack.c.l.b16 %v3062
    %v3102 = vunpack.c.l.b16 %v3063
    %v3103 = vpack.c.b16 %v3088, %v3087
    %v3104 = vpack.c.b16 %v3090, %v3089
    %v3105 = vpack.c.b16 %v3092, %v3091
    %v3106 = vpack.c.b16 %v3094, %v3093
    %v3107 = vpack.c.b16 %v3096, %v3095
    %v3108 = vpack.c.b16 %v3098, %v3097
    %v3109 = vpack.c.b16 %v3100, %v3099
    %v3110 = vpack.c.b16 %v3102, %v3101
    %3119 = vmatprep.subr.bf16.mxu0 0
    %3120 = vmatpush1.bf16.msra.mxu0 %v3110
    %3121 = vmatprep.subr.bf16.mxu0 0
    %3122 = vmatpush1.bf16.msra.mxu0 %v3109
    %3123 = vmatprep.subr.bf16.mxu0 0
    %3124 = vmatpush1.bf16.msra.mxu0 %v3108
    %3125 = vmatprep.subr.bf16.mxu0 0
    %3126 = vmatpush1.bf16.msra.mxu0 %v3107
    %3127 = vmatprep.subr.bf16.mxu0 0
    %3128 = vmatpush1.bf16.msra.mxu0 %v3106
    %3129 = vmatprep.subr.bf16.mxu0 0
    %3130 = vmatpush1.bf16.msra.mxu0 %v3105
    %3131 = vmatprep.subr.bf16.mxu0 0
    %3132 = vmatpush1.bf16.msra.mxu0 %v3104
    %3133 = vmatprep.subr.bf16.mxu0 0
    %3134 = vmatpush1.bf16.msra.mxu0 %v3103
    %3135 = vmatprep.subr.bf16.mxu0 0
    %3136 = vmatpush2.bf16.msra.mxu0 0
    %3137 = vmatprep.subr.bf16.mxu0 0
    %3138 = vmatpush2.bf16.msra.mxu0 0
    %3139 = vmatprep.subr.bf16.mxu0 0
    %3140 = vmatpush2.bf16.msra.mxu0 0
    %3141 = vmatprep.subr.bf16.mxu0 0
    %3142 = vmatpush2.bf16.msra.mxu0 0
    %3143 = vmatprep.subr.bf16.mxu0 0
    %3144 = vmatpush2.bf16.msra.mxu0 0
    %3145 = vmatprep.subr.bf16.mxu0 0
    %3146 = vmatpush2.bf16.msra.mxu0 0
    %3147 = vmatprep.subr.bf16.mxu0 0
    %3148 = vmatpush2.bf16.msra.mxu0 0
    %3149 = vmatprep.subr.bf16.mxu0 0
    %3150 = vmatpush2.bf16.msra.mxu0 0
    %3151 = vmatprep.mubr.bf16.mxu0 0
    %3152 = vmatmul.mubr.bf16.gmra.mxu0 %v3047
    %v3153 = vpop.f32.mrf.mxu0
    %v3154 = vadd.f32 %v3069, %v3153
    %v3155 = vpop.f32.mrf.mxu0
    %v3156 = vpop.f32.mrf.mxu0
    %v3157 = vpop.f32.mrf.mxu0
    %3158 = vdwg.mxu0
    %3159 = vst [vmem:[%s11] sm:$0xff] %v3154
    // Predicated region
    $region58: #{lstm_forward.1} parent=1 // pred_check
      _
    $region59: #{lstm_forward.1} parent=1 // pred_check_branch
      %3161 = sbr.rel (0) target = $region61
    $region60: #{lstm_forward.1} parent=1 // pred_region
      _
    $region61: #{lstm_forward.1} parent=1 // pred_fallthru
      _
    // Predicated region
    $region62: #{lstm_forward.1} parent=1 // pred_check
      _
    $region63: #{lstm_forward.1} parent=1 // pred_check_branch
      %3163 = sbr.rel (0) target = $region65
    $region64: #{lstm_forward.1} parent=1 // pred_region
      _
    $region65: #{lstm_forward.1} parent=1 // pred_fallthru
      _
    %3164 = vsyncpa [#allocation5], 1
    %3165 = vsyncpa [#allocation7], 1

</llo_original>
